<compile_context>
chip_gen: v7x
topology: tpu7x:2x2x1
jax: 0.10.0
libtpu: 0.0.40
codegen_flags: <defaults>
</compile_context>

<pallas_src>
import functools

import numpy as np
import jax
import jax.numpy as jnp
from jax import lax
from jax.experimental import pallas as pl
from jax.experimental.pallas import tpu as pltpu

_PAD_VAL = -1      # padding sentinel (argmax indices are >= 0, so it never merges)
_ALIGN = 1024      # pad L up to a multiple of this (=> R = L//128 >= 8)
_RUN_CHUNK = 256   # run-id chunk width (MXU-native N on v6e/v7x; two passes on v5e)


# --------------------------------------------------------------------------
# Kernel A: per-element run ids (lane-dense layout, blocked prefix sum)
# --------------------------------------------------------------------------
def _run_id_kernel(x_ref, rid_ref, sw_ref):
    """x_ref: (1, R, 128) int32, flat pixel i lives at [0, i // 128, i % 128].

    rid_ref: (1, R, 128) int32 — run id of every pixel (0-based, flat order)
    sw_ref : (1, R, 128) int32 — x at run starts, 0 elsewhere
    """
    R = x_ref.shape[1]
    x = x_ref[0]                                               # (R, 128)
    sub = lax.broadcasted_iota(jnp.int32, (R, 128), 0)
    lane = lax.broadcasted_iota(jnp.int32, (R, 128), 1)

    # prev[i] = x[i-1]: lane roll, lane 0 patched from the previous row (XLU).
    prev_lane = pltpu.roll(x, shift=1, axis=1)
    prev = jnp.where(lane == 0,
                     pltpu.roll(prev_lane, shift=1, axis=0),
                     prev_lane)
    start = ((sub == 0) & (lane == 0)) | (x != prev)           # (R, 128) bool
    start_bf = start.astype(jnp.bfloat16)                      # 0/1 exact in bf16

    # Two-level blocked inclusive prefix sum of `start` over flat order.
    # 1) within-row scan: start @ U, U[c', c] = [c' <= c]
    c0 = lax.broadcasted_iota(jnp.int32, (128, 128), 0)
    c1 = lax.broadcasted_iota(jnp.int32, (128, 128), 1)
    u_incl = (c0 <= c1).astype(jnp.bfloat16)
    rowscan = jnp.dot(start_bf, u_incl, preferred_element_type=jnp.float32)

    # 2) exclusive row offsets: number of starts in strictly earlier rows.
    # TODO(synk): for very large images (R >~ 1500) add a third blocking level
    # (or a log-step roll scan) instead of materializing the (R,R) triangle.
    r0 = lax.broadcasted_iota(jnp.int32, (R, R), 0)
    r1 = lax.broadcasted_iota(jnp.int32, (R, R), 1)
    lt_strict = (r1 < r0).astype(jnp.bfloat16)
    above = jnp.dot(lt_strict, start_bf, preferred_element_type=jnp.float32)
    rowoff = jnp.sum(above, axis=1, keepdims=True)             # (R, 1), XLU

    run_id = (rowscan + rowoff - 1.0).astype(jnp.int32)        # exact integers
    rid_ref[0] = run_id
    sw_ref[0] = jnp.where(start, x, 0)


def _run_id_call(x2d):
    B, R, _ = x2d.shape
    spec = pl.BlockSpec((1, R, 128), lambda b: (b, 0, 0))
    cost = pl.CostEstimate(
        flops=2 * B * (R * 128 * 128 + R * R * 128),
        transcendentals=0,
        bytes_accessed=3 * B * R * 128 * 4)
    return pl.pallas_call(
        _run_id_kernel,
        out_shape=(jax.ShapeDtypeStruct((B, R, 128), jnp.int32),
                   jax.ShapeDtypeStruct((B, R, 128), jnp.int32)),
        grid_spec=pltpu.PrefetchScalarGridSpec(
            num_scalar_prefetch=0,
            grid=(B,),
            in_specs=[spec],
            out_specs=[spec, spec]),
        compiler_params=pltpu.CompilerParams(
            dimension_semantics=("parallel",)),
        cost_estimate=cost,
    )(x2d)


# --------------------------------------------------------------------------
# Kernel B: chunked one-hot compaction of per-run (length, value) on the MXU
# --------------------------------------------------------------------------
def _compact_kernel(rid_ref, sw_ref, len_ref, val_ref, len_acc, val_acc):
    """grid = (B, num_run_chunks, num_flat_chunks), flat-chunk axis innermost.

    rid_ref/sw_ref : (1, F, 1) int32 — flat chunk of run ids / start values
    len_ref/val_ref: (1, 1, C) int32 — per-run lengths / values of this chunk
    len_acc/val_acc: (1, C) f32 VMEM accumulators across flat chunks
    """
    f = pl.program_id(2)

    @pl.when(f == 0)
    def _init():
        len_acc[...] = jnp.zeros_like(len_acc)
        val_acc[...] = jnp.zeros_like(val_acc)

    F = rid_ref.shape[1]
    C = len_ref.shape[2]
    q0 = pl.program_id(1) * C

    rid = rid_ref[0]                                           # (F, 1)
    sw = sw_ref[0]                                             # (F, 1)
    qq = q0 + lax.broadcasted_iota(jnp.int32, (F, C), 1)
    one_hot = rid == qq                                        # (F, C) bool

    # run lengths: ones @ one_hot (bf16 operands are exact 0/1, f32 accumulate)
    ones_bf = jnp.ones((1, F), jnp.bfloat16)
    len_acc[...] += jnp.dot(ones_bf, one_hot.astype(jnp.bfloat16),
                            preferred_element_type=jnp.float32)
    # run values: ones @ (one_hot * start_value); kept in f32 so any class id
    # < 2**24 stays exact (bf16 would clip ids >= 256).
    weighted = one_hot.astype(jnp.float32) * sw.astype(jnp.float32)
    val_acc[...] += jnp.dot(jnp.ones((1, F), jnp.float32), weighted,
                            preferred_element_type=jnp.float32)

    @pl.when(f == pl.num_programs(2) - 1)
    def _finalize():
        len_ref[0] = len_acc[...].astype(jnp.int32)
        val_ref[0] = val_acc[...].astype(jnp.int32)


def _compact_call(rid_col, sw_col):
    B, L, _ = rid_col.shape
    C = _RUN_CHUNK
    F = 2048 if L % 2048 == 0 else 1024                        # flat-chunk size
    NC, NF = L // C, L // F
    in_spec = pl.BlockSpec((1, F, 1), lambda b, nc, f: (b, f, 0))
    out_spec = pl.BlockSpec((1, 1, C), lambda b, nc, f: (b, 0, nc))
    cost = pl.CostEstimate(
        flops=4 * B * L * L,
        transcendentals=0,
        bytes_accessed=8 * B * NC * L + 8 * B * L)
    lengths, values = pl.pallas_call(
        _compact_kernel,
        out_shape=(jax.ShapeDtypeStruct((B, 1, L), jnp.int32),
                   jax.ShapeDtypeStruct((B, 1, L), jnp.int32)),
        grid_spec=pltpu.PrefetchScalarGridSpec(
            num_scalar_prefetch=0,
            grid=(B, NC, NF),
            in_specs=[in_spec, in_spec],
            out_specs=[out_spec, out_spec],
            scratch_shapes=[pltpu.VMEM((1, C), jnp.float32),
                            pltpu.VMEM((1, C), jnp.float32)]),
        compiler_params=pltpu.CompilerParams(
            dimension_semantics=("parallel", "parallel", "arbitrary")),
        cost_estimate=cost,
    )(rid_col, sw_col)
    return lengths[:, 0, :], values[:, 0, :]


# --------------------------------------------------------------------------
# JAX glue: padding-run removal, long-run splitting and packing
# --------------------------------------------------------------------------
def _split_and_pack(lengths, values, max_num):
    """lengths/values: (B, L) int32 -> encoded (B, 1 + 2L) int32."""
    B, L = lengths.shape
    valid_run = (lengths > 0) & (values != _PAD_VAL)   # drop the padding run
    lengths = jnp.where(valid_run, lengths, 0)

    nsub = jnp.where(lengths > 0, -(-lengths // max_num), 0)    # ceil division
    cum = jnp.cumsum(nsub, axis=-1)                             # inclusive
    start = cum - nsub
    total = cum[:, -1]                                          # (B,)

    j = jnp.arange(L, dtype=jnp.int32)
    r = jax.vmap(lambda c: jnp.searchsorted(c, j, side="right"))(cum)
    r = jnp.minimum(r, L - 1)

    take = lambda a: jnp.take_along_axis(a, r, axis=1)
    s_idx = j[None, :] - take(start)
    run_len, run_nsub, run_val = take(lengths), take(nsub), take(values)
    sub_len = jnp.where(s_idx < run_nsub - 1,
                        max_num, run_len - (run_nsub - 1) * max_num)
    slot_ok = j[None, :] < total[:, None]
    out_val = jnp.where(slot_ok, run_val, 0)
    out_num = jnp.where(slot_ok, sub_len, 0)

    pairs = jnp.stack([out_val, out_num], axis=-1).reshape(B, 2 * L)
    return jnp.concatenate([total[:, None], pairs], axis=-1)    # int32


@functools.partial(jax.jit, static_argnames=("max_num",))
def _rle_device(flat, *, max_num):
    """flat: (B, Lraw) int32 -> encoded (B, 1 + 2L) int32 (L padded)."""
    B, Lraw = flat.shape
    L = ((Lraw + _ALIGN - 1) // _ALIGN) * _ALIGN
    if L != Lraw:
        flat = jnp.pad(flat, ((0, 0), (0, L - Lraw)), constant_values=_PAD_VAL)

    # kernel A: lane-dense run ids + start values
    rid2d, sw2d = _run_id_call(flat.reshape(B, L // 128, 128))
    # host-side (XLA) reshape to the sublane-major column layout kernel B uses
    lengths, values = _compact_call(rid2d.reshape(B, L, 1), sw2d.reshape(B, L, 1))
    return _split_and_pack(lengths, values, max_num)


def rle(x, value_dtype):
    """Run-length encode a batch of dense (argmax-index) maps.

    x: integer array (N, ...) of argmax indices (values must be >= 0).
    value_dtype: jnp.int8 (max count 255) or jnp.int16 (max count 65535).

    Returns a list of N int64 numpy arrays of fixed (padded) length 1 + 2*L,
    format [n_pairs, value_0, num_0, value_1, num_1, ...].
    # TODO(synk): the exact bit-packing of (value, num) fields inside int64
    # words used by horizon_plugin_pytorch.rle is not publicly documented; an
    # explicit (count, value, num, ...) int64 layout is emitted instead.
    """
    if value_dtype == jnp.int8:
        max_num = 255
    elif value_dtype == jnp.int16:
        max_num = 65535
    else:
        raise TypeError("value dtype must be jnp.int8 or jnp.int16")

    x = jnp.asarray(x)
    B = x.shape[0]
    flat = x.reshape(B, -1).astype(jnp.int32)
    assert flat.shape[1] < (1 << 24), "L must stay below 2**24 for exact f32 sums"

    encoded = _rle_device(flat, max_num=max_num)          # (B, 1+2L) int32
    # Result dtype of the reference module is int64; cast host-side so the
    # global jax x64 flag stays off (per perf review).
    enc_host = np.asarray(jax.device_get(encoded)).astype(np.int64)
    return [enc_host[b] for b in range(B)]


class RLEPostprocessPallas:
    """JAX/Pallas equivalent of hat RLEPostprocess (forward pass only)."""

    def __init__(self, data_name, dtype):
        self.data_name = data_name
        self.dtype = dtype

    def __call__(self, pred_dict, *args):
        data = pred_dict[self.data_name]
        if isinstance(data, list):
            pred_dict[self.data_name] = [rle(d, self.dtype)[0] for d in data]
        elif isinstance(data, jnp.ndarray):
            pred_dict[self.data_name] = rle(data, self.dtype)[0]
        else:
            raise TypeError("only support jnp.ndarray or list[jnp.ndarray]")
        return pred_dict


if __name__ == "__main__":
    key = jax.random.PRNGKey(0)
    # synthetic argmax-index segmentation map: (batch=2, H=16, W=16), built
    # from 4x4 patches so there are meaningful runs to encode.
    coarse = jax.random.randint(key, (2, 4, 4), 0, 5, dtype=jnp.int32)
    x = jnp.repeat(jnp.repeat(coarse, 4, axis=1), 4, axis=2)     # (2, 16, 16)

    # direct rle() check: decode both samples and compare with the input
    encs = rle(x, jnp.int16)
    x_np = np.asarray(x)
    for b, enc in enumerate(encs):
        enc = np.asarray(enc)
        assert enc.dtype == np.int64
        n = int(enc[0])
        pairs = enc[1:1 + 2 * n].reshape(n, 2)
        recon = np.repeat(pairs[:, 0], pairs[:, 1])
        ref = x_np[b].reshape(-1)
        assert recon.shape == ref.shape and np.all(recon == ref), "RLE mismatch"
        assert np.all(pairs[:, 1] >= 1) and np.all(pairs[:, 1] <= 65535)

    # long-run splitting path with the int8 value dtype (max num per pair 255)
    zeros_img = jnp.zeros((1, 32, 32), jnp.int32)
    enc8 = np.asarray(rle(zeros_img, jnp.int8)[0])
    n8 = int(enc8[0])
    p8 = enc8[1:1 + 2 * n8].reshape(n8, 2)
    assert np.all(p8[:, 0] == 0)
    assert np.all(p8[:, 1] <= 255) and int(p8[:, 1].sum()) == 32 * 32

    # module-style usage (forward keeps rle(data)[0], i.e. sample 0)
    post = RLEPostprocessPallas("seg", jnp.int16)
    out = post({"seg": x})
    out = jax.block_until_ready(out)
    assert np.array_equal(np.asarray(out["seg"]), np.asarray(encs[0]))

    print("KERNEL_OK")
</pallas_src>

<mosaic_0001>
module attributes {stable_mosaic.version = 11 : i64} {
  func.func private @main(%arg0: i32) attributes {dimension_semantics = [#tpu.dimension_semantics<core_parallel>], iteration_bounds = array<i64: 2>, tpu.core_type = #tpu.core_type<sc_scalar_subcore>, window_params = []} {
    return
  }
}

module attributes {stable_mosaic.version = 11 : i64} {
  func.func private @main(%arg0: i32) attributes {dimension_semantics = [#tpu.dimension_semantics<core_parallel>], iteration_bounds = array<i64: 2>, tpu.core_type = #tpu.core_type<sc_scalar_subcore>, window_params = []} {
    return
  }
}

module attributes {stable_mosaic.version = 11 : i64} {
  func.func @_run_id_kernel(%arg0: i32, %arg1: memref<1x8x128xi32, #tpu.memory_space<vmem>>, %arg2: memref<1x8x128xi32, #tpu.memory_space<vmem>>, %arg3: memref<1x8x128xi32, #tpu.memory_space<vmem>>) attributes {dimension_semantics = [#tpu.dimension_semantics<parallel>], iteration_bounds = array<i64: 2>, scalar_prefetch = 0 : i64, scratch_operands = 0 : i64, tpu.core_type = #tpu.core_type<tc>, window_params = [{transform_indices = @transform_0, window_bounds = array<i64: 1, 8, 128>}, {transform_indices = @transform_1, window_bounds = array<i64: 1, 8, 128>}, {transform_indices = @transform_2, window_bounds = array<i64: 1, 8, 128>}]} {
    %c0 = arith.constant 0 : index
    %c0_0 = arith.constant 0 : index
    %c0_1 = arith.constant 0 : index
    %0 = vector.load %arg1[%c0, %c0_0, %c0_1] : memref<1x8x128xi32, #tpu.memory_space<vmem>>, vector<1x8x128xi32>
    %1 = vector.shape_cast %0 : vector<1x8x128xi32> to vector<8x128xi32>
    %2 = tpu.iota {dimensions = array<i32: 0>} : vector<8x128xi32>
    %3 = tpu.iota {dimensions = array<i32: 1>} : vector<8x128xi32>
    %c1_i32 = arith.constant 1 : i32
    %4 = tpu.dynamic_rotate %1 by %c1_i32 dim 1 : vector<8x128xi32>, i32 -> vector<8x128xi32>
    %c0_i32 = arith.constant 0 : i32
    %5 = vector.broadcast %c0_i32 : i32 to vector<8x128xi32>
    %6 = arith.cmpi eq, %3, %5 : vector<8x128xi32>
    %c1_i32_2 = arith.constant 1 : i32
    %7 = tpu.dynamic_rotate %4 by %c1_i32_2 dim 0 : vector<8x128xi32>, i32 -> vector<8x128xi32>
    %8 = arith.select %6, %7, %4 : vector<8x128xi1>, vector<8x128xi32>
    %c0_i32_3 = arith.constant 0 : i32
    %9 = vector.broadcast %c0_i32_3 : i32 to vector<8x128xi32>
    %10 = arith.cmpi eq, %2, %9 : vector<8x128xi32>
    %c0_i32_4 = arith.constant 0 : i32
    %11 = vector.broadcast %c0_i32_4 : i32 to vector<8x128xi32>
    %12 = arith.cmpi eq, %3, %11 : vector<8x128xi32>
    %13 = arith.andi %10, %12 : vector<8x128xi1>
    %14 = arith.cmpi ne, %1, %8 : vector<8x128xi32>
    %15 = arith.ori %13, %14 : vector<8x128xi1>
    %16 = arith.extui %15 : vector<8x128xi1> to vector<8x128xi32>
    %17 = arith.sitofp %16 : vector<8x128xi32> to vector<8x128xf32>
    %18 = arith.truncf %17 : vector<8x128xf32> to vector<8x128xbf16>
    %19 = tpu.iota {dimensions = array<i32: 0>} : vector<128x128xi32>
    %20 = tpu.iota {dimensions = array<i32: 1>} : vector<128x128xi32>
    %21 = arith.cmpi sle, %19, %20 : vector<128x128xi32>
    %22 = arith.extui %21 : vector<128x128xi1> to vector<128x128xi32>
    %23 = arith.sitofp %22 : vector<128x128xi32> to vector<128x128xf32>
    %24 = arith.truncf %23 : vector<128x128xf32> to vector<128x128xbf16>
    %cst = arith.constant dense<0.000000e+00> : vector<8x128xf32>
    %25 = tpu.matmul %18, %24, %cst {dimension_numbers = #tpu.dot_dimension_numbers<[1], [0], [0], [1], [0, 0, 1, 1], [], []>} : vector<8x128xbf16>, vector<128x128xbf16>, vector<8x128xf32> -> vector<8x128xf32>
    %26 = tpu.iota {dimensions = array<i32: 0>} : vector<8x8xi32>
    %27 = tpu.iota {dimensions = array<i32: 1>} : vector<8x8xi32>
    %28 = arith.cmpi slt, %27, %26 : vector<8x8xi32>
    %29 = arith.extui %28 : vector<8x8xi1> to vector<8x8xi32>
    %30 = arith.sitofp %29 : vector<8x8xi32> to vector<8x8xf32>
    %31 = arith.truncf %30 : vector<8x8xf32> to vector<8x8xbf16>
    %cst_5 = arith.constant dense<0.000000e+00> : vector<8x128xf32>
    %32 = tpu.matmul %31, %18, %cst_5 {dimension_numbers = #tpu.dot_dimension_numbers<[1], [0], [0], [1], [0, 0, 1, 1], [], []>} : vector<8x8xbf16>, vector<8x128xbf16>, vector<8x128xf32> -> vector<8x128xf32>
    %cst_6 = arith.constant dense<0.000000e+00> : vector<8xf32>
    %33 = vector.multi_reduction <add>, %32, %cst_6 [1] : vector<8x128xf32> to vector<8xf32>
    %34 = vector.shape_cast %33 : vector<8xf32> to vector<8x1xf32>
    %35 = vector.broadcast %34 : vector<8x1xf32> to vector<8x128xf32>
    %36 = arith.addf %25, %35 : vector<8x128xf32>
    %cst_7 = arith.constant 1.000000e+00 : f32
    %37 = vector.broadcast %cst_7 : f32 to vector<8x128xf32>
    %38 = arith.subf %36, %37 : vector<8x128xf32>
    %39 = arith.fptosi %38 : vector<8x128xf32> to vector<8x128xi32>
    %c0_8 = arith.constant 0 : index
    %c0_9 = arith.constant 0 : index
    %c0_10 = arith.constant 0 : index
    %40 = vector.load %arg2[%c0_8, %c0_9, %c0_10] : memref<1x8x128xi32, #tpu.memory_space<vmem>>, vector<1x8x128xi32>
    %41 = vector.shape_cast %40 : vector<1x8x128xi32> to vector<8x128xi32>
    %42 = vector.shape_cast %39 : vector<8x128xi32> to vector<1x8x128xi32>
    tpu.vector_store %arg2[%c0_8, %c0_9, %c0_10], %42 {strides = array<i32>} : memref<1x8x128xi32, #tpu.memory_space<vmem>>, vector<1x8x128xi32>,
    %c0_i32_11 = arith.constant 0 : i32
    %43 = vector.broadcast %c0_i32_11 : i32 to vector<8x128xi32>
    %44 = arith.select %15, %1, %43 : vector<8x128xi1>, vector<8x128xi32>
    %c0_12 = arith.constant 0 : index
    %c0_13 = arith.constant 0 : index
    %c0_14 = arith.constant 0 : index
    %45 = vector.load %arg3[%c0_12, %c0_13, %c0_14] : memref<1x8x128xi32, #tpu.memory_space<vmem>>, vector<1x8x128xi32>
    %46 = vector.shape_cast %45 : vector<1x8x128xi32> to vector<8x128xi32>
    %47 = vector.shape_cast %44 : vector<8x128xi32> to vector<1x8x128xi32>
    tpu.vector_store %arg3[%c0_12, %c0_13, %c0_14], %47 {strides = array<i32>} : memref<1x8x128xi32, #tpu.memory_space<vmem>>, vector<1x8x128xi32>,
    return
  }
  func.func @transform_0(%arg0: i32) -> (i32, i32, i32) {
    %c0_i32 = arith.constant 0 : i32
    %c0_i32_0 = arith.constant 0 : i32
    %c0_i32_1 = arith.constant 0 : i32
    return %arg0, %c0_i32, %c0_i32_0 : i32, i32, i32
  }
  func.func @transform_1(%arg0: i32) -> (i32, i32, i32) {
    %c0_i32 = arith.constant 0 : i32
    %c0_i32_0 = arith.constant 0 : i32
    %c0_i32_1 = arith.constant 0 : i32
    return %arg0, %c0_i32, %c0_i32_0 : i32, i32, i32
  }
  func.func @transform_2(%arg0: i32) -> (i32, i32, i32) {
    %c0_i32 = arith.constant 0 : i32
    %c0_i32_0 = arith.constant 0 : i32
    %c0_i32_1 = arith.constant 0 : i32
    return %arg0, %c0_i32, %c0_i32_0 : i32, i32, i32
  }
}

module attributes {stable_mosaic.version = 11 : i64} {
  func.func @_compact_kernel(%arg0: i32, %arg1: i32, %arg2: i32, %arg3: memref<1x1024x1xi32, #tpu.memory_space<vmem>>, %arg4: memref<1x1024x1xi32, #tpu.memory_space<vmem>>, %arg5: memref<1x1x256xi32, #tpu.memory_space<vmem>>, %arg6: memref<1x1x256xi32, #tpu.memory_space<vmem>>, %arg7: memref<1x256xf32, #tpu.memory_space<vmem>>, %arg8: memref<1x256xf32, #tpu.memory_space<vmem>>) attributes {dimension_semantics = [#tpu.dimension_semantics<parallel>, #tpu.dimension_semantics<parallel>, #tpu.dimension_semantics<arbitrary>], iteration_bounds = array<i64: 2, 4, 1>, scalar_prefetch = 0 : i64, scratch_operands = 2 : i64, tpu.core_type = #tpu.core_type<tc>, window_params = [{transform_indices = @transform_0, window_bounds = array<i64: 1, 1024, 1>}, {transform_indices = @transform_1, window_bounds = array<i64: 1, 1024, 1>}, {transform_indices = @transform_2, window_bounds = array<i64: 1, 1, 256>}, {transform_indices = @transform_3, window_bounds = array<i64: 1, 1, 256>}]} {
    %c0_i32 = arith.constant 0 : i32
    %0 = arith.cmpi eq, %arg2, %c0_i32 : i32
    %1 = arith.extui %0 : i1 to i32
    %c0_i32_0 = arith.constant 0 : i32
    %2 = arith.cmpi ne, %1, %c0_i32_0 : i32
    scf.if %2 {
      %cst_19 = arith.constant 0.000000e+00 : f32
      %34 = vector.broadcast %cst_19 : f32 to vector<1x256xf32>
      %c0_20 = arith.constant 0 : index
      %c0_21 = arith.constant 0 : index
      %35 = vector.load %arg7[%c0_20, %c0_21] : memref<1x256xf32, #tpu.memory_space<vmem>>, vector<1x256xf32>
      tpu.vector_store %arg7[%c0_20, %c0_21], %34 {strides = array<i32>} : memref<1x256xf32, #tpu.memory_space<vmem>>, vector<1x256xf32>,
      %cst_22 = arith.constant 0.000000e+00 : f32
      %36 = vector.broadcast %cst_22 : f32 to vector<1x256xf32>
      %c0_23 = arith.constant 0 : index
      %c0_24 = arith.constant 0 : index
      %37 = vector.load %arg8[%c0_23, %c0_24] : memref<1x256xf32, #tpu.memory_space<vmem>>, vector<1x256xf32>
      tpu.vector_store %arg8[%c0_23, %c0_24], %36 {strides = array<i32>} : memref<1x256xf32, #tpu.memory_space<vmem>>, vector<1x256xf32>,
    } else {
    }
    %c256_i32 = arith.constant 256 : i32
    %3 = arith.muli %arg1, %c256_i32 : i32
    %c0 = arith.constant 0 : index
    %c0_1 = arith.constant 0 : index
    %c0_2 = arith.constant 0 : index
    %4 = vector.load %arg3[%c0, %c0_1, %c0_2] : memref<1x1024x1xi32, #tpu.memory_space<vmem>>, vector<1x1024x1xi32>
    %5 = vector.shape_cast %4 : vector<1x1024x1xi32> to vector<1024x1xi32>
    %c0_3 = arith.constant 0 : index
    %c0_4 = arith.constant 0 : index
    %c0_5 = arith.constant 0 : index
    %6 = vector.load %arg4[%c0_3, %c0_4, %c0_5] : memref<1x1024x1xi32, #tpu.memory_space<vmem>>, vector<1x1024x1xi32>
    %7 = vector.shape_cast %6 : vector<1x1024x1xi32> to vector<1024x1xi32>
    %8 = tpu.iota {dimensions = array<i32: 1>} : vector<1024x256xi32>
    %9 = vector.broadcast %3 : i32 to vector<1024x256xi32>
    %10 = arith.addi %9, %8 : vector<1024x256xi32>
    %11 = vector.broadcast %5 : vector<1024x1xi32> to vector<1024x256xi32>
    %12 = arith.cmpi eq, %11, %10 : vector<1024x256xi32>
    %cst = arith.constant 1.000000e+00 : bf16
    %13 = vector.broadcast %cst : bf16 to vector<1x1024xbf16>
    %c0_6 = arith.constant 0 : index
    %c0_7 = arith.constant 0 : index
    %14 = vector.load %arg7[%c0_6, %c0_7] : memref<1x256xf32, #tpu.memory_space<vmem>>, vector<1x256xf32>
    %15 = arith.extui %12 : vector<1024x256xi1> to vector<1024x256xi32>
    %16 = arith.sitofp %15 : vector<1024x256xi32> to vector<1024x256xf32>
    %17 = arith.truncf %16 : vector<1024x256xf32> to vector<1024x256xbf16>
    %cst_8 = arith.constant dense<0.000000e+00> : vector<1x256xf32>
    %18 = tpu.matmul %13, %17, %cst_8 {dimension_numbers = #tpu.dot_dimension_numbers<[1], [0], [0], [1], [0, 0, 1, 1], [], []>} : vector<1x1024xbf16>, vector<1024x256xbf16>, vector<1x256xf32> -> vector<1x256xf32>
    %19 = arith.addf %14, %18 : vector<1x256xf32>
    %c0_9 = arith.constant 0 : index
    %c0_10 = arith.constant 0 : index
    %20 = vector.load %arg7[%c0_9, %c0_10] : memref<1x256xf32, #tpu.memory_space<vmem>>, vector<1x256xf32>
    tpu.vector_store %arg7[%c0_9, %c0_10], %19 {strides = array<i32>} : memref<1x256xf32, #tpu.memory_space<vmem>>, vector<1x256xf32>,
    %21 = arith.extui %12 : vector<1024x256xi1> to vector<1024x256xi32>
    %22 = arith.sitofp %21 : vector<1024x256xi32> to vector<1024x256xf32>
    %23 = arith.sitofp %7 : vector<1024x1xi32> to vector<1024x1xf32>
    %24 = vector.broadcast %23 : vector<1024x1xf32> to vector<1024x256xf32>
    %25 = arith.mulf %22, %24 : vector<1024x256xf32>
    %c0_11 = arith.constant 0 : index
    %c0_12 = arith.constant 0 : index
    %26 = vector.load %arg8[%c0_11, %c0_12] : memref<1x256xf32, #tpu.memory_space<vmem>>, vector<1x256xf32>
    %cst_13 = arith.constant 1.000000e+00 : f32
    %27 = vector.broadcast %cst_13 : f32 to vector<1x1024xf32>
    %cst_14 = arith.constant dense<0.000000e+00> : vector<1x256xf32>
    %28 = tpu.matmul %27, %25, %cst_14 {dimension_numbers = #tpu.dot_dimension_numbers<[1], [0], [0], [1], [0, 0, 1, 1], [], []>} : vector<1x1024xf32>, vector<1024x256xf32>, vector<1x256xf32> -> vector<1x256xf32>
    %29 = arith.addf %26, %28 : vector<1x256xf32>
    %c0_15 = arith.constant 0 : index
    %c0_16 = arith.constant 0 : index
    %30 = vector.load %arg8[%c0_15, %c0_16] : memref<1x256xf32, #tpu.memory_space<vmem>>, vector<1x256xf32>
    tpu.vector_store %arg8[%c0_15, %c0_16], %29 {strides = array<i32>} : memref<1x256xf32, #tpu.memory_space<vmem>>, vector<1x256xf32>,
    %c0_i32_17 = arith.constant 0 : i32
    %31 = arith.cmpi eq, %arg2, %c0_i32_17 : i32
    %32 = arith.extui %31 : i1 to i32
    %c0_i32_18 = arith.constant 0 : i32
    %33 = arith.cmpi ne, %32, %c0_i32_18 : i32
    scf.if %33 {
      %c0_19 = arith.constant 0 : index
      %c0_20 = arith.constant 0 : index
      %34 = vector.load %arg7[%c0_19, %c0_20] : memref<1x256xf32, #tpu.memory_space<vmem>>, vector<1x256xf32>
      %35 = arith.fptosi %34 : vector<1x256xf32> to vector<1x256xi32>
      %c0_21 = arith.constant 0 : index
      %c0_22 = arith.constant 0 : index
      %c0_23 = arith.constant 0 : index
      %36 = vector.load %arg5[%c0_21, %c0_22, %c0_23] : memref<1x1x256xi32, #tpu.memory_space<vmem>>, vector<1x1x256xi32>
      %37 = vector.shape_cast %36 : vector<1x1x256xi32> to vector<1x256xi32>
      %38 = vector.shape_cast %35 : vector<1x256xi32> to vector<1x1x256xi32>
      tpu.vector_store %arg5[%c0_21, %c0_22, %c0_23], %38 {strides = array<i32>} : memref<1x1x256xi32, #tpu.memory_space<vmem>>, vector<1x1x256xi32>,
      %c0_24 = arith.constant 0 : index
      %c0_25 = arith.constant 0 : index
      %39 = vector.load %arg8[%c0_24, %c0_25] : memref<1x256xf32, #tpu.memory_space<vmem>>, vector<1x256xf32>
      %40 = arith.fptosi %39 : vector<1x256xf32> to vector<1x256xi32>
      %c0_26 = arith.constant 0 : index
      %c0_27 = arith.constant 0 : index
      %c0_28 = arith.constant 0 : index
      %41 = vector.load %arg6[%c0_26, %c0_27, %c0_28] : memref<1x1x256xi32, #tpu.memory_space<vmem>>, vector<1x1x256xi32>
      %42 = vector.shape_cast %41 : vector<1x1x256xi32> to vector<1x256xi32>
      %43 = vector.shape_cast %40 : vector<1x256xi32> to vector<1x1x256xi32>
      tpu.vector_store %arg6[%c0_26, %c0_27, %c0_28], %43 {strides = array<i32>} : memref<1x1x256xi32, #tpu.memory_space<vmem>>, vector<1x1x256xi32>,
    } else {
    }
    return
  }
  func.func @transform_0(%arg0: i32, %arg1: i32, %arg2: i32) -> (i32, i32, i32) {
    %c0_i32 = arith.constant 0 : i32
    %c0_i32_0 = arith.constant 0 : i32
    return %arg0, %arg2, %c0_i32 : i32, i32, i32
  }
  func.func @transform_1(%arg0: i32, %arg1: i32, %arg2: i32) -> (i32, i32, i32) {
    %c0_i32 = arith.constant 0 : i32
    %c0_i32_0 = arith.constant 0 : i32
    return %arg0, %arg2, %c0_i32 : i32, i32, i32
  }
  func.func @transform_2(%arg0: i32, %arg1: i32, %arg2: i32) -> (i32, i32, i32) {
    %c0_i32 = arith.constant 0 : i32
    %c0_i32_0 = arith.constant 0 : i32
    return %arg0, %c0_i32, %arg1 : i32, i32, i32
  }
  func.func @transform_3(%arg0: i32, %arg1: i32, %arg2: i32) -> (i32, i32, i32) {
    %c0_i32 = arith.constant 0 : i32
    %c0_i32_0 = arith.constant 0 : i32
    return %arg0, %c0_i32, %arg1 : i32, i32, i32
  }
}

</mosaic_0001>

<llo_original>
// kernel: _rle_device.2
$region0: #{_rle_device.2}
  #allocation0 [shape = 'u32[]', space=smem, size = 0x4, offset = 0x4, fixed_abs, tag = 'smem constant byte address 0x4 - core index']
  #allocation1 [shape = 'u32[144,128]{1,0:T(1,128)}', space=vmem, size = 0x12000, scoped, tag = 'internal scratch']
  %s0 = inlined_call_operand.vmem [shape: s32[2,8,128], index: 0, kind: input, shape index: {}]
  %s1 = inlined_call_operand.vmem [shape: s32[2,8,128], index: 1, kind: output, shape index: {0}]
  %s2 = inlined_call_operand.vmem [shape: s32[2,8,128], index: 2, kind: output, shape index: {1}]
  %3 = xla_tuple %s1, %s2
  %s4 = sld [smem:[#allocation0]]
  $region45: #{_rle_device.2} parent=0
    _
  %s6 = ssub.s32 1, %s4
  %s7 = scalar_select 0, %s6, %s4
  loop: start=0, step=1, limit=4
  $region2: #{_rle_device.2} parent=0 // loop_pre_header
    _
  $region3: #{_rle_device.2} parent=0 // loop_header
    %s9 = sphi 0, %s13
    %p10 = scmp.ge.s32.totalorder %s9, 4
    %s19 = sphi 0, %s21
    %s22 = sphi 0, %s19
    %s23 = sphi 0, %s22
    %s39 = sphi 0, %s23
    %s45 = sphi 0, %s47
    %s48 = sphi 0, %s45
    %s49 = sphi 0, %s48
    %s65 = sphi 0, %s49
    %s71 = sphi 0, %s73
    %s74 = sphi 0, %s71
    %s75 = sphi 0, %s74
    %s91 = sphi 0, %s75
  $region4: #{_rle_device.2} parent=0 // loop_header_branch
    %12 = sbr.rel (%p10) target = $region8
  $region5: #{_rle_device.2} parent=0 // loop_body
    %s14 = ssub.s32 %s9, 1
    %s15 = ssub.s32 %s9, 2
    %s16 = sadd.s32 %s9, 1
    %s17 = ssub.s32 %s9, %s16
    %p18 = scmp.eq.s32.totalorder %s17, 0
    %s20 = sadd.s32 %s19, 1
    %s21 = scalar_select %p18, %s19, %s20
    %p24 = pneg %p18
    %p25 = scmp.eq.s32.totalorder %s9, 1
    %p26 = por %p24, %p25
    %p27 = scmp.ne.s32.totalorder %s19, %s22
    %p28 = scmp.eq.s32.totalorder %s9, 0
    %p29 = por %p27, %p28
    %p30 = scmp.ne.s32.totalorder %s19, %s22
    %p31 = scmp.eq.s32.totalorder %s14, 1
    %p32 = por %p30, %p31
    %p33 = scmp.ne.s32.totalorder %s22, %s23
    %p34 = scmp.eq.s32.totalorder %s14, 0
    %p35 = por %p33, %p34
    %p36 = scmp.ne.s32.totalorder %s22, %s23
    %p37 = scmp.eq.s32.totalorder %s15, 1
    %p38 = por %p36, %p37
    %p40 = scmp.ne.s32.totalorder %s23, %s39
    %p41 = scmp.eq.s32.totalorder %s15, 0
    %p42 = por %p40, %p41
    %s43 = ssub.s32 %s9, %s16
    %p44 = scmp.eq.s32.totalorder %s43, 0
    %s46 = sadd.s32 %s45, 1
    %s47 = scalar_select %p44, %s45, %s46
    %p50 = pneg %p44
    %p51 = scmp.eq.s32.totalorder %s9, 1
    %p52 = por %p50, %p51
    %p53 = scmp.ne.s32.totalorder %s45, %s48
    %p54 = scmp.eq.s32.totalorder %s9, 0
    %p55 = por %p53, %p54
    %p56 = scmp.ne.s32.totalorder %s45, %s48
    %p57 = scmp.eq.s32.totalorder %s14, 1
    %p58 = por %p56, %p57
    %p59 = scmp.ne.s32.totalorder %s48, %s49
    %p60 = scmp.eq.s32.totalorder %s14, 0
    %p61 = por %p59, %p60
    %p62 = scmp.ne.s32.totalorder %s48, %s49
    %p63 = scmp.eq.s32.totalorder %s15, 1
    %p64 = por %p62, %p63
    %p66 = scmp.ne.s32.totalorder %s49, %s65
    %p67 = scmp.eq.s32.totalorder %s15, 0
    %p68 = por %p66, %p67
    %s69 = ssub.s32 %s9, %s16
    %p70 = scmp.eq.s32.totalorder %s69, 0
    %s72 = sadd.s32 %s71, 1
    %s73 = scalar_select %p70, %s71, %s72
    %p76 = pneg %p70
    %p77 = scmp.eq.s32.totalorder %s9, 1
    %p78 = por %p76, %p77
    %p79 = scmp.ne.s32.totalorder %s71, %s74
    %p80 = scmp.eq.s32.totalorder %s9, 0
    %p81 = por %p79, %p80
    %p82 = scmp.ne.s32.totalorder %s71, %s74
    %p83 = scmp.eq.s32.totalorder %s14, 1
    %p84 = por %p82, %p83
    %p85 = scmp.ne.s32.totalorder %s74, %s75
    %p86 = scmp.eq.s32.totalorder %s14, 0
    %p87 = por %p85, %p86
    %p88 = scmp.ne.s32.totalorder %s74, %s75
    %p89 = scmp.eq.s32.totalorder %s15, 1
    %p90 = por %p88, %p89
    %p92 = scmp.ne.s32.totalorder %s75, %s91
    %p93 = scmp.eq.s32.totalorder %s15, 0
    %p94 = por %p92, %p93
    %p95 = scmp.le.s32.totalorder 1, %s9
    %p96 = scmp.lt.s32.totalorder %s9, 3
    %p97 = pnand %p95, %p96
    %p98 = pneg %p97
    // Predicated region
    $region9: #{_rle_device.2} parent=5 // pred_check
      _
    $region10: #{_rle_device.2} parent=5 // pred_check_branch
      %100 = sbr.rel (%p97) target = $region12
    $region11: #{_rle_device.2} parent=5 // pred_region
      %s101 = ssub.s32 %s9, 1
    $region12: #{_rle_device.2} parent=5 // pred_fallthru
      _
    %p102 = scmp.lt.s32.totalorder %s9, 2
    // Predicated region
    $region13: #{_rle_device.2} parent=5 // pred_check
      %p103 = pneg %p102
    $region14: #{_rle_device.2} parent=5 // pred_check_branch
      %105 = sbr.rel (%p103) target = $region16
    $region15: #{_rle_device.2} parent=5 // pred_region
      // Predicated region
      $region17: #{_rle_device.2} parent=15 // pred_check
        %p106 = pneg %p29
      $region18: #{_rle_device.2} parent=15 // pred_check_branch
        %108 = sbr.rel (%p106) target = $region20
      $region19: #{_rle_device.2} parent=15 // pred_region
        %p109 = scmp.lt.s32.totalorder %s9, 1
        %s110 = scalar_select %p109, %s9, 1
        %s111 = smul.addr %s110, 8
        %s112 = scalar_lea.vmem %s0, %s111
      $region20: #{_rle_device.2} parent=15 // pred_fallthru
        _
    $region16: #{_rle_device.2} parent=5 // pred_fallthru
      _
    %p113 = scmp.le.s32.totalorder 1, %s9
    %p114 = scmp.lt.s32.totalorder %s9, 3
    %p115 = pnand %p113, %p114
    %p116 = pneg %p115
    // Predicated region
    $region21: #{_rle_device.2} parent=5 // pred_check
      _
    $region22: #{_rle_device.2} parent=5 // pred_check_branch
      %118 = sbr.rel (%p115) target = $region24
    $region23: #{_rle_device.2} parent=5 // pred_region
      %s119 = ssub.s32 %s9, 1
      %p120 = scmp.lt.s32.totalorder %s14, 1
      %s121 = scalar_select %p120, %s14, 1
      %s122 = smul.addr %s121, 8
      %s123 = scalar_lea.vmem %s0, %s122
      %p124 = pneg %p35
      %p125 = pneg %p32
      %p126 = pneg %p61
      %p127 = pneg %p58
      %p128 = scmp.lt.s32.totalorder %s14, 1
      %s129 = scalar_select %p128, %s14, 1
      %s130 = smul.addr %s129, 8
      %s131 = scalar_lea.vmem %s1, %s130
      %p132 = pneg %p87
      %p133 = pneg %p84
      %p134 = scmp.lt.s32.totalorder %s14, 1
      %s135 = scalar_select %p134, %s14, 1
      %s136 = smul.addr %s135, 8
      %s137 = scalar_lea.vmem %s2, %s136
      %p138 = scmp.lt.s32.totalorder %s14, 1
      %s139 = scalar_select %p138, %s14, 1
      %s140 = smul.addr %s139, 8
      %s141 = scalar_lea.vmem %s0, %s140
      %p142 = scmp.lt.s32.totalorder %s14, 1
      %s143 = scalar_select %p142, %s14, 1
      %s144 = smul.addr %s143, 8
      %s145 = scalar_lea.vmem %s1, %s144
      %p146 = scmp.lt.s32.totalorder %s14, 1
      %s147 = scalar_select %p146, %s14, 1
      %s148 = smul.addr %s147, 8
      %s149 = scalar_lea.vmem %s2, %s148
      %v151 = vld [vmem:[%s141] sm:$0xff]
      %v152 = vlaneseq
      %v153 = vshrl.u32 %v152, 7
      %v154 = vlaneseq
      %v155 = vand.u32 %v154, 127
      %156 = vrot.lane.b32.xlu0 %v151, 1
      %v157 = vpop.permute.xlu0 %156
      %vm158 = vcmp.eq.s32.totalorder %v155, 0
      %v159 = vrot.slane %v157, 7
      %v160 = vsel %vm158, %v159, %v157
      %vm161 = vcmp.eq.s32.totalorder %v153, 0
      %vm162 = vmand %vm161, %vm158
      %vm163 = vcmp.ne.s32.totalorder %v151, %v160
      %vm164 = vmor %vm162, %vm163
      %v165 = vsel %vm164, 1, 0
      %v166 = vcvt.s32.f32 %v165
      %v167 = vpack.c.bf16 %v166, %v166
      %v168 = vadd.s32 %v153, 8
      %v169 = vadd.s32 %v153, 16
      %v170 = vadd.s32 %v153, 24
      %v171 = vadd.s32 %v153, 32
      %v172 = vadd.s32 %v153, 40
      %v173 = vadd.s32 %v153, 48
      %v174 = vadd.s32 %v153, 56
      %v175 = vadd.s32 %v153, 64
      %v176 = vadd.s32 %v153, 72
      %v177 = vadd.s32 %v153, 80
      %v178 = vadd.s32 %v153, 88
      %v179 = vadd.s32 %v153, 96
      %v180 = vadd.s32 %v153, 104
      %v181 = vadd.s32 %v153, 112
      %v182 = vadd.s32 %v153, 120
      %vm183 = vcmp.le.s32.totalorder %v153, %v155
      %vm184 = vcmp.le.s32.totalorder %v168, %v155
      %vm185 = vcmp.le.s32.totalorder %v169, %v155
      %vm186 = vcmp.le.s32.totalorder %v170, %v155
      %vm187 = vcmp.le.s32.totalorder %v171, %v155
      %vm188 = vcmp.le.s32.totalorder %v172, %v155
      %vm189 = vcmp.le.s32.totalorder %v173, %v155
      %vm190 = vcmp.le.s32.totalorder %v174, %v155
      %vm191 = vcmp.le.s32.totalorder %v175, %v155
      %vm192 = vcmp.le.s32.totalorder %v176, %v155
      %vm193 = vcmp.le.s32.totalorder %v177, %v155
      %vm194 = vcmp.le.s32.totalorder %v178, %v155
      %vm195 = vcmp.le.s32.totalorder %v179, %v155
      %vm196 = vcmp.le.s32.totalorder %v180, %v155
      %vm197 = vcmp.le.s32.totalorder %v181, %v155
      %vm198 = vcmp.le.s32.totalorder %v182, %v155
      %v199 = vsel %vm183, 1, 0
      %v200 = vsel %vm184, 1, 0
      %v201 = vsel %vm185, 1, 0
      %v202 = vsel %vm186, 1, 0
      %v203 = vsel %vm187, 1, 0
      %v204 = vsel %vm188, 1, 0
      %v205 = vsel %vm189, 1, 0
      %v206 = vsel %vm190, 1, 0
      %v207 = vsel %vm191, 1, 0
      %v208 = vsel %vm192, 1, 0
      %v209 = vsel %vm193, 1, 0
      %v210 = vsel %vm194, 1, 0
      %v211 = vsel %vm195, 1, 0
      %v212 = vsel %vm196, 1, 0
      %v213 = vsel %vm197, 1, 0
      %v214 = vsel %vm198, 1, 0
      %v215 = vcvt.s32.f32 %v199
      %v216 = vcvt.s32.f32 %v200
      %v217 = vcvt.s32.f32 %v201
      %v218 = vcvt.s32.f32 %v202
      %v219 = vcvt.s32.f32 %v203
      %v220 = vcvt.s32.f32 %v204
      %v221 = vcvt.s32.f32 %v205
      %v222 = vcvt.s32.f32 %v206
      %v223 = vcvt.s32.f32 %v207
      %v224 = vcvt.s32.f32 %v208
      %v225 = vcvt.s32.f32 %v209
      %v226 = vcvt.s32.f32 %v210
      %v227 = vcvt.s32.f32 %v211
      %v228 = vcvt.s32.f32 %v212
      %v229 = vcvt.s32.f32 %v213
      %v230 = vcvt.s32.f32 %v214
      %v231 = vpack.c.bf16 %v216, %v215
      %v232 = vpack.c.bf16 %v218, %v217
      %v233 = vpack.c.bf16 %v220, %v219
      %v234 = vpack.c.bf16 %v222, %v221
      %v235 = vpack.c.bf16 %v224, %v223
      %v236 = vpack.c.bf16 %v226, %v225
      %v237 = vpack.c.bf16 %v228, %v227
      %v238 = vpack.c.bf16 %v230, %v229
      %vm239 = vcmp.lt.s32.totalorder %v155, %v153
      %v240 = vsel %vm239, 1, 0
      %v241 = vcvt.s32.f32 %v240
      %v242 = vpack.c.bf16 %v241, %v241
      %vm243 = vcmask 64512
      %v245 = vsel %vm243, %v242, 0
      %vm247 = vcmask 1043456
      %v249 = vsel %vm247, %v167, 0
      %251 = vmatprep.subr.bf16.mxu0 0
      %252 = vmatpush1.bf16.msra.mxu0 %v249
      %253 = vmatprep.subr.bf16.mxu0 0
      %254 = vmatpush1.bf16.msra.mxu0 0
      %255 = vmatprep.subr.bf16.mxu0 0
      %256 = vmatpush1.bf16.msra.mxu0 0
      %257 = vmatprep.subr.bf16.mxu0 0
      %258 = vmatpush1.bf16.msra.mxu0 0
      %259 = vmatprep.subr.bf16.mxu0 0
      %260 = vmatpush1.bf16.msra.mxu0 0
      %261 = vmatprep.subr.bf16.mxu0 0
      %262 = vmatpush1.bf16.msra.mxu0 0
      %263 = vmatprep.subr.bf16.mxu0 0
      %264 = vmatpush1.bf16.msra.mxu0 0
      %265 = vmatprep.subr.bf16.mxu0 0
      %266 = vmatpush1.bf16.msra.mxu0 0
      %267 = vmatprep.subr.bf16.mxu0 0
      %268 = vmatpush1.bf16.msra.mxu0 0
      %269 = vmatprep.subr.bf16.mxu0 0
      %270 = vmatpush1.bf16.msra.mxu0 0
      %271 = vmatprep.subr.bf16.mxu0 0
      %272 = vmatpush1.bf16.msra.mxu0 0
      %273 = vmatprep.subr.bf16.mxu0 0
      %274 = vmatpush1.bf16.msra.mxu0 0
      %275 = vmatprep.subr.bf16.mxu0 0
      %276 = vmatpush1.bf16.msra.mxu0 0
      %277 = vmatprep.subr.bf16.mxu0 0
      %278 = vmatpush1.bf16.msra.mxu0 0
      %279 = vmatprep.subr.bf16.mxu0 0
      %280 = vmatpush1.bf16.msra.mxu0 0
      %281 = vmatprep.subr.bf16.mxu0 0
      %282 = vmatpush1.bf16.msra.mxu0 0
      %283 = vmatprep.mubr.bf16.mxu0 0
      %284 = vmatmul.mubr.bf16.gmra.mrb[0].mxu0 %v245
      %v285 = vpop.f32.mrb[0].mxu0
      %v286 = vadd.f32 0.0, %v285
      %v287 = vpop.f32.mrb[0].mxu0
      %v288 = vpop.f32.mrb[0].mxu0
      %v289 = vpop.f32.mrb[0].mxu0
      %290 = vdwg.mxu0
      %291 = vadd.xlane.f32.xlu0 %v286
      %v292 = vpop.xlane.xlu0 %291
      %293 = vmatprep.subr.bf16.mxu0 0
      %294 = vmatpush1.bf16.msra.mxu0 %v231
      %295 = vmatprep.subr.bf16.mxu0 0
      %296 = vmatpush1.bf16.msra.mxu0 %v232
      %297 = vmatprep.subr.bf16.mxu0 0
      %298 = vmatpush1.bf16.msra.mxu0 %v233
      %299 = vmatprep.subr.bf16.mxu0 0
      %300 = vmatpush1.bf16.msra.mxu0 %v234
      %301 = vmatprep.subr.bf16.mxu0 0
      %302 = vmatpush1.bf16.msra.mxu0 %v235
      %303 = vmatprep.subr.bf16.mxu0 0
      %304 = vmatpush1.bf16.msra.mxu0 %v236
      %305 = vmatprep.subr.bf16.mxu0 0
      %306 = vmatpush1.bf16.msra.mxu0 %v237
      %307 = vmatprep.subr.bf16.mxu0 0
      %308 = vmatpush1.bf16.msra.mxu0 %v238
      %309 = vmatprep.subr.bf16.mxu0 0
      %310 = vmatpush1.bf16.msra.mxu0 0
      %311 = vmatprep.subr.bf16.mxu0 0
      %312 = vmatpush1.bf16.msra.mxu0 0
      %313 = vmatprep.subr.bf16.mxu0 0
      %314 = vmatpush1.bf16.msra.mxu0 0
      %315 = vmatprep.subr.bf16.mxu0 0
      %316 = vmatpush1.bf16.msra.mxu0 0
      %317 = vmatprep.subr.bf16.mxu0 0
      %318 = vmatpush1.bf16.msra.mxu0 0
      %319 = vmatprep.subr.bf16.mxu0 0
      %320 = vmatpush1.bf16.msra.mxu0 0
      %321 = vmatprep.subr.bf16.mxu0 0
      %322 = vmatpush1.bf16.msra.mxu0 0
      %323 = vmatprep.subr.bf16.mxu0 0
      %324 = vmatpush1.bf16.msra.mxu0 0
      %325 = vmatprep.mubr.bf16.mxu0 0
      %326 = vmatmul.mubr.bf16.gmra.mrb[0].mxu0 %v167
      %v327 = vpop.f32.mrb[0].mxu0
      %v328 = vadd.f32 %v292, %v327
      %v329 = vpop.f32.mrb[0].mxu0
      %v330 = vpop.f32.mrb[0].mxu0
      %v331 = vpop.f32.mrb[0].mxu0
      %332 = vdwg.mxu0
      %v333 = vsub.f32 %v328, 1.0
      %v334 = vcvt.f32.s32.to.zero.pseudo %v333
      %335 = vst [vmem:[%s145] sm:$0xff] %v334
      %v336 = vsel %vm164, %v151, 0
      %337 = vst [vmem:[%s149] sm:$0xff] %v336
      %p338 = scmp.lt.s32.totalorder %s14, 1
      %s339 = scalar_select %p338, %s14, 1
      %s340 = smul.addr %s339, 8
      %s341 = scalar_lea.vmem %s1, %s340
      %p342 = scmp.lt.s32.totalorder %s14, 1
      %s343 = scalar_select %p342, %s14, 1
      %s344 = smul.addr %s343, 8
      %s345 = scalar_lea.vmem %s2, %s344
      // Predicated region
      $region25: #{_rle_device.2} parent=23 // pred_check
        %p346 = pneg %p58
      $region26: #{_rle_device.2} parent=23 // pred_check_branch
        %348 = sbr.rel (%p346) target = $region28
      $region27: #{_rle_device.2} parent=23 // pred_region
        _
      $region28: #{_rle_device.2} parent=23 // pred_fallthru
        _
      // Predicated region
      $region29: #{_rle_device.2} parent=23 // pred_check
        %p349 = pneg %p84
      $region30: #{_rle_device.2} parent=23 // pred_check_branch
        %351 = sbr.rel (%p349) target = $region32
      $region31: #{_rle_device.2} parent=23 // pred_region
        _
      $region32: #{_rle_device.2} parent=23 // pred_fallthru
        _
    $region24: #{_rle_device.2} parent=5 // pred_fallthru
      _
    %p352 = scmp.le.s32.totalorder 2, %s9
    // Predicated region
    $region33: #{_rle_device.2} parent=5 // pred_check
      %p353 = pneg %p352
    $region34: #{_rle_device.2} parent=5 // pred_check_branch
      %355 = sbr.rel (%p353) target = $region36
    $region35: #{_rle_device.2} parent=5 // pred_region
      %s356 = ssub.s32 %s9, 2
      // Predicated region
      $region37: #{_rle_device.2} parent=35 // pred_check
        %p357 = pneg %p64
      $region38: #{_rle_device.2} parent=35 // pred_check_branch
        %359 = sbr.rel (%p357) target = $region40
      $region39: #{_rle_device.2} parent=35 // pred_region
        %p360 = scmp.lt.s32.totalorder %s15, 1
        %s361 = scalar_select %p360, %s15, 1
        %s362 = smul.addr %s361, 8
        %s363 = scalar_lea.vmem %s1, %s362
      $region40: #{_rle_device.2} parent=35 // pred_fallthru
        _
      // Predicated region
      $region41: #{_rle_device.2} parent=35 // pred_check
        %p364 = pneg %p90
      $region42: #{_rle_device.2} parent=35 // pred_check_branch
        %366 = sbr.rel (%p364) target = $region44
      $region43: #{_rle_device.2} parent=35 // pred_region
        %p367 = scmp.lt.s32.totalorder %s15, 1
        %s368 = scalar_select %p367, %s15, 1
        %s369 = smul.addr %s368, 8
        %s370 = scalar_lea.vmem %s2, %s369
      $region44: #{_rle_device.2} parent=35 // pred_fallthru
        _
    $region36: #{_rle_device.2} parent=5 // pred_fallthru
      _
  $region6: #{_rle_device.2} parent=0 // loop_footer
    %s13 = sadd.s32 1, %s9
  $region7: #{_rle_device.2} parent=0 // loop_footer_branch
    %8 = sbr.rel target = $region3
  $region8: #{_rle_device.2} parent=0 // loop_exit
    _

// kernel: custom-call.10
$region0: #{custom-call.10}
  %s0 = inlined_call_operand.vmem [shape: u32[2,1024], index: 0, kind: output, shape index: {}]

// kernel: squeeze.9
$region0: #{squeeze.9}
  %s0 = inlined_call_operand.hbm [shape: s32[2048], index: 0, kind: input, shape index: {}]
  %s1 = inlined_call_operand.vmem [shape: s32[2,1024], index: 1, kind: output, shape index: {}]
  $region1: #{squeeze.9} parent=0
    #allocation0 [shape = 'u8[8192]{0}', space=vmem, size = 0x2000, scoped, tag = 'operand span for operand 0']
    #allocation1 [shape = 's32[1]{0}', space=sflag, size = 0x4, scoped, tag = 'scoped memory for squeeze.9']
    #allocation2 [shape = 'u8[32768]{0}', space=vmem, size = 0x8000, scoped, tag = 'scoped mem for output reshape']
    %2 = vsyncpa [#allocation1], 0
    %s4 = ssub.s32 256, 256
    %5 = vsyncadd [#allocation1], %s4
    %s7 = sshll.u32 [#allocation0], 4
    %s8 = int_to_ptr.vmem [resolvable:$true] %s7
    %10 = dma.hbm_to_vmem [thread:$0]  %s0, 256, %s8, [#allocation1]
    %11 = dma.done [#allocation1], 256
    %v12 = vld [vmem:[#allocation0] sm:$0xff]
    %13 = vst [vmem:[#allocation2] ss:$8 sm:$0xf] %v12
    %14 = vst [vmem:[#allocation2] ss:$8 sm:$0xf0] %v12
    %s15 = scalar_lea.vmem [#allocation0], 8
    %v16 = vld [vmem:[%s15] sm:$0xff]
    %s17 = scalar_lea.vmem [#allocation2], 1
    %18 = vst [vmem:[%s17] ss:$8 sm:$0xf] %v16
    %s19 = scalar_lea.vmem [#allocation2], 1
    %20 = vst [vmem:[%s19] ss:$8 sm:$0xf0] %v16
    %s22 = sshllo.u32 0, 2
    %v24 = vld [vmem:[#allocation2] sm:%s22]
    %s25 = sshllo.u32 0, 2
    %26 = vst [vmem:[%s1] sm:%s25] %v24
    %s27 = scalar_lea.vmem [#allocation2], 8
    %v28 = vld [vmem:[%s27] sm:%s22]
    %s29 = sshllo.u32 0, 2
    %s30 = scalar_lea.vmem %s1, 2
    %31 = vst [vmem:[%s30] sm:%s29] %v28
    %s32 = scalar_lea.vmem [#allocation2], 16
    %v33 = vld [vmem:[%s32] sm:%s22]
    %s34 = sshllo.u32 0, 2
    %s35 = smul.addr 2, 2
    %s36 = scalar_lea.vmem %s1, %s35
    %37 = vst [vmem:[%s36] sm:%s34] %v33
    %s38 = scalar_lea.vmem [#allocation2], 24
    %v39 = vld [vmem:[%s38] sm:%s22]
    %s40 = sshllo.u32 0, 2
    %s41 = smul.addr 2, 3
    %s42 = scalar_lea.vmem %s1, %s41
    %43 = vst [vmem:[%s42] sm:%s40] %v39
    %s44 = scalar_lea.vmem [#allocation2], 32
    %v45 = vld [vmem:[%s44] sm:%s22]
    %s46 = sshllo.u32 0, 2
    %s47 = smul.addr 2, 4
    %s48 = scalar_lea.vmem %s1, %s47
    %49 = vst [vmem:[%s48] sm:%s46] %v45
    %s50 = scalar_lea.vmem [#allocation2], 40
    %v51 = vld [vmem:[%s50] sm:%s22]
    %s52 = sshllo.u32 0, 2
    %s53 = smul.addr 2, 5
    %s54 = scalar_lea.vmem %s1, %s53
    %55 = vst [vmem:[%s54] sm:%s52] %v51
    %s56 = scalar_lea.vmem [#allocation2], 48
    %v57 = vld [vmem:[%s56] sm:%s22]
    %s58 = sshllo.u32 0, 2
    %s59 = smul.addr 2, 6
    %s60 = scalar_lea.vmem %s1, %s59
    %61 = vst [vmem:[%s60] sm:%s58] %v57
    %s62 = scalar_lea.vmem [#allocation2], 56
    %v63 = vld [vmem:[%s62] sm:%s22]
    %s64 = sshllo.u32 0, 2
    %s65 = smul.addr 2, 7
    %s66 = scalar_lea.vmem %s1, %s65
    %67 = vst [vmem:[%s66] sm:%s64] %v63
    %68 = vsyncpa [#allocation1], 1

// kernel: _rle_device.3
$region0: #{_rle_device.3}
  #allocation0 [shape = 'u32[]', space=smem, size = 0x4, offset = 0x4, fixed_abs, tag = 'smem constant byte address 0x4 - core index']
  #allocation1 [shape = 'u32[144,128]{1,0:T(1,128)}', space=vmem, size = 0x12000, scoped, tag = 'internal scratch']
  #allocation2 [shape = 'f32[1,256]{1,0:T(1,128)}', space=vmem, size = 0x400, scoped, tag = 'scratch operand']
  #allocation3 [shape = 'f32[1,256]{1,0:T(1,128)}', space=vmem, size = 0x400, scoped, tag = 'scratch operand']
  %s0 = inlined_call_operand.vmem [shape: s32[2,1024,1], index: 0, kind: input, shape index: {}]
  %s1 = inlined_call_operand.vmem [shape: s32[2,1024,1], index: 1, kind: input, shape index: {}]
  %s2 = inlined_call_operand.vmem [shape: s32[2,1,1024], index: 2, kind: output, shape index: {0}]
  %s3 = inlined_call_operand.vmem [shape: s32[2,1,1024], index: 3, kind: output, shape index: {1}]
  %4 = xla_tuple %s2, %s3
  %s5 = sld [smem:[#allocation0]]
  $region57: #{_rle_device.3} parent=0
    _
  %s7 = ssub.s32 1, %s5
  %s8 = scalar_select 0, %s7, %s5
  loop: start=0, step=1, limit=10
  $region2: #{_rle_device.3} parent=0 // loop_pre_header
    _
  $region3: #{_rle_device.3} parent=0 // loop_header
    %s10 = sphi 0, %s14
    %p11 = scmp.ge.s32.totalorder %s10, 10
    %s17 = sphi 0, %s36
    %s18 = sphi 0, %s32
    %s19 = sphi 0, %s28
    %s20 = sphi 0, %s17
    %s21 = sphi 0, %s18
    %s22 = sphi 0, %s19
    %s23 = sphi 0, %s20
    %s24 = sphi 0, %s21
    %s25 = sphi 0, %s22
    %s41 = sphi 0, %s43
    %s44 = sphi 0, %s41
    %s45 = sphi 0, %s44
    %s61 = sphi 0, %s45
    %s69 = sphi 0, %s71
    %s72 = sphi 0, %s69
    %s73 = sphi 0, %s72
    %s89 = sphi 0, %s73
    %s97 = sphi 0, %s99
    %s100 = sphi 0, %s97
    %s101 = sphi 0, %s100
    %s117 = sphi 0, %s101
    %s125 = sphi 0, %s127
    %s128 = sphi 0, %s125
    %s129 = sphi 0, %s128
    %s145 = sphi 0, %s129
  $region4: #{_rle_device.3} parent=0 // loop_header_branch
    %13 = sbr.rel (%p11) target = $region8
  $region5: #{_rle_device.3} parent=0 // loop_body
    %s15 = ssub.s32 %s10, 1
    %s16 = ssub.s32 %s10, 2
    %s26 = sadd.s32 1, %s19
    %p27 = scmp.ge.s32.totalorder %s26, 1
    %s28 = scalar_select %p27, 0, %s26
    %s29 = sadd.s32 1, %s18
    %s30 = scalar_select %p27, %s29, %s18
    %p31 = scmp.ge.s32.totalorder %s30, 4
    %s32 = scalar_select %p31, 0, %s30
    %s33 = sadd.s32 1, %s17
    %s34 = scalar_select %p31, %s33, %s17
    %p35 = scmp.ge.s32.totalorder %s34, 2
    %s36 = scalar_select %p35, 0, %s34
    %s37 = ssub.s32 %s17, %s36
    %s38 = ssub.s32 %s19, %s28
    %s39 = sor.u32 %s37, %s38
    %p40 = scmp.eq.s32.totalorder %s39, 0
    %s42 = sadd.s32 %s41, 1
    %s43 = scalar_select %p40, %s41, %s42
    %p46 = pneg %p40
    %p47 = scmp.eq.s32.totalorder %s10, 7
    %p48 = por %p46, %p47
    %p49 = scmp.ne.s32.totalorder %s41, %s44
    %p50 = scmp.eq.s32.totalorder %s10, 0
    %p51 = por %p49, %p50
    %p52 = scmp.ne.s32.totalorder %s41, %s44
    %p53 = scmp.eq.s32.totalorder %s15, 7
    %p54 = por %p52, %p53
    %p55 = scmp.ne.s32.totalorder %s44, %s45
    %p56 = scmp.eq.s32.totalorder %s15, 0
    %p57 = por %p55, %p56
    %p58 = scmp.ne.s32.totalorder %s44, %s45
    %p59 = scmp.eq.s32.totalorder %s16, 7
    %p60 = por %p58, %p59
    %p62 = scmp.ne.s32.totalorder %s45, %s61
    %p63 = scmp.eq.s32.totalorder %s16, 0
    %p64 = por %p62, %p63
    %s65 = ssub.s32 %s17, %s36
    %s66 = ssub.s32 %s19, %s28
    %s67 = sor.u32 %s65, %s66
    %p68 = scmp.eq.s32.totalorder %s67, 0
    %s70 = sadd.s32 %s69, 1
    %s71 = scalar_select %p68, %s69, %s70
    %p74 = pneg %p68
    %p75 = scmp.eq.s32.totalorder %s10, 7
    %p76 = por %p74, %p75
    %p77 = scmp.ne.s32.totalorder %s69, %s72
    %p78 = scmp.eq.s32.totalorder %s10, 0
    %p79 = por %p77, %p78
    %p80 = scmp.ne.s32.totalorder %s69, %s72
    %p81 = scmp.eq.s32.totalorder %s15, 7
    %p82 = por %p80, %p81
    %p83 = scmp.ne.s32.totalorder %s72, %s73
    %p84 = scmp.eq.s32.totalorder %s15, 0
    %p85 = por %p83, %p84
    %p86 = scmp.ne.s32.totalorder %s72, %s73
    %p87 = scmp.eq.s32.totalorder %s16, 7
    %p88 = por %p86, %p87
    %p90 = scmp.ne.s32.totalorder %s73, %s89
    %p91 = scmp.eq.s32.totalorder %s16, 0
    %p92 = por %p90, %p91
    %s93 = ssub.s32 %s17, %s36
    %s94 = ssub.s32 %s18, %s32
    %s95 = sor.u32 %s93, %s94
    %p96 = scmp.eq.s32.totalorder %s95, 0
    %s98 = sadd.s32 %s97, 1
    %s99 = scalar_select %p96, %s97, %s98
    %p102 = pneg %p96
    %p103 = scmp.eq.s32.totalorder %s10, 7
    %p104 = por %p102, %p103
    %p105 = scmp.ne.s32.totalorder %s97, %s100
    %p106 = scmp.eq.s32.totalorder %s10, 0
    %p107 = por %p105, %p106
    %p108 = scmp.ne.s32.totalorder %s97, %s100
    %p109 = scmp.eq.s32.totalorder %s15, 7
    %p110 = por %p108, %p109
    %p111 = scmp.ne.s32.totalorder %s100, %s101
    %p112 = scmp.eq.s32.totalorder %s15, 0
    %p113 = por %p111, %p112
    %p114 = scmp.ne.s32.totalorder %s100, %s101
    %p115 = scmp.eq.s32.totalorder %s16, 7
    %p116 = por %p114, %p115
    %p118 = scmp.ne.s32.totalorder %s101, %s117
    %p119 = scmp.eq.s32.totalorder %s16, 0
    %p120 = por %p118, %p119
    %s121 = ssub.s32 %s17, %s36
    %s122 = ssub.s32 %s18, %s32
    %s123 = sor.u32 %s121, %s122
    %p124 = scmp.eq.s32.totalorder %s123, 0
    %s126 = sadd.s32 %s125, 1
    %s127 = scalar_select %p124, %s125, %s126
    %p130 = pneg %p124
    %p131 = scmp.eq.s32.totalorder %s10, 7
    %p132 = por %p130, %p131
    %p133 = scmp.ne.s32.totalorder %s125, %s128
    %p134 = scmp.eq.s32.totalorder %s10, 0
    %p135 = por %p133, %p134
    %p136 = scmp.ne.s32.totalorder %s125, %s128
    %p137 = scmp.eq.s32.totalorder %s15, 7
    %p138 = por %p136, %p137
    %p139 = scmp.ne.s32.totalorder %s128, %s129
    %p140 = scmp.eq.s32.totalorder %s15, 0
    %p141 = por %p139, %p140
    %p142 = scmp.ne.s32.totalorder %s128, %s129
    %p143 = scmp.eq.s32.totalorder %s16, 7
    %p144 = por %p142, %p143
    %p146 = scmp.ne.s32.totalorder %s129, %s145
    %p147 = scmp.eq.s32.totalorder %s16, 0
    %p148 = por %p146, %p147
    %p149 = scmp.le.s32.totalorder 1, %s10
    %p150 = scmp.lt.s32.totalorder %s10, 9
    %p151 = pnand %p149, %p150
    %p152 = pneg %p151
    // Predicated region
    $region9: #{_rle_device.3} parent=5 // pred_check
      _
    $region10: #{_rle_device.3} parent=5 // pred_check_branch
      %154 = sbr.rel (%p151) target = $region12
    $region11: #{_rle_device.3} parent=5 // pred_region
      %s155 = ssub.s32 %s10, 1
    $region12: #{_rle_device.3} parent=5 // pred_fallthru
      _
    %p156 = scmp.lt.s32.totalorder %s10, 8
    // Predicated region
    $region13: #{_rle_device.3} parent=5 // pred_check
      %p157 = pneg %p156
    $region14: #{_rle_device.3} parent=5 // pred_check_branch
      %159 = sbr.rel (%p157) target = $region16
    $region15: #{_rle_device.3} parent=5 // pred_region
      // Predicated region
      $region17: #{_rle_device.3} parent=15 // pred_check
        %p160 = pneg %p51
      $region18: #{_rle_device.3} parent=15 // pred_check_branch
        %162 = sbr.rel (%p160) target = $region20
      $region19: #{_rle_device.3} parent=15 // pred_region
        %s163 = smul.u32 128, %s19
        %p164 = scmp.lt.s32.totalorder %s17, 1
        %s165 = scalar_select %p164, %s17, 1
        %p166 = scmp.lt.s32.totalorder %s163, 127
        %s167 = scalar_select %p166, %s163, 127
        %s168 = smul.addr %s165, 128
        %s169 = sadd.s32 %s167, %s168
        %s170 = smul.addr %s169, 8
        %s171 = scalar_lea.vmem %s0, %s170
        %s172 = smul.u32 128, %s19
      $region20: #{_rle_device.3} parent=15 // pred_fallthru
        _
      // Predicated region
      $region21: #{_rle_device.3} parent=15 // pred_check
        %p173 = pneg %p79
      $region22: #{_rle_device.3} parent=15 // pred_check_branch
        %175 = sbr.rel (%p173) target = $region24
      $region23: #{_rle_device.3} parent=15 // pred_region
        %s176 = smul.u32 128, %s19
        %p177 = scmp.lt.s32.totalorder %s17, 1
        %s178 = scalar_select %p177, %s17, 1
        %p179 = scmp.lt.s32.totalorder %s176, 127
        %s180 = scalar_select %p179, %s176, 127
        %s181 = smul.addr %s178, 128
        %s182 = sadd.s32 %s180, %s181
        %s183 = smul.addr %s182, 8
        %s184 = scalar_lea.vmem %s1, %s183
        %s185 = smul.u32 128, %s19
      $region24: #{_rle_device.3} parent=15 // pred_fallthru
        _
    $region16: #{_rle_device.3} parent=5 // pred_fallthru
      _
    %p186 = scmp.le.s32.totalorder 1, %s10
    %p187 = scmp.lt.s32.totalorder %s10, 9
    %p188 = pnand %p186, %p187
    %p189 = pneg %p188
    // Predicated region
    $region25: #{_rle_device.3} parent=5 // pred_check
      _
    $region26: #{_rle_device.3} parent=5 // pred_check_branch
      %191 = sbr.rel (%p188) target = $region28
    $region27: #{_rle_device.3} parent=5 // pred_region
      %s192 = ssub.s32 %s10, 1
      %s193 = smul.u32 128, %s22
      %p194 = scmp.lt.s32.totalorder %s20, 1
      %s195 = scalar_select %p194, %s20, 1
      %p196 = scmp.lt.s32.totalorder %s193, 127
      %s197 = scalar_select %p196, %s193, 127
      %s198 = smul.addr %s195, 128
      %s199 = sadd.s32 %s197, %s198
      %s200 = smul.addr %s199, 8
      %s201 = scalar_lea.vmem %s0, %s200
      %p202 = pneg %p57
      %p203 = pneg %p54
      %s204 = smul.u32 128, %s22
      %p205 = scmp.lt.s32.totalorder %s20, 1
      %s206 = scalar_select %p205, %s20, 1
      %p207 = scmp.lt.s32.totalorder %s204, 127
      %s208 = scalar_select %p207, %s204, 127
      %s209 = smul.addr %s206, 128
      %s210 = sadd.s32 %s208, %s209
      %s211 = smul.addr %s210, 8
      %s212 = scalar_lea.vmem %s1, %s211
      %p213 = pneg %p85
      %p214 = pneg %p82
      %p215 = pneg %p113
      %p216 = pneg %p110
      %s217 = smul.u32 2, %s21
      %p218 = scmp.lt.s32.totalorder %s20, 1
      %s219 = scalar_select %p218, %s20, 1
      %p220 = scmp.lt.s32.totalorder %s217, 7
      %s221 = scalar_select %p220, %s217, 7
      %s222 = smul.addr %s219, 8
      %s223 = sadd.s32 %s221, %s222
      %s224 = scalar_lea.vmem %s2, %s223
      %p225 = pneg %p141
      %p226 = pneg %p138
      %s227 = smul.u32 2, %s21
      %p228 = scmp.lt.s32.totalorder %s20, 1
      %s229 = scalar_select %p228, %s20, 1
      %p230 = scmp.lt.s32.totalorder %s227, 7
      %s231 = scalar_select %p230, %s227, 7
      %s232 = smul.addr %s229, 8
      %s233 = sadd.s32 %s231, %s232
      %s234 = scalar_lea.vmem %s3, %s233
      %s235 = smul.u32 128, %s22
      %p236 = scmp.lt.s32.totalorder %s20, 1
      %s237 = scalar_select %p236, %s20, 1
      %p238 = scmp.lt.s32.totalorder %s235, 127
      %s239 = scalar_select %p238, %s235, 127
      %s240 = smul.addr %s237, 128
      %s241 = sadd.s32 %s239, %s240
      %s242 = smul.addr %s241, 8
      %s243 = scalar_lea.vmem %s0, %s242
      %s244 = smul.u32 128, %s22
      %s245 = smul.u32 128, %s22
      %p246 = scmp.lt.s32.totalorder %s20, 1
      %s247 = scalar_select %p246, %s20, 1
      %p248 = scmp.lt.s32.totalorder %s245, 127
      %s249 = scalar_select %p248, %s245, 127
      %s250 = smul.addr %s247, 128
      %s251 = sadd.s32 %s249, %s250
      %s252 = smul.addr %s251, 8
      %s253 = scalar_lea.vmem %s1, %s252
      %s254 = smul.u32 128, %s22
      %s255 = smul.u32 2, %s21
      %p256 = scmp.lt.s32.totalorder %s20, 1
      %s257 = scalar_select %p256, %s20, 1
      %p258 = scmp.lt.s32.totalorder %s255, 7
      %s259 = scalar_select %p258, %s255, 7
      %s260 = smul.addr %s257, 8
      %s261 = sadd.s32 %s259, %s260
      %s262 = scalar_lea.vmem %s2, %s261
      %s263 = smul.u32 2, %s21
      %s264 = smul.u32 2, %s21
      %p265 = scmp.lt.s32.totalorder %s20, 1
      %s266 = scalar_select %p265, %s20, 1
      %p267 = scmp.lt.s32.totalorder %s264, 7
      %s268 = scalar_select %p267, %s264, 7
      %s269 = smul.addr %s266, 8
      %s270 = sadd.s32 %s268, %s269
      %s271 = scalar_lea.vmem %s3, %s270
      %s272 = smul.u32 2, %s21
      %p274 = scmp.eq.s32.totalorder %s22, 0
      // Predicated region
      $region29: #{_rle_device.3} parent=27 // pred_check
        %p275 = pneg %p274
      $region30: #{_rle_device.3} parent=27 // pred_check_branch
        %277 = sbr.rel (%p275) target = $region32
      $region31: #{_rle_device.3} parent=27 // pred_region
        %v278 = vlaneseq
        %vm279 = vcmp.ge.s32.totalorder %v278, 0
        %vm280 = vcmp.lt.s32.totalorder %v278, 256
        %vm281 = vmand %vm279, %vm280
        %282 = vst.msk [vmem:[#allocation2] sm:$0x3] %vm281, 0.0
        %283 = vst.msk [vmem:[#allocation3] sm:$0x3] %vm281, 0.0
      $region32: #{_rle_device.3} parent=27 // pred_fallthru
        _
      %s284 = smul.u32 %s21, 256
      %v285 = vld [vmem:[%s243] sm:$0xff]
      %v286 = vld [vmem:[%s243 + $0x8] sm:$0xff]
      %v287 = vld [vmem:[%s243 + $0x10] sm:$0xff]
      %v288 = vld [vmem:[%s243 + $0x18] sm:$0xff]
      %v289 = vld [vmem:[%s243 + $0x20] sm:$0xff]
      %v290 = vld [vmem:[%s243 + $0x28] sm:$0xff]
      %v291 = vld [vmem:[%s243 + $0x30] sm:$0xff]
      %v292 = vld [vmem:[%s243 + $0x38] sm:$0xff]
      %v293 = vld [vmem:[%s243 + $0x40] sm:$0xff]
      %v294 = vld [vmem:[%s243 + $0x48] sm:$0xff]
      %v295 = vld [vmem:[%s243 + $0x50] sm:$0xff]
      %v296 = vld [vmem:[%s243 + $0x58] sm:$0xff]
      %v297 = vld [vmem:[%s243 + $0x60] sm:$0xff]
      %v298 = vld [vmem:[%s243 + $0x68] sm:$0xff]
      %v299 = vld [vmem:[%s243 + $0x70] sm:$0xff]
      %v300 = vld [vmem:[%s243 + $0x78] sm:$0xff]
      %v301 = vld [vmem:[%s243 + $0x80] sm:$0xff]
      %v302 = vld [vmem:[%s243 + $0x88] sm:$0xff]
      %v303 = vld [vmem:[%s243 + $0x90] sm:$0xff]
      %v304 = vld [vmem:[%s243 + $0x98] sm:$0xff]
      %v305 = vld [vmem:[%s243 + $0xa0] sm:$0xff]
      %v306 = vld [vmem:[%s243 + $0xa8] sm:$0xff]
      %v307 = vld [vmem:[%s243 + $0xb0] sm:$0xff]
      %v308 = vld [vmem:[%s243 + $0xb8] sm:$0xff]
      %v309 = vld [vmem:[%s243 + $0xc0] sm:$0xff]
      %v310 = vld [vmem:[%s243 + $0xc8] sm:$0xff]
      %v311 = vld [vmem:[%s243 + $0xd0] sm:$0xff]
      %v312 = vld [vmem:[%s243 + $0xd8] sm:$0xff]
      %v313 = vld [vmem:[%s243 + $0xe0] sm:$0xff]
      %v314 = vld [vmem:[%s243 + $0xe8] sm:$0xff]
      %v315 = vld [vmem:[%s243 + $0xf0] sm:$0xff]
      %v316 = vld [vmem:[%s243 + $0xf8] sm:$0xff]
      %v317 = vld [vmem:[%s243 + $0x100] sm:$0xff]
      %v318 = vld [vmem:[%s243 + $0x108] sm:$0xff]
      %v319 = vld [vmem:[%s243 + $0x110] sm:$0xff]
      %v320 = vld [vmem:[%s243 + $0x118] sm:$0xff]
      %v321 = vld [vmem:[%s243 + $0x120] sm:$0xff]
      %v322 = vld [vmem:[%s243 + $0x128] sm:$0xff]
      %v323 = vld [vmem:[%s243 + $0x130] sm:$0xff]
      %v324 = vld [vmem:[%s243 + $0x138] sm:$0xff]
      %v325 = vld [vmem:[%s243 + $0x140] sm:$0xff]
      %v326 = vld [vmem:[%s243 + $0x148] sm:$0xff]
      %v327 = vld [vmem:[%s243 + $0x150] sm:$0xff]
      %v328 = vld [vmem:[%s243 + $0x158] sm:$0xff]
      %v329 = vld [vmem:[%s243 + $0x160] sm:$0xff]
      %v330 = vld [vmem:[%s243 + $0x168] sm:$0xff]
      %v331 = vld [vmem:[%s243 + $0x170] sm:$0xff]
      %v332 = vld [vmem:[%s243 + $0x178] sm:$0xff]
      %v333 = vld [vmem:[%s243 + $0x180] sm:$0xff]
      %v334 = vld [vmem:[%s243 + $0x188] sm:$0xff]
      %v335 = vld [vmem:[%s243 + $0x190] sm:$0xff]
      %v336 = vld [vmem:[%s243 + $0x198] sm:$0xff]
      %v337 = vld [vmem:[%s243 + $0x1a0] sm:$0xff]
      %v338 = vld [vmem:[%s243 + $0x1a8] sm:$0xff]
      %v339 = vld [vmem:[%s243 + $0x1b0] sm:$0xff]
      %v340 = vld [vmem:[%s243 + $0x1b8] sm:$0xff]
      %v341 = vld [vmem:[%s243 + $0x1c0] sm:$0xff]
      %v342 = vld [vmem:[%s243 + $0x1c8] sm:$0xff]
      %v343 = vld [vmem:[%s243 + $0x1d0] sm:$0xff]
      %v344 = vld [vmem:[%s243 + $0x1d8] sm:$0xff]
      %v345 = vld [vmem:[%s243 + $0x1e0] sm:$0xff]
      %v346 = vld [vmem:[%s243 + $0x1e8] sm:$0xff]
      %v347 = vld [vmem:[%s243 + $0x1f0] sm:$0xff]
      %v348 = vld [vmem:[%s243 + $0x1f8] sm:$0xff]
      %v349 = vld [vmem:[%s243 + $0x200] sm:$0xff]
      %v350 = vld [vmem:[%s243 + $0x208] sm:$0xff]
      %v351 = vld [vmem:[%s243 + $0x210] sm:$0xff]
      %v352 = vld [vmem:[%s243 + $0x218] sm:$0xff]
      %v353 = vld [vmem:[%s243 + $0x220] sm:$0xff]
      %v354 = vld [vmem:[%s243 + $0x228] sm:$0xff]
      %v355 = vld [vmem:[%s243 + $0x230] sm:$0xff]
      %v356 = vld [vmem:[%s243 + $0x238] sm:$0xff]
      %v357 = vld [vmem:[%s243 + $0x240] sm:$0xff]
      %v358 = vld [vmem:[%s243 + $0x248] sm:$0xff]
      %v359 = vld [vmem:[%s243 + $0x250] sm:$0xff]
      %v360 = vld [vmem:[%s243 + $0x258] sm:$0xff]
      %v361 = vld [vmem:[%s243 + $0x260] sm:$0xff]
      %v362 = vld [vmem:[%s243 + $0x268] sm:$0xff]
      %v363 = vld [vmem:[%s243 + $0x270] sm:$0xff]
      %v364 = vld [vmem:[%s243 + $0x278] sm:$0xff]
      %v365 = vld [vmem:[%s243 + $0x280] sm:$0xff]
      %v366 = vld [vmem:[%s243 + $0x288] sm:$0xff]
      %v367 = vld [vmem:[%s243 + $0x290] sm:$0xff]
      %v368 = vld [vmem:[%s243 + $0x298] sm:$0xff]
      %v369 = vld [vmem:[%s243 + $0x2a0] sm:$0xff]
      %v370 = vld [vmem:[%s243 + $0x2a8] sm:$0xff]
      %v371 = vld [vmem:[%s243 + $0x2b0] sm:$0xff]
      %v372 = vld [vmem:[%s243 + $0x2b8] sm:$0xff]
      %v373 = vld [vmem:[%s243 + $0x2c0] sm:$0xff]
      %v374 = vld [vmem:[%s243 + $0x2c8] sm:$0xff]
      %v375 = vld [vmem:[%s243 + $0x2d0] sm:$0xff]
      %v376 = vld [vmem:[%s243 + $0x2d8] sm:$0xff]
      %v377 = vld [vmem:[%s243 + $0x2e0] sm:$0xff]
      %v378 = vld [vmem:[%s243 + $0x2e8] sm:$0xff]
      %v379 = vld [vmem:[%s243 + $0x2f0] sm:$0xff]
      %v380 = vld [vmem:[%s243 + $0x2f8] sm:$0xff]
      %v381 = vld [vmem:[%s243 + $0x300] sm:$0xff]
      %v382 = vld [vmem:[%s243 + $0x308] sm:$0xff]
      %v383 = vld [vmem:[%s243 + $0x310] sm:$0xff]
      %v384 = vld [vmem:[%s243 + $0x318] sm:$0xff]
      %v385 = vld [vmem:[%s243 + $0x320] sm:$0xff]
      %v386 = vld [vmem:[%s243 + $0x328] sm:$0xff]
      %v387 = vld [vmem:[%s243 + $0x330] sm:$0xff]
      %v388 = vld [vmem:[%s243 + $0x338] sm:$0xff]
      %v389 = vld [vmem:[%s243 + $0x340] sm:$0xff]
      %v390 = vld [vmem:[%s243 + $0x348] sm:$0xff]
      %v391 = vld [vmem:[%s243 + $0x350] sm:$0xff]
      %v392 = vld [vmem:[%s243 + $0x358] sm:$0xff]
      %v393 = vld [vmem:[%s243 + $0x360] sm:$0xff]
      %v394 = vld [vmem:[%s243 + $0x368] sm:$0xff]
      %v395 = vld [vmem:[%s243 + $0x370] sm:$0xff]
      %v396 = vld [vmem:[%s243 + $0x378] sm:$0xff]
      %v397 = vld [vmem:[%s243 + $0x380] sm:$0xff]
      %v398 = vld [vmem:[%s243 + $0x388] sm:$0xff]
      %v399 = vld [vmem:[%s243 + $0x390] sm:$0xff]
      %v400 = vld [vmem:[%s243 + $0x398] sm:$0xff]
      %v401 = vld [vmem:[%s243 + $0x3a0] sm:$0xff]
      %v402 = vld [vmem:[%s243 + $0x3a8] sm:$0xff]
      %v403 = vld [vmem:[%s243 + $0x3b0] sm:$0xff]
      %v404 = vld [vmem:[%s243 + $0x3b8] sm:$0xff]
      %v405 = vld [vmem:[%s243 + $0x3c0] sm:$0xff]
      %v406 = vld [vmem:[%s243 + $0x3c8] sm:$0xff]
      %v407 = vld [vmem:[%s243 + $0x3d0] sm:$0xff]
      %v408 = vld [vmem:[%s243 + $0x3d8] sm:$0xff]
      %v409 = vld [vmem:[%s243 + $0x3e0] sm:$0xff]
      %v410 = vld [vmem:[%s243 + $0x3e8] sm:$0xff]
      %v411 = vld [vmem:[%s243 + $0x3f0] sm:$0xff]
      %v412 = vld [vmem:[%s243 + $0x3f8] sm:$0xff]
      %v413 = vld [vmem:[%s253] sm:$0xff]
      %v414 = vld [vmem:[%s253 + $0x8] sm:$0xff]
      %v415 = vld [vmem:[%s253 + $0x10] sm:$0xff]
      %v416 = vld [vmem:[%s253 + $0x18] sm:$0xff]
      %v417 = vld [vmem:[%s253 + $0x20] sm:$0xff]
      %v418 = vld [vmem:[%s253 + $0x28] sm:$0xff]
      %v419 = vld [vmem:[%s253 + $0x30] sm:$0xff]
      %v420 = vld [vmem:[%s253 + $0x38] sm:$0xff]
      %v421 = vld [vmem:[%s253 + $0x40] sm:$0xff]
      %v422 = vld [vmem:[%s253 + $0x48] sm:$0xff]
      %v423 = vld [vmem:[%s253 + $0x50] sm:$0xff]
      %v424 = vld [vmem:[%s253 + $0x58] sm:$0xff]
      %v425 = vld [vmem:[%s253 + $0x60] sm:$0xff]
      %v426 = vld [vmem:[%s253 + $0x68] sm:$0xff]
      %v427 = vld [vmem:[%s253 + $0x70] sm:$0xff]
      %v428 = vld [vmem:[%s253 + $0x78] sm:$0xff]
      %v429 = vld [vmem:[%s253 + $0x80] sm:$0xff]
      %v430 = vld [vmem:[%s253 + $0x88] sm:$0xff]
      %v431 = vld [vmem:[%s253 + $0x90] sm:$0xff]
      %v432 = vld [vmem:[%s253 + $0x98] sm:$0xff]
      %v433 = vld [vmem:[%s253 + $0xa0] sm:$0xff]
      %v434 = vld [vmem:[%s253 + $0xa8] sm:$0xff]
      %v435 = vld [vmem:[%s253 + $0xb0] sm:$0xff]
      %v436 = vld [vmem:[%s253 + $0xb8] sm:$0xff]
      %v437 = vld [vmem:[%s253 + $0xc0] sm:$0xff]
      %v438 = vld [vmem:[%s253 + $0xc8] sm:$0xff]
      %v439 = vld [vmem:[%s253 + $0xd0] sm:$0xff]
      %v440 = vld [vmem:[%s253 + $0xd8] sm:$0xff]
      %v441 = vld [vmem:[%s253 + $0xe0] sm:$0xff]
      %v442 = vld [vmem:[%s253 + $0xe8] sm:$0xff]
      %v443 = vld [vmem:[%s253 + $0xf0] sm:$0xff]
      %v444 = vld [vmem:[%s253 + $0xf8] sm:$0xff]
      %v445 = vld [vmem:[%s253 + $0x100] sm:$0xff]
      %v446 = vld [vmem:[%s253 + $0x108] sm:$0xff]
      %v447 = vld [vmem:[%s253 + $0x110] sm:$0xff]
      %v448 = vld [vmem:[%s253 + $0x118] sm:$0xff]
      %v449 = vld [vmem:[%s253 + $0x120] sm:$0xff]
      %v450 = vld [vmem:[%s253 + $0x128] sm:$0xff]
      %v451 = vld [vmem:[%s253 + $0x130] sm:$0xff]
      %v452 = vld [vmem:[%s253 + $0x138] sm:$0xff]
      %v453 = vld [vmem:[%s253 + $0x140] sm:$0xff]
      %v454 = vld [vmem:[%s253 + $0x148] sm:$0xff]
      %v455 = vld [vmem:[%s253 + $0x150] sm:$0xff]
      %v456 = vld [vmem:[%s253 + $0x158] sm:$0xff]
      %v457 = vld [vmem:[%s253 + $0x160] sm:$0xff]
      %v458 = vld [vmem:[%s253 + $0x168] sm:$0xff]
      %v459 = vld [vmem:[%s253 + $0x170] sm:$0xff]
      %v460 = vld [vmem:[%s253 + $0x178] sm:$0xff]
      %v461 = vld [vmem:[%s253 + $0x180] sm:$0xff]
      %v462 = vld [vmem:[%s253 + $0x188] sm:$0xff]
      %v463 = vld [vmem:[%s253 + $0x190] sm:$0xff]
      %v464 = vld [vmem:[%s253 + $0x198] sm:$0xff]
      %v465 = vld [vmem:[%s253 + $0x1a0] sm:$0xff]
      %v466 = vld [vmem:[%s253 + $0x1a8] sm:$0xff]
      %v467 = vld [vmem:[%s253 + $0x1b0] sm:$0xff]
      %v468 = vld [vmem:[%s253 + $0x1b8] sm:$0xff]
      %v469 = vld [vmem:[%s253 + $0x1c0] sm:$0xff]
      %v470 = vld [vmem:[%s253 + $0x1c8] sm:$0xff]
      %v471 = vld [vmem:[%s253 + $0x1d0] sm:$0xff]
      %v472 = vld [vmem:[%s253 + $0x1d8] sm:$0xff]
      %v473 = vld [vmem:[%s253 + $0x1e0] sm:$0xff]
      %v474 = vld [vmem:[%s253 + $0x1e8] sm:$0xff]
      %v475 = vld [vmem:[%s253 + $0x1f0] sm:$0xff]
      %v476 = vld [vmem:[%s253 + $0x1f8] sm:$0xff]
      %v477 = vld [vmem:[%s253 + $0x200] sm:$0xff]
      %v478 = vld [vmem:[%s253 + $0x208] sm:$0xff]
      %v479 = vld [vmem:[%s253 + $0x210] sm:$0xff]
      %v480 = vld [vmem:[%s253 + $0x218] sm:$0xff]
      %v481 = vld [vmem:[%s253 + $0x220] sm:$0xff]
      %v482 = vld [vmem:[%s253 + $0x228] sm:$0xff]
      %v483 = vld [vmem:[%s253 + $0x230] sm:$0xff]
      %v484 = vld [vmem:[%s253 + $0x238] sm:$0xff]
      %v485 = vld [vmem:[%s253 + $0x240] sm:$0xff]
      %v486 = vld [vmem:[%s253 + $0x248] sm:$0xff]
      %v487 = vld [vmem:[%s253 + $0x250] sm:$0xff]
      %v488 = vld [vmem:[%s253 + $0x258] sm:$0xff]
      %v489 = vld [vmem:[%s253 + $0x260] sm:$0xff]
      %v490 = vld [vmem:[%s253 + $0x268] sm:$0xff]
      %v491 = vld [vmem:[%s253 + $0x270] sm:$0xff]
      %v492 = vld [vmem:[%s253 + $0x278] sm:$0xff]
      %v493 = vld [vmem:[%s253 + $0x280] sm:$0xff]
      %v494 = vld [vmem:[%s253 + $0x288] sm:$0xff]
      %v495 = vld [vmem:[%s253 + $0x290] sm:$0xff]
      %v496 = vld [vmem:[%s253 + $0x298] sm:$0xff]
      %v497 = vld [vmem:[%s253 + $0x2a0] sm:$0xff]
      %v498 = vld [vmem:[%s253 + $0x2a8] sm:$0xff]
      %v499 = vld [vmem:[%s253 + $0x2b0] sm:$0xff]
      %v500 = vld [vmem:[%s253 + $0x2b8] sm:$0xff]
      %v501 = vld [vmem:[%s253 + $0x2c0] sm:$0xff]
      %v502 = vld [vmem:[%s253 + $0x2c8] sm:$0xff]
      %v503 = vld [vmem:[%s253 + $0x2d0] sm:$0xff]
      %v504 = vld [vmem:[%s253 + $0x2d8] sm:$0xff]
      %v505 = vld [vmem:[%s253 + $0x2e0] sm:$0xff]
      %v506 = vld [vmem:[%s253 + $0x2e8] sm:$0xff]
      %v507 = vld [vmem:[%s253 + $0x2f0] sm:$0xff]
      %v508 = vld [vmem:[%s253 + $0x2f8] sm:$0xff]
      %v509 = vld [vmem:[%s253 + $0x300] sm:$0xff]
      %v510 = vld [vmem:[%s253 + $0x308] sm:$0xff]
      %v511 = vld [vmem:[%s253 + $0x310] sm:$0xff]
      %v512 = vld [vmem:[%s253 + $0x318] sm:$0xff]
      %v513 = vld [vmem:[%s253 + $0x320] sm:$0xff]
      %v514 = vld [vmem:[%s253 + $0x328] sm:$0xff]
      %v515 = vld [vmem:[%s253 + $0x330] sm:$0xff]
      %v516 = vld [vmem:[%s253 + $0x338] sm:$0xff]
      %v517 = vld [vmem:[%s253 + $0x340] sm:$0xff]
      %v518 = vld [vmem:[%s253 + $0x348] sm:$0xff]
      %v519 = vld [vmem:[%s253 + $0x350] sm:$0xff]
      %v520 = vld [vmem:[%s253 + $0x358] sm:$0xff]
      %v521 = vld [vmem:[%s253 + $0x360] sm:$0xff]
      %v522 = vld [vmem:[%s253 + $0x368] sm:$0xff]
      %v523 = vld [vmem:[%s253 + $0x370] sm:$0xff]
      %v524 = vld [vmem:[%s253 + $0x378] sm:$0xff]
      %v525 = vld [vmem:[%s253 + $0x380] sm:$0xff]
      %v526 = vld [vmem:[%s253 + $0x388] sm:$0xff]
      %v527 = vld [vmem:[%s253 + $0x390] sm:$0xff]
      %v528 = vld [vmem:[%s253 + $0x398] sm:$0xff]
      %v529 = vld [vmem:[%s253 + $0x3a0] sm:$0xff]
      %v530 = vld [vmem:[%s253 + $0x3a8] sm:$0xff]
      %v531 = vld [vmem:[%s253 + $0x3b0] sm:$0xff]
      %v532 = vld [vmem:[%s253 + $0x3b8] sm:$0xff]
      %v533 = vld [vmem:[%s253 + $0x3c0] sm:$0xff]
      %v534 = vld [vmem:[%s253 + $0x3c8] sm:$0xff]
      %v535 = vld [vmem:[%s253 + $0x3d0] sm:$0xff]
      %v536 = vld [vmem:[%s253 + $0x3d8] sm:$0xff]
      %v537 = vld [vmem:[%s253 + $0x3e0] sm:$0xff]
      %v538 = vld [vmem:[%s253 + $0x3e8] sm:$0xff]
      %v539 = vld [vmem:[%s253 + $0x3f0] sm:$0xff]
      %v540 = vld [vmem:[%s253 + $0x3f8] sm:$0xff]
      %v541 = vlaneseq
      %v542 = vand.u32 %v541, 127
      %v543 = vadd.s32 %v542, 128
      %v544 = vstv %s284
      %v545 = vadd.s32 %v544, %v542
      %v546 = vadd.s32 %v544, %v543
      %547 = vset.pattern.permute.xlu0 0
      %548 = vperm.xlu0 %547, %v285
      %v549 = vpop.permute.xlu0 %548
      %550 = vset.pattern.permute.xlu0 0
      %551 = vperm.xlu0 %550, %v286
      %v552 = vpop.permute.xlu0 %551
      %553 = vset.pattern.permute.xlu0 0
      %554 = vperm.xlu0 %553, %v287
      %v555 = vpop.permute.xlu0 %554
      %556 = vset.pattern.permute.xlu0 0
      %557 = vperm.xlu0 %556, %v288
      %v558 = vpop.permute.xlu0 %557
      %559 = vset.pattern.permute.xlu0 0
      %560 = vperm.xlu0 %559, %v289
      %v561 = vpop.permute.xlu0 %560
      %562 = vset.pattern.permute.xlu0 0
      %563 = vperm.xlu0 %562, %v290
      %v564 = vpop.permute.xlu0 %563
      %565 = vset.pattern.permute.xlu0 0
      %566 = vperm.xlu0 %565, %v291
      %v567 = vpop.permute.xlu0 %566
      %568 = vset.pattern.permute.xlu0 0
      %569 = vperm.xlu0 %568, %v292
      %v570 = vpop.permute.xlu0 %569
      %571 = vset.pattern.permute.xlu0 0
      %572 = vperm.xlu0 %571, %v293
      %v573 = vpop.permute.xlu0 %572
      %574 = vset.pattern.permute.xlu0 0
      %575 = vperm.xlu0 %574, %v294
      %v576 = vpop.permute.xlu0 %575
      %577 = vset.pattern.permute.xlu0 0
      %578 = vperm.xlu0 %577, %v295
      %v579 = vpop.permute.xlu0 %578
      %580 = vset.pattern.permute.xlu0 0
      %581 = vperm.xlu0 %580, %v296
      %v582 = vpop.permute.xlu0 %581
      %583 = vset.pattern.permute.xlu0 0
      %584 = vperm.xlu0 %583, %v297
      %v585 = vpop.permute.xlu0 %584
      %586 = vset.pattern.permute.xlu0 0
      %587 = vperm.xlu0 %586, %v298
      %v588 = vpop.permute.xlu0 %587
      %589 = vset.pattern.permute.xlu0 0
      %590 = vperm.xlu0 %589, %v299
      %v591 = vpop.permute.xlu0 %590
      %592 = vset.pattern.permute.xlu0 0
      %593 = vperm.xlu0 %592, %v300
      %v594 = vpop.permute.xlu0 %593
      %595 = vset.pattern.permute.xlu0 0
      %596 = vperm.xlu0 %595, %v301
      %v597 = vpop.permute.xlu0 %596
      %598 = vset.pattern.permute.xlu0 0
      %599 = vperm.xlu0 %598, %v302
      %v600 = vpop.permute.xlu0 %599
      %601 = vset.pattern.permute.xlu0 0
      %602 = vperm.xlu0 %601, %v303
      %v603 = vpop.permute.xlu0 %602
      %604 = vset.pattern.permute.xlu0 0
      %605 = vperm.xlu0 %604, %v304
      %v606 = vpop.permute.xlu0 %605
      %607 = vset.pattern.permute.xlu0 0
      %608 = vperm.xlu0 %607, %v305
      %v609 = vpop.permute.xlu0 %608
      %610 = vset.pattern.permute.xlu0 0
      %611 = vperm.xlu0 %610, %v306
      %v612 = vpop.permute.xlu0 %611
      %613 = vset.pattern.permute.xlu0 0
      %614 = vperm.xlu0 %613, %v307
      %v615 = vpop.permute.xlu0 %614
      %616 = vset.pattern.permute.xlu0 0
      %617 = vperm.xlu0 %616, %v308
      %v618 = vpop.permute.xlu0 %617
      %619 = vset.pattern.permute.xlu0 0
      %620 = vperm.xlu0 %619, %v309
      %v621 = vpop.permute.xlu0 %620
      %622 = vset.pattern.permute.xlu0 0
      %623 = vperm.xlu0 %622, %v310
      %v624 = vpop.permute.xlu0 %623
      %625 = vset.pattern.permute.xlu0 0
      %626 = vperm.xlu0 %625, %v311
      %v627 = vpop.permute.xlu0 %626
      %628 = vset.pattern.permute.xlu0 0
      %629 = vperm.xlu0 %628, %v312
      %v630 = vpop.permute.xlu0 %629
      %631 = vset.pattern.permute.xlu0 0
      %632 = vperm.xlu0 %631, %v313
      %v633 = vpop.permute.xlu0 %632
      %634 = vset.pattern.permute.xlu0 0
      %635 = vperm.xlu0 %634, %v314
      %v636 = vpop.permute.xlu0 %635
      %637 = vset.pattern.permute.xlu0 0
      %638 = vperm.xlu0 %637, %v315
      %v639 = vpop.permute.xlu0 %638
      %640 = vset.pattern.permute.xlu0 0
      %641 = vperm.xlu0 %640, %v316
      %v642 = vpop.permute.xlu0 %641
      %643 = vset.pattern.permute.xlu0 0
      %644 = vperm.xlu0 %643, %v317
      %v645 = vpop.permute.xlu0 %644
      %646 = vset.pattern.permute.xlu0 0
      %647 = vperm.xlu0 %646, %v318
      %v648 = vpop.permute.xlu0 %647
      %649 = vset.pattern.permute.xlu0 0
      %650 = vperm.xlu0 %649, %v319
      %v651 = vpop.permute.xlu0 %650
      %652 = vset.pattern.permute.xlu0 0
      %653 = vperm.xlu0 %652, %v320
      %v654 = vpop.permute.xlu0 %653
      %655 = vset.pattern.permute.xlu0 0
      %656 = vperm.xlu0 %655, %v321
      %v657 = vpop.permute.xlu0 %656
      %658 = vset.pattern.permute.xlu0 0
      %659 = vperm.xlu0 %658, %v322
      %v660 = vpop.permute.xlu0 %659
      %661 = vset.pattern.permute.xlu0 0
      %662 = vperm.xlu0 %661, %v323
      %v663 = vpop.permute.xlu0 %662
      %664 = vset.pattern.permute.xlu0 0
      %665 = vperm.xlu0 %664, %v324
      %v666 = vpop.permute.xlu0 %665
      %667 = vset.pattern.permute.xlu0 0
      %668 = vperm.xlu0 %667, %v325
      %v669 = vpop.permute.xlu0 %668
      %670 = vset.pattern.permute.xlu0 0
      %671 = vperm.xlu0 %670, %v326
      %v672 = vpop.permute.xlu0 %671
      %673 = vset.pattern.permute.xlu0 0
      %674 = vperm.xlu0 %673, %v327
      %v675 = vpop.permute.xlu0 %674
      %676 = vset.pattern.permute.xlu0 0
      %677 = vperm.xlu0 %676, %v328
      %v678 = vpop.permute.xlu0 %677
      %679 = vset.pattern.permute.xlu0 0
      %680 = vperm.xlu0 %679, %v329
      %v681 = vpop.permute.xlu0 %680
      %682 = vset.pattern.permute.xlu0 0
      %683 = vperm.xlu0 %682, %v330
      %v684 = vpop.permute.xlu0 %683
      %685 = vset.pattern.permute.xlu0 0
      %686 = vperm.xlu0 %685, %v331
      %v687 = vpop.permute.xlu0 %686
      %688 = vset.pattern.permute.xlu0 0
      %689 = vperm.xlu0 %688, %v332
      %v690 = vpop.permute.xlu0 %689
      %691 = vset.pattern.permute.xlu0 0
      %692 = vperm.xlu0 %691, %v333
      %v693 = vpop.permute.xlu0 %692
      %694 = vset.pattern.permute.xlu0 0
      %695 = vperm.xlu0 %694, %v334
      %v696 = vpop.permute.xlu0 %695
      %697 = vset.pattern.permute.xlu0 0
      %698 = vperm.xlu0 %697, %v335
      %v699 = vpop.permute.xlu0 %698
      %700 = vset.pattern.permute.xlu0 0
      %701 = vperm.xlu0 %700, %v336
      %v702 = vpop.permute.xlu0 %701
      %703 = vset.pattern.permute.xlu0 0
      %704 = vperm.xlu0 %703, %v337
      %v705 = vpop.permute.xlu0 %704
      %706 = vset.pattern.permute.xlu0 0
      %707 = vperm.xlu0 %706, %v338
      %v708 = vpop.permute.xlu0 %707
      %709 = vset.pattern.permute.xlu0 0
      %710 = vperm.xlu0 %709, %v339
      %v711 = vpop.permute.xlu0 %710
      %712 = vset.pattern.permute.xlu0 0
      %713 = vperm.xlu0 %712, %v340
      %v714 = vpop.permute.xlu0 %713
      %715 = vset.pattern.permute.xlu0 0
      %716 = vperm.xlu0 %715, %v341
      %v717 = vpop.permute.xlu0 %716
      %718 = vset.pattern.permute.xlu0 0
      %719 = vperm.xlu0 %718, %v342
      %v720 = vpop.permute.xlu0 %719
      %721 = vset.pattern.permute.xlu0 0
      %722 = vperm.xlu0 %721, %v343
      %v723 = vpop.permute.xlu0 %722
      %724 = vset.pattern.permute.xlu0 0
      %725 = vperm.xlu0 %724, %v344
      %v726 = vpop.permute.xlu0 %725
      %727 = vset.pattern.permute.xlu0 0
      %728 = vperm.xlu0 %727, %v345
      %v729 = vpop.permute.xlu0 %728
      %730 = vset.pattern.permute.xlu0 0
      %731 = vperm.xlu0 %730, %v346
      %v732 = vpop.permute.xlu0 %731
      %733 = vset.pattern.permute.xlu0 0
      %734 = vperm.xlu0 %733, %v347
      %v735 = vpop.permute.xlu0 %734
      %736 = vset.pattern.permute.xlu0 0
      %737 = vperm.xlu0 %736, %v348
      %v738 = vpop.permute.xlu0 %737
      %739 = vset.pattern.permute.xlu0 0
      %740 = vperm.xlu0 %739, %v349
      %v741 = vpop.permute.xlu0 %740
      %742 = vset.pattern.permute.xlu0 0
      %743 = vperm.xlu0 %742, %v350
      %v744 = vpop.permute.xlu0 %743
      %745 = vset.pattern.permute.xlu0 0
      %746 = vperm.xlu0 %745, %v351
      %v747 = vpop.permute.xlu0 %746
      %748 = vset.pattern.permute.xlu0 0
      %749 = vperm.xlu0 %748, %v352
      %v750 = vpop.permute.xlu0 %749
      %751 = vset.pattern.permute.xlu0 0
      %752 = vperm.xlu0 %751, %v353
      %v753 = vpop.permute.xlu0 %752
      %754 = vset.pattern.permute.xlu0 0
      %755 = vperm.xlu0 %754, %v354
      %v756 = vpop.permute.xlu0 %755
      %757 = vset.pattern.permute.xlu0 0
      %758 = vperm.xlu0 %757, %v355
      %v759 = vpop.permute.xlu0 %758
      %760 = vset.pattern.permute.xlu0 0
      %761 = vperm.xlu0 %760, %v356
      %v762 = vpop.permute.xlu0 %761
      %763 = vset.pattern.permute.xlu0 0
      %764 = vperm.xlu0 %763, %v357
      %v765 = vpop.permute.xlu0 %764
      %766 = vset.pattern.permute.xlu0 0
      %767 = vperm.xlu0 %766, %v358
      %v768 = vpop.permute.xlu0 %767
      %769 = vset.pattern.permute.xlu0 0
      %770 = vperm.xlu0 %769, %v359
      %v771 = vpop.permute.xlu0 %770
      %772 = vset.pattern.permute.xlu0 0
      %773 = vperm.xlu0 %772, %v360
      %v774 = vpop.permute.xlu0 %773
      %775 = vset.pattern.permute.xlu0 0
      %776 = vperm.xlu0 %775, %v361
      %v777 = vpop.permute.xlu0 %776
      %778 = vset.pattern.permute.xlu0 0
      %779 = vperm.xlu0 %778, %v362
      %v780 = vpop.permute.xlu0 %779
      %781 = vset.pattern.permute.xlu0 0
      %782 = vperm.xlu0 %781, %v363
      %v783 = vpop.permute.xlu0 %782
      %784 = vset.pattern.permute.xlu0 0
      %785 = vperm.xlu0 %784, %v364
      %v786 = vpop.permute.xlu0 %785
      %787 = vset.pattern.permute.xlu0 0
      %788 = vperm.xlu0 %787, %v365
      %v789 = vpop.permute.xlu0 %788
      %790 = vset.pattern.permute.xlu0 0
      %791 = vperm.xlu0 %790, %v366
      %v792 = vpop.permute.xlu0 %791
      %793 = vset.pattern.permute.xlu0 0
      %794 = vperm.xlu0 %793, %v367
      %v795 = vpop.permute.xlu0 %794
      %796 = vset.pattern.permute.xlu0 0
      %797 = vperm.xlu0 %796, %v368
      %v798 = vpop.permute.xlu0 %797
      %799 = vset.pattern.permute.xlu0 0
      %800 = vperm.xlu0 %799, %v369
      %v801 = vpop.permute.xlu0 %800
      %802 = vset.pattern.permute.xlu0 0
      %803 = vperm.xlu0 %802, %v370
      %v804 = vpop.permute.xlu0 %803
      %805 = vset.pattern.permute.xlu0 0
      %806 = vperm.xlu0 %805, %v371
      %v807 = vpop.permute.xlu0 %806
      %808 = vset.pattern.permute.xlu0 0
      %809 = vperm.xlu0 %808, %v372
      %v810 = vpop.permute.xlu0 %809
      %811 = vset.pattern.permute.xlu0 0
      %812 = vperm.xlu0 %811, %v373
      %v813 = vpop.permute.xlu0 %812
      %814 = vset.pattern.permute.xlu0 0
      %815 = vperm.xlu0 %814, %v374
      %v816 = vpop.permute.xlu0 %815
      %817 = vset.pattern.permute.xlu0 0
      %818 = vperm.xlu0 %817, %v375
      %v819 = vpop.permute.xlu0 %818
      %820 = vset.pattern.permute.xlu0 0
      %821 = vperm.xlu0 %820, %v376
      %v822 = vpop.permute.xlu0 %821
      %823 = vset.pattern.permute.xlu0 0
      %824 = vperm.xlu0 %823, %v377
      %v825 = vpop.permute.xlu0 %824
      %826 = vset.pattern.permute.xlu0 0
      %827 = vperm.xlu0 %826, %v378
      %v828 = vpop.permute.xlu0 %827
      %829 = vset.pattern.permute.xlu0 0
      %830 = vperm.xlu0 %829, %v379
      %v831 = vpop.permute.xlu0 %830
      %832 = vset.pattern.permute.xlu0 0
      %833 = vperm.xlu0 %832, %v380
      %v834 = vpop.permute.xlu0 %833
      %835 = vset.pattern.permute.xlu0 0
      %836 = vperm.xlu0 %835, %v381
      %v837 = vpop.permute.xlu0 %836
      %838 = vset.pattern.permute.xlu0 0
      %839 = vperm.xlu0 %838, %v382
      %v840 = vpop.permute.xlu0 %839
      %841 = vset.pattern.permute.xlu0 0
      %842 = vperm.xlu0 %841, %v383
      %v843 = vpop.permute.xlu0 %842
      %844 = vset.pattern.permute.xlu0 0
      %845 = vperm.xlu0 %844, %v384
      %v846 = vpop.permute.xlu0 %845
      %847 = vset.pattern.permute.xlu0 0
      %848 = vperm.xlu0 %847, %v385
      %v849 = vpop.permute.xlu0 %848
      %850 = vset.pattern.permute.xlu0 0
      %851 = vperm.xlu0 %850, %v386
      %v852 = vpop.permute.xlu0 %851
      %853 = vset.pattern.permute.xlu0 0
      %854 = vperm.xlu0 %853, %v387
      %v855 = vpop.permute.xlu0 %854
      %856 = vset.pattern.permute.xlu0 0
      %857 = vperm.xlu0 %856, %v388
      %v858 = vpop.permute.xlu0 %857
      %859 = vset.pattern.permute.xlu0 0
      %860 = vperm.xlu0 %859, %v389
      %v861 = vpop.permute.xlu0 %860
      %862 = vset.pattern.permute.xlu0 0
      %863 = vperm.xlu0 %862, %v390
      %v864 = vpop.permute.xlu0 %863
      %865 = vset.pattern.permute.xlu0 0
      %866 = vperm.xlu0 %865, %v391
      %v867 = vpop.permute.xlu0 %866
      %868 = vset.pattern.permute.xlu0 0
      %869 = vperm.xlu0 %868, %v392
      %v870 = vpop.permute.xlu0 %869
      %871 = vset.pattern.permute.xlu0 0
      %872 = vperm.xlu0 %871, %v393
      %v873 = vpop.permute.xlu0 %872
      %874 = vset.pattern.permute.xlu0 0
      %875 = vperm.xlu0 %874, %v394
      %v876 = vpop.permute.xlu0 %875
      %877 = vset.pattern.permute.xlu0 0
      %878 = vperm.xlu0 %877, %v395
      %v879 = vpop.permute.xlu0 %878
      %880 = vset.pattern.permute.xlu0 0
      %881 = vperm.xlu0 %880, %v396
      %v882 = vpop.permute.xlu0 %881
      %883 = vset.pattern.permute.xlu0 0
      %884 = vperm.xlu0 %883, %v397
      %v885 = vpop.permute.xlu0 %884
      %886 = vset.pattern.permute.xlu0 0
      %887 = vperm.xlu0 %886, %v398
      %v888 = vpop.permute.xlu0 %887
      %889 = vset.pattern.permute.xlu0 0
      %890 = vperm.xlu0 %889, %v399
      %v891 = vpop.permute.xlu0 %890
      %892 = vset.pattern.permute.xlu0 0
      %893 = vperm.xlu0 %892, %v400
      %v894 = vpop.permute.xlu0 %893
      %895 = vset.pattern.permute.xlu0 0
      %896 = vperm.xlu0 %895, %v401
      %v897 = vpop.permute.xlu0 %896
      %898 = vset.pattern.permute.xlu0 0
      %899 = vperm.xlu0 %898, %v402
      %v900 = vpop.permute.xlu0 %899
      %901 = vset.pattern.permute.xlu0 0
      %902 = vperm.xlu0 %901, %v403
      %v903 = vpop.permute.xlu0 %902
      %904 = vset.pattern.permute.xlu0 0
      %905 = vperm.xlu0 %904, %v404
      %v906 = vpop.permute.xlu0 %905
      %907 = vset.pattern.permute.xlu0 0
      %908 = vperm.xlu0 %907, %v405
      %v909 = vpop.permute.xlu0 %908
      %910 = vset.pattern.permute.xlu0 0
      %911 = vperm.xlu0 %910, %v406
      %v912 = vpop.permute.xlu0 %911
      %913 = vset.pattern.permute.xlu0 0
      %914 = vperm.xlu0 %913, %v407
      %v915 = vpop.permute.xlu0 %914
      %916 = vset.pattern.permute.xlu0 0
      %917 = vperm.xlu0 %916, %v408
      %v918 = vpop.permute.xlu0 %917
      %919 = vset.pattern.permute.xlu0 0
      %920 = vperm.xlu0 %919, %v409
      %v921 = vpop.permute.xlu0 %920
      %922 = vset.pattern.permute.xlu0 0
      %923 = vperm.xlu0 %922, %v410
      %v924 = vpop.permute.xlu0 %923
      %925 = vset.pattern.permute.xlu0 0
      %926 = vperm.xlu0 %925, %v411
      %v927 = vpop.permute.xlu0 %926
      %928 = vset.pattern.permute.xlu0 0
      %929 = vperm.xlu0 %928, %v412
      %v930 = vpop.permute.xlu0 %929
      %vm931 = vcmp.eq.s32.totalorder %v549, %v545
      %vm932 = vcmp.eq.s32.totalorder %v549, %v546
      %vm933 = vcmp.eq.s32.totalorder %v552, %v545
      %vm934 = vcmp.eq.s32.totalorder %v552, %v546
      %vm935 = vcmp.eq.s32.totalorder %v555, %v545
      %vm936 = vcmp.eq.s32.totalorder %v555, %v546
      %vm937 = vcmp.eq.s32.totalorder %v558, %v545
      %vm938 = vcmp.eq.s32.totalorder %v558, %v546
      %vm939 = vcmp.eq.s32.totalorder %v561, %v545
      %vm940 = vcmp.eq.s32.totalorder %v561, %v546
      %vm941 = vcmp.eq.s32.totalorder %v564, %v545
      %vm942 = vcmp.eq.s32.totalorder %v564, %v546
      %vm943 = vcmp.eq.s32.totalorder %v567, %v545
      %vm944 = vcmp.eq.s32.totalorder %v567, %v546
      %vm945 = vcmp.eq.s32.totalorder %v570, %v545
      %vm946 = vcmp.eq.s32.totalorder %v570, %v546
      %vm947 = vcmp.eq.s32.totalorder %v573, %v545
      %vm948 = vcmp.eq.s32.totalorder %v573, %v546
      %vm949 = vcmp.eq.s32.totalorder %v576, %v545
      %vm950 = vcmp.eq.s32.totalorder %v576, %v546
      %vm951 = vcmp.eq.s32.totalorder %v579, %v545
      %vm952 = vcmp.eq.s32.totalorder %v579, %v546
      %vm953 = vcmp.eq.s32.totalorder %v582, %v545
      %vm954 = vcmp.eq.s32.totalorder %v582, %v546
      %vm955 = vcmp.eq.s32.totalorder %v585, %v545
      %vm956 = vcmp.eq.s32.totalorder %v585, %v546
      %vm957 = vcmp.eq.s32.totalorder %v588, %v545
      %vm958 = vcmp.eq.s32.totalorder %v588, %v546
      %vm959 = vcmp.eq.s32.totalorder %v591, %v545
      %vm960 = vcmp.eq.s32.totalorder %v591, %v546
      %vm961 = vcmp.eq.s32.totalorder %v594, %v545
      %vm962 = vcmp.eq.s32.totalorder %v594, %v546
      %vm963 = vcmp.eq.s32.totalorder %v597, %v545
      %vm964 = vcmp.eq.s32.totalorder %v597, %v546
      %vm965 = vcmp.eq.s32.totalorder %v600, %v545
      %vm966 = vcmp.eq.s32.totalorder %v600, %v546
      %vm967 = vcmp.eq.s32.totalorder %v603, %v545
      %vm968 = vcmp.eq.s32.totalorder %v603, %v546
      %vm969 = vcmp.eq.s32.totalorder %v606, %v545
      %vm970 = vcmp.eq.s32.totalorder %v606, %v546
      %vm971 = vcmp.eq.s32.totalorder %v609, %v545
      %vm972 = vcmp.eq.s32.totalorder %v609, %v546
      %vm973 = vcmp.eq.s32.totalorder %v612, %v545
      %vm974 = vcmp.eq.s32.totalorder %v612, %v546
      %vm975 = vcmp.eq.s32.totalorder %v615, %v545
      %vm976 = vcmp.eq.s32.totalorder %v615, %v546
      %vm977 = vcmp.eq.s32.totalorder %v618, %v545
      %vm978 = vcmp.eq.s32.totalorder %v618, %v546
      %vm979 = vcmp.eq.s32.totalorder %v621, %v545
      %vm980 = vcmp.eq.s32.totalorder %v621, %v546
      %vm981 = vcmp.eq.s32.totalorder %v624, %v545
      %vm982 = vcmp.eq.s32.totalorder %v624, %v546
      %vm983 = vcmp.eq.s32.totalorder %v627, %v545
      %vm984 = vcmp.eq.s32.totalorder %v627, %v546
      %vm985 = vcmp.eq.s32.totalorder %v630, %v545
      %vm986 = vcmp.eq.s32.totalorder %v630, %v546
      %vm987 = vcmp.eq.s32.totalorder %v633, %v545
      %vm988 = vcmp.eq.s32.totalorder %v633, %v546
      %vm989 = vcmp.eq.s32.totalorder %v636, %v545
      %vm990 = vcmp.eq.s32.totalorder %v636, %v546
      %vm991 = vcmp.eq.s32.totalorder %v639, %v545
      %vm992 = vcmp.eq.s32.totalorder %v639, %v546
      %vm993 = vcmp.eq.s32.totalorder %v642, %v545
      %vm994 = vcmp.eq.s32.totalorder %v642, %v546
      %vm995 = vcmp.eq.s32.totalorder %v645, %v545
      %vm996 = vcmp.eq.s32.totalorder %v645, %v546
      %vm997 = vcmp.eq.s32.totalorder %v648, %v545
      %vm998 = vcmp.eq.s32.totalorder %v648, %v546
      %vm999 = vcmp.eq.s32.totalorder %v651, %v545
      %vm1000 = vcmp.eq.s32.totalorder %v651, %v546
      %vm1001 = vcmp.eq.s32.totalorder %v654, %v545
      %vm1002 = vcmp.eq.s32.totalorder %v654, %v546
      %vm1003 = vcmp.eq.s32.totalorder %v657, %v545
      %vm1004 = vcmp.eq.s32.totalorder %v657, %v546
      %vm1005 = vcmp.eq.s32.totalorder %v660, %v545
      %vm1006 = vcmp.eq.s32.totalorder %v660, %v546
      %vm1007 = vcmp.eq.s32.totalorder %v663, %v545
      %vm1008 = vcmp.eq.s32.totalorder %v663, %v546
      %vm1009 = vcmp.eq.s32.totalorder %v666, %v545
      %vm1010 = vcmp.eq.s32.totalorder %v666, %v546
      %vm1011 = vcmp.eq.s32.totalorder %v669, %v545
      %vm1012 = vcmp.eq.s32.totalorder %v669, %v546
      %vm1013 = vcmp.eq.s32.totalorder %v672, %v545
      %vm1014 = vcmp.eq.s32.totalorder %v672, %v546
      %vm1015 = vcmp.eq.s32.totalorder %v675, %v545
      %vm1016 = vcmp.eq.s32.totalorder %v675, %v546
      %vm1017 = vcmp.eq.s32.totalorder %v678, %v545
      %vm1018 = vcmp.eq.s32.totalorder %v678, %v546
      %vm1019 = vcmp.eq.s32.totalorder %v681, %v545
      %vm1020 = vcmp.eq.s32.totalorder %v681, %v546
      %vm1021 = vcmp.eq.s32.totalorder %v684, %v545
      %vm1022 = vcmp.eq.s32.totalorder %v684, %v546
      %vm1023 = vcmp.eq.s32.totalorder %v687, %v545
      %vm1024 = vcmp.eq.s32.totalorder %v687, %v546
      %vm1025 = vcmp.eq.s32.totalorder %v690, %v545
      %vm1026 = vcmp.eq.s32.totalorder %v690, %v546
      %vm1027 = vcmp.eq.s32.totalorder %v693, %v545
      %vm1028 = vcmp.eq.s32.totalorder %v693, %v546
      %vm1029 = vcmp.eq.s32.totalorder %v696, %v545
      %vm1030 = vcmp.eq.s32.totalorder %v696, %v546
      %vm1031 = vcmp.eq.s32.totalorder %v699, %v545
      %vm1032 = vcmp.eq.s32.totalorder %v699, %v546
      %vm1033 = vcmp.eq.s32.totalorder %v702, %v545
      %vm1034 = vcmp.eq.s32.totalorder %v702, %v546
      %vm1035 = vcmp.eq.s32.totalorder %v705, %v545
      %vm1036 = vcmp.eq.s32.totalorder %v705, %v546
      %vm1037 = vcmp.eq.s32.totalorder %v708, %v545
      %vm1038 = vcmp.eq.s32.totalorder %v708, %v546
      %vm1039 = vcmp.eq.s32.totalorder %v711, %v545
      %vm1040 = vcmp.eq.s32.totalorder %v711, %v546
      %vm1041 = vcmp.eq.s32.totalorder %v714, %v545
      %vm1042 = vcmp.eq.s32.totalorder %v714, %v546
      %vm1043 = vcmp.eq.s32.totalorder %v717, %v545
      %vm1044 = vcmp.eq.s32.totalorder %v717, %v546
      %vm1045 = vcmp.eq.s32.totalorder %v720, %v545
      %vm1046 = vcmp.eq.s32.totalorder %v720, %v546
      %vm1047 = vcmp.eq.s32.totalorder %v723, %v545
      %vm1048 = vcmp.eq.s32.totalorder %v723, %v546
      %vm1049 = vcmp.eq.s32.totalorder %v726, %v545
      %vm1050 = vcmp.eq.s32.totalorder %v726, %v546
      %vm1051 = vcmp.eq.s32.totalorder %v729, %v545
      %vm1052 = vcmp.eq.s32.totalorder %v729, %v546
      %vm1053 = vcmp.eq.s32.totalorder %v732, %v545
      %vm1054 = vcmp.eq.s32.totalorder %v732, %v546
      %vm1055 = vcmp.eq.s32.totalorder %v735, %v545
      %vm1056 = vcmp.eq.s32.totalorder %v735, %v546
      %vm1057 = vcmp.eq.s32.totalorder %v738, %v545
      %vm1058 = vcmp.eq.s32.totalorder %v738, %v546
      %vm1059 = vcmp.eq.s32.totalorder %v741, %v545
      %vm1060 = vcmp.eq.s32.totalorder %v741, %v546
      %vm1061 = vcmp.eq.s32.totalorder %v744, %v545
      %vm1062 = vcmp.eq.s32.totalorder %v744, %v546
      %vm1063 = vcmp.eq.s32.totalorder %v747, %v545
      %vm1064 = vcmp.eq.s32.totalorder %v747, %v546
      %vm1065 = vcmp.eq.s32.totalorder %v750, %v545
      %vm1066 = vcmp.eq.s32.totalorder %v750, %v546
      %vm1067 = vcmp.eq.s32.totalorder %v753, %v545
      %vm1068 = vcmp.eq.s32.totalorder %v753, %v546
      %vm1069 = vcmp.eq.s32.totalorder %v756, %v545
      %vm1070 = vcmp.eq.s32.totalorder %v756, %v546
      %vm1071 = vcmp.eq.s32.totalorder %v759, %v545
      %vm1072 = vcmp.eq.s32.totalorder %v759, %v546
      %vm1073 = vcmp.eq.s32.totalorder %v762, %v545
      %vm1074 = vcmp.eq.s32.totalorder %v762, %v546
      %vm1075 = vcmp.eq.s32.totalorder %v765, %v545
      %vm1076 = vcmp.eq.s32.totalorder %v765, %v546
      %vm1077 = vcmp.eq.s32.totalorder %v768, %v545
      %vm1078 = vcmp.eq.s32.totalorder %v768, %v546
      %vm1079 = vcmp.eq.s32.totalorder %v771, %v545
      %vm1080 = vcmp.eq.s32.totalorder %v771, %v546
      %vm1081 = vcmp.eq.s32.totalorder %v774, %v545
      %vm1082 = vcmp.eq.s32.totalorder %v774, %v546
      %vm1083 = vcmp.eq.s32.totalorder %v777, %v545
      %vm1084 = vcmp.eq.s32.totalorder %v777, %v546
      %vm1085 = vcmp.eq.s32.totalorder %v780, %v545
      %vm1086 = vcmp.eq.s32.totalorder %v780, %v546
      %vm1087 = vcmp.eq.s32.totalorder %v783, %v545
      %vm1088 = vcmp.eq.s32.totalorder %v783, %v546
      %vm1089 = vcmp.eq.s32.totalorder %v786, %v545
      %vm1090 = vcmp.eq.s32.totalorder %v786, %v546
      %vm1091 = vcmp.eq.s32.totalorder %v789, %v545
      %vm1092 = vcmp.eq.s32.totalorder %v789, %v546
      %vm1093 = vcmp.eq.s32.totalorder %v792, %v545
      %vm1094 = vcmp.eq.s32.totalorder %v792, %v546
      %vm1095 = vcmp.eq.s32.totalorder %v795, %v545
      %vm1096 = vcmp.eq.s32.totalorder %v795, %v546
      %vm1097 = vcmp.eq.s32.totalorder %v798, %v545
      %vm1098 = vcmp.eq.s32.totalorder %v798, %v546
      %vm1099 = vcmp.eq.s32.totalorder %v801, %v545
      %vm1100 = vcmp.eq.s32.totalorder %v801, %v546
      %vm1101 = vcmp.eq.s32.totalorder %v804, %v545
      %vm1102 = vcmp.eq.s32.totalorder %v804, %v546
      %vm1103 = vcmp.eq.s32.totalorder %v807, %v545
      %vm1104 = vcmp.eq.s32.totalorder %v807, %v546
      %vm1105 = vcmp.eq.s32.totalorder %v810, %v545
      %vm1106 = vcmp.eq.s32.totalorder %v810, %v546
      %vm1107 = vcmp.eq.s32.totalorder %v813, %v545
      %vm1108 = vcmp.eq.s32.totalorder %v813, %v546
      %vm1109 = vcmp.eq.s32.totalorder %v816, %v545
      %vm1110 = vcmp.eq.s32.totalorder %v816, %v546
      %vm1111 = vcmp.eq.s32.totalorder %v819, %v545
      %vm1112 = vcmp.eq.s32.totalorder %v819, %v546
      %vm1113 = vcmp.eq.s32.totalorder %v822, %v545
      %vm1114 = vcmp.eq.s32.totalorder %v822, %v546
      %vm1115 = vcmp.eq.s32.totalorder %v825, %v545
      %vm1116 = vcmp.eq.s32.totalorder %v825, %v546
      %vm1117 = vcmp.eq.s32.totalorder %v828, %v545
      %vm1118 = vcmp.eq.s32.totalorder %v828, %v546
      %vm1119 = vcmp.eq.s32.totalorder %v831, %v545
      %vm1120 = vcmp.eq.s32.totalorder %v831, %v546
      %vm1121 = vcmp.eq.s32.totalorder %v834, %v545
      %vm1122 = vcmp.eq.s32.totalorder %v834, %v546
      %vm1123 = vcmp.eq.s32.totalorder %v837, %v545
      %vm1124 = vcmp.eq.s32.totalorder %v837, %v546
      %vm1125 = vcmp.eq.s32.totalorder %v840, %v545
      %vm1126 = vcmp.eq.s32.totalorder %v840, %v546
      %vm1127 = vcmp.eq.s32.totalorder %v843, %v545
      %vm1128 = vcmp.eq.s32.totalorder %v843, %v546
      %vm1129 = vcmp.eq.s32.totalorder %v846, %v545
      %vm1130 = vcmp.eq.s32.totalorder %v846, %v546
      %vm1131 = vcmp.eq.s32.totalorder %v849, %v545
      %vm1132 = vcmp.eq.s32.totalorder %v849, %v546
      %vm1133 = vcmp.eq.s32.totalorder %v852, %v545
      %vm1134 = vcmp.eq.s32.totalorder %v852, %v546
      %vm1135 = vcmp.eq.s32.totalorder %v855, %v545
      %vm1136 = vcmp.eq.s32.totalorder %v855, %v546
      %vm1137 = vcmp.eq.s32.totalorder %v858, %v545
      %vm1138 = vcmp.eq.s32.totalorder %v858, %v546
      %vm1139 = vcmp.eq.s32.totalorder %v861, %v545
      %vm1140 = vcmp.eq.s32.totalorder %v861, %v546
      %vm1141 = vcmp.eq.s32.totalorder %v864, %v545
      %vm1142 = vcmp.eq.s32.totalorder %v864, %v546
      %vm1143 = vcmp.eq.s32.totalorder %v867, %v545
      %vm1144 = vcmp.eq.s32.totalorder %v867, %v546
      %vm1145 = vcmp.eq.s32.totalorder %v870, %v545
      %vm1146 = vcmp.eq.s32.totalorder %v870, %v546
      %vm1147 = vcmp.eq.s32.totalorder %v873, %v545
      %vm1148 = vcmp.eq.s32.totalorder %v873, %v546
      %vm1149 = vcmp.eq.s32.totalorder %v876, %v545
      %vm1150 = vcmp.eq.s32.totalorder %v876, %v546
      %vm1151 = vcmp.eq.s32.totalorder %v879, %v545
      %vm1152 = vcmp.eq.s32.totalorder %v879, %v546
      %vm1153 = vcmp.eq.s32.totalorder %v882, %v545
      %vm1154 = vcmp.eq.s32.totalorder %v882, %v546
      %vm1155 = vcmp.eq.s32.totalorder %v885, %v545
      %vm1156 = vcmp.eq.s32.totalorder %v885, %v546
      %vm1157 = vcmp.eq.s32.totalorder %v888, %v545
      %vm1158 = vcmp.eq.s32.totalorder %v888, %v546
      %vm1159 = vcmp.eq.s32.totalorder %v891, %v545
      %vm1160 = vcmp.eq.s32.totalorder %v891, %v546
      %vm1161 = vcmp.eq.s32.totalorder %v894, %v545
      %vm1162 = vcmp.eq.s32.totalorder %v894, %v546
      %vm1163 = vcmp.eq.s32.totalorder %v897, %v545
      %vm1164 = vcmp.eq.s32.totalorder %v897, %v546
      %vm1165 = vcmp.eq.s32.totalorder %v900, %v545
      %vm1166 = vcmp.eq.s32.totalorder %v900, %v546
      %vm1167 = vcmp.eq.s32.totalorder %v903, %v545
      %vm1168 = vcmp.eq.s32.totalorder %v903, %v546
      %vm1169 = vcmp.eq.s32.totalorder %v906, %v545
      %vm1170 = vcmp.eq.s32.totalorder %v906, %v546
      %vm1171 = vcmp.eq.s32.totalorder %v909, %v545
      %vm1172 = vcmp.eq.s32.totalorder %v909, %v546
      %vm1173 = vcmp.eq.s32.totalorder %v912, %v545
      %vm1174 = vcmp.eq.s32.totalorder %v912, %v546
      %vm1175 = vcmp.eq.s32.totalorder %v915, %v545
      %vm1176 = vcmp.eq.s32.totalorder %v915, %v546
      %vm1177 = vcmp.eq.s32.totalorder %v918, %v545
      %vm1178 = vcmp.eq.s32.totalorder %v918, %v546
      %vm1179 = vcmp.eq.s32.totalorder %v921, %v545
      %vm1180 = vcmp.eq.s32.totalorder %v921, %v546
      %vm1181 = vcmp.eq.s32.totalorder %v924, %v545
      %vm1182 = vcmp.eq.s32.totalorder %v924, %v546
      %vm1183 = vcmp.eq.s32.totalorder %v927, %v545
      %vm1184 = vcmp.eq.s32.totalorder %v927, %v546
      %vm1185 = vcmp.eq.s32.totalorder %v930, %v545
      %vm1186 = vcmp.eq.s32.totalorder %v930, %v546
      %v1187 = vld [vmem:[#allocation2] sm:$0x3]
      %v1188 = vsel %vm931, 1, 0
      %v1189 = vsel %vm932, 1, 0
      %v1190 = vsel %vm933, 1, 0
      %v1191 = vsel %vm934, 1, 0
      %v1192 = vsel %vm935, 1, 0
      %v1193 = vsel %vm936, 1, 0
      %v1194 = vsel %vm937, 1, 0
      %v1195 = vsel %vm938, 1, 0
      %v1196 = vsel %vm939, 1, 0
      %v1197 = vsel %vm940, 1, 0
      %v1198 = vsel %vm941, 1, 0
      %v1199 = vsel %vm942, 1, 0
      %v1200 = vsel %vm943, 1, 0
      %v1201 = vsel %vm944, 1, 0
      %v1202 = vsel %vm945, 1, 0
      %v1203 = vsel %vm946, 1, 0
      %v1204 = vsel %vm947, 1, 0
      %v1205 = vsel %vm948, 1, 0
      %v1206 = vsel %vm949, 1, 0
      %v1207 = vsel %vm950, 1, 0
      %v1208 = vsel %vm951, 1, 0
      %v1209 = vsel %vm952, 1, 0
      %v1210 = vsel %vm953, 1, 0
      %v1211 = vsel %vm954, 1, 0
      %v1212 = vsel %vm955, 1, 0
      %v1213 = vsel %vm956, 1, 0
      %v1214 = vsel %vm957, 1, 0
      %v1215 = vsel %vm958, 1, 0
      %v1216 = vsel %vm959, 1, 0
      %v1217 = vsel %vm960, 1, 0
      %v1218 = vsel %vm961, 1, 0
      %v1219 = vsel %vm962, 1, 0
      %v1220 = vsel %vm963, 1, 0
      %v1221 = vsel %vm964, 1, 0
      %v1222 = vsel %vm965, 1, 0
      %v1223 = vsel %vm966, 1, 0
      %v1224 = vsel %vm967, 1, 0
      %v1225 = vsel %vm968, 1, 0
      %v1226 = vsel %vm969, 1, 0
      %v1227 = vsel %vm970, 1, 0
      %v1228 = vsel %vm971, 1, 0
      %v1229 = vsel %vm972, 1, 0
      %v1230 = vsel %vm973, 1, 0
      %v1231 = vsel %vm974, 1, 0
      %v1232 = vsel %vm975, 1, 0
      %v1233 = vsel %vm976, 1, 0
      %v1234 = vsel %vm977, 1, 0
      %v1235 = vsel %vm978, 1, 0
      %v1236 = vsel %vm979, 1, 0
      %v1237 = vsel %vm980, 1, 0
      %v1238 = vsel %vm981, 1, 0
      %v1239 = vsel %vm982, 1, 0
      %v1240 = vsel %vm983, 1, 0
      %v1241 = vsel %vm984, 1, 0
      %v1242 = vsel %vm985, 1, 0
      %v1243 = vsel %vm986, 1, 0
      %v1244 = vsel %vm987, 1, 0
      %v1245 = vsel %vm988, 1, 0
      %v1246 = vsel %vm989, 1, 0
      %v1247 = vsel %vm990, 1, 0
      %v1248 = vsel %vm991, 1, 0
      %v1249 = vsel %vm992, 1, 0
      %v1250 = vsel %vm993, 1, 0
      %v1251 = vsel %vm994, 1, 0
      %v1252 = vsel %vm995, 1, 0
      %v1253 = vsel %vm996, 1, 0
      %v1254 = vsel %vm997, 1, 0
      %v1255 = vsel %vm998, 1, 0
      %v1256 = vsel %vm999, 1, 0
      %v1257 = vsel %vm1000, 1, 0
      %v1258 = vsel %vm1001, 1, 0
      %v1259 = vsel %vm1002, 1, 0
      %v1260 = vsel %vm1003, 1, 0
      %v1261 = vsel %vm1004, 1, 0
      %v1262 = vsel %vm1005, 1, 0
      %v1263 = vsel %vm1006, 1, 0
      %v1264 = vsel %vm1007, 1, 0
      %v1265 = vsel %vm1008, 1, 0
      %v1266 = vsel %vm1009, 1, 0
      %v1267 = vsel %vm1010, 1, 0
      %v1268 = vsel %vm1011, 1, 0
      %v1269 = vsel %vm1012, 1, 0
      %v1270 = vsel %vm1013, 1, 0
      %v1271 = vsel %vm1014, 1, 0
      %v1272 = vsel %vm1015, 1, 0
      %v1273 = vsel %vm1016, 1, 0
      %v1274 = vsel %vm1017, 1, 0
      %v1275 = vsel %vm1018, 1, 0
      %v1276 = vsel %vm1019, 1, 0
      %v1277 = vsel %vm1020, 1, 0
      %v1278 = vsel %vm1021, 1, 0
      %v1279 = vsel %vm1022, 1, 0
      %v1280 = vsel %vm1023, 1, 0
      %v1281 = vsel %vm1024, 1, 0
      %v1282 = vsel %vm1025, 1, 0
      %v1283 = vsel %vm1026, 1, 0
      %v1284 = vsel %vm1027, 1, 0
      %v1285 = vsel %vm1028, 1, 0
      %v1286 = vsel %vm1029, 1, 0
      %v1287 = vsel %vm1030, 1, 0
      %v1288 = vsel %vm1031, 1, 0
      %v1289 = vsel %vm1032, 1, 0
      %v1290 = vsel %vm1033, 1, 0
      %v1291 = vsel %vm1034, 1, 0
      %v1292 = vsel %vm1035, 1, 0
      %v1293 = vsel %vm1036, 1, 0
      %v1294 = vsel %vm1037, 1, 0
      %v1295 = vsel %vm1038, 1, 0
      %v1296 = vsel %vm1039, 1, 0
      %v1297 = vsel %vm1040, 1, 0
      %v1298 = vsel %vm1041, 1, 0
      %v1299 = vsel %vm1042, 1, 0
      %v1300 = vsel %vm1043, 1, 0
      %v1301 = vsel %vm1044, 1, 0
      %v1302 = vsel %vm1045, 1, 0
      %v1303 = vsel %vm1046, 1, 0
      %v1304 = vsel %vm1047, 1, 0
      %v1305 = vsel %vm1048, 1, 0
      %v1306 = vsel %vm1049, 1, 0
      %v1307 = vsel %vm1050, 1, 0
      %v1308 = vsel %vm1051, 1, 0
      %v1309 = vsel %vm1052, 1, 0
      %v1310 = vsel %vm1053, 1, 0
      %v1311 = vsel %vm1054, 1, 0
      %v1312 = vsel %vm1055, 1, 0
      %v1313 = vsel %vm1056, 1, 0
      %v1314 = vsel %vm1057, 1, 0
      %v1315 = vsel %vm1058, 1, 0
      %v1316 = vsel %vm1059, 1, 0
      %v1317 = vsel %vm1060, 1, 0
      %v1318 = vsel %vm1061, 1, 0
      %v1319 = vsel %vm1062, 1, 0
      %v1320 = vsel %vm1063, 1, 0
      %v1321 = vsel %vm1064, 1, 0
      %v1322 = vsel %vm1065, 1, 0
      %v1323 = vsel %vm1066, 1, 0
      %v1324 = vsel %vm1067, 1, 0
      %v1325 = vsel %vm1068, 1, 0
      %v1326 = vsel %vm1069, 1, 0
      %v1327 = vsel %vm1070, 1, 0
      %v1328 = vsel %vm1071, 1, 0
      %v1329 = vsel %vm1072, 1, 0
      %v1330 = vsel %vm1073, 1, 0
      %v1331 = vsel %vm1074, 1, 0
      %v1332 = vsel %vm1075, 1, 0
      %v1333 = vsel %vm1076, 1, 0
      %v1334 = vsel %vm1077, 1, 0
      %v1335 = vsel %vm1078, 1, 0
      %v1336 = vsel %vm1079, 1, 0
      %v1337 = vsel %vm1080, 1, 0
      %v1338 = vsel %vm1081, 1, 0
      %v1339 = vsel %vm1082, 1, 0
      %v1340 = vsel %vm1083, 1, 0
      %v1341 = vsel %vm1084, 1, 0
      %v1342 = vsel %vm1085, 1, 0
      %v1343 = vsel %vm1086, 1, 0
      %v1344 = vsel %vm1087, 1, 0
      %v1345 = vsel %vm1088, 1, 0
      %v1346 = vsel %vm1089, 1, 0
      %v1347 = vsel %vm1090, 1, 0
      %v1348 = vsel %vm1091, 1, 0
      %v1349 = vsel %vm1092, 1, 0
      %v1350 = vsel %vm1093, 1, 0
      %v1351 = vsel %vm1094, 1, 0
      %v1352 = vsel %vm1095, 1, 0
      %v1353 = vsel %vm1096, 1, 0
      %v1354 = vsel %vm1097, 1, 0
      %v1355 = vsel %vm1098, 1, 0
      %v1356 = vsel %vm1099, 1, 0
      %v1357 = vsel %vm1100, 1, 0
      %v1358 = vsel %vm1101, 1, 0
      %v1359 = vsel %vm1102, 1, 0
      %v1360 = vsel %vm1103, 1, 0
      %v1361 = vsel %vm1104, 1, 0
      %v1362 = vsel %vm1105, 1, 0
      %v1363 = vsel %vm1106, 1, 0
      %v1364 = vsel %vm1107, 1, 0
      %v1365 = vsel %vm1108, 1, 0
      %v1366 = vsel %vm1109, 1, 0
      %v1367 = vsel %vm1110, 1, 0
      %v1368 = vsel %vm1111, 1, 0
      %v1369 = vsel %vm1112, 1, 0
      %v1370 = vsel %vm1113, 1, 0
      %v1371 = vsel %vm1114, 1, 0
      %v1372 = vsel %vm1115, 1, 0
      %v1373 = vsel %vm1116, 1, 0
      %v1374 = vsel %vm1117, 1, 0
      %v1375 = vsel %vm1118, 1, 0
      %v1376 = vsel %vm1119, 1, 0
      %v1377 = vsel %vm1120, 1, 0
      %v1378 = vsel %vm1121, 1, 0
      %v1379 = vsel %vm1122, 1, 0
      %v1380 = vsel %vm1123, 1, 0
      %v1381 = vsel %vm1124, 1, 0
      %v1382 = vsel %vm1125, 1, 0
      %v1383 = vsel %vm1126, 1, 0
      %v1384 = vsel %vm1127, 1, 0
      %v1385 = vsel %vm1128, 1, 0
      %v1386 = vsel %vm1129, 1, 0
      %v1387 = vsel %vm1130, 1, 0
      %v1388 = vsel %vm1131, 1, 0
      %v1389 = vsel %vm1132, 1, 0
      %v1390 = vsel %vm1133, 1, 0
      %v1391 = vsel %vm1134, 1, 0
      %v1392 = vsel %vm1135, 1, 0
      %v1393 = vsel %vm1136, 1, 0
      %v1394 = vsel %vm1137, 1, 0
      %v1395 = vsel %vm1138, 1, 0
      %v1396 = vsel %vm1139, 1, 0
      %v1397 = vsel %vm1140, 1, 0
      %v1398 = vsel %vm1141, 1, 0
      %v1399 = vsel %vm1142, 1, 0
      %v1400 = vsel %vm1143, 1, 0
      %v1401 = vsel %vm1144, 1, 0
      %v1402 = vsel %vm1145, 1, 0
      %v1403 = vsel %vm1146, 1, 0
      %v1404 = vsel %vm1147, 1, 0
      %v1405 = vsel %vm1148, 1, 0
      %v1406 = vsel %vm1149, 1, 0
      %v1407 = vsel %vm1150, 1, 0
      %v1408 = vsel %vm1151, 1, 0
      %v1409 = vsel %vm1152, 1, 0
      %v1410 = vsel %vm1153, 1, 0
      %v1411 = vsel %vm1154, 1, 0
      %v1412 = vsel %vm1155, 1, 0
      %v1413 = vsel %vm1156, 1, 0
      %v1414 = vsel %vm1157, 1, 0
      %v1415 = vsel %vm1158, 1, 0
      %v1416 = vsel %vm1159, 1, 0
      %v1417 = vsel %vm1160, 1, 0
      %v1418 = vsel %vm1161, 1, 0
      %v1419 = vsel %vm1162, 1, 0
      %v1420 = vsel %vm1163, 1, 0
      %v1421 = vsel %vm1164, 1, 0
      %v1422 = vsel %vm1165, 1, 0
      %v1423 = vsel %vm1166, 1, 0
      %v1424 = vsel %vm1167, 1, 0
      %v1425 = vsel %vm1168, 1, 0
      %v1426 = vsel %vm1169, 1, 0
      %v1427 = vsel %vm1170, 1, 0
      %v1428 = vsel %vm1171, 1, 0
      %v1429 = vsel %vm1172, 1, 0
      %v1430 = vsel %vm1173, 1, 0
      %v1431 = vsel %vm1174, 1, 0
      %v1432 = vsel %vm1175, 1, 0
      %v1433 = vsel %vm1176, 1, 0
      %v1434 = vsel %vm1177, 1, 0
      %v1435 = vsel %vm1178, 1, 0
      %v1436 = vsel %vm1179, 1, 0
      %v1437 = vsel %vm1180, 1, 0
      %v1438 = vsel %vm1181, 1, 0
      %v1439 = vsel %vm1182, 1, 0
      %v1440 = vsel %vm1183, 1, 0
      %v1441 = vsel %vm1184, 1, 0
      %v1442 = vsel %vm1185, 1, 0
      %v1443 = vsel %vm1186, 1, 0
      %v1444 = vcvt.s32.f32 %v1188
      %v1445 = vcvt.s32.f32 %v1189
      %v1446 = vcvt.s32.f32 %v1190
      %v1447 = vcvt.s32.f32 %v1191
      %v1448 = vcvt.s32.f32 %v1192
      %v1449 = vcvt.s32.f32 %v1193
      %v1450 = vcvt.s32.f32 %v1194
      %v1451 = vcvt.s32.f32 %v1195
      %v1452 = vcvt.s32.f32 %v1196
      %v1453 = vcvt.s32.f32 %v1197
      %v1454 = vcvt.s32.f32 %v1198
      %v1455 = vcvt.s32.f32 %v1199
      %v1456 = vcvt.s32.f32 %v1200
      %v1457 = vcvt.s32.f32 %v1201
      %v1458 = vcvt.s32.f32 %v1202
      %v1459 = vcvt.s32.f32 %v1203
      %v1460 = vcvt.s32.f32 %v1204
      %v1461 = vcvt.s32.f32 %v1205
      %v1462 = vcvt.s32.f32 %v1206
      %v1463 = vcvt.s32.f32 %v1207
      %v1464 = vcvt.s32.f32 %v1208
      %v1465 = vcvt.s32.f32 %v1209
      %v1466 = vcvt.s32.f32 %v1210
      %v1467 = vcvt.s32.f32 %v1211
      %v1468 = vcvt.s32.f32 %v1212
      %v1469 = vcvt.s32.f32 %v1213
      %v1470 = vcvt.s32.f32 %v1214
      %v1471 = vcvt.s32.f32 %v1215
      %v1472 = vcvt.s32.f32 %v1216
      %v1473 = vcvt.s32.f32 %v1217
      %v1474 = vcvt.s32.f32 %v1218
      %v1475 = vcvt.s32.f32 %v1219
      %v1476 = vcvt.s32.f32 %v1220
      %v1477 = vcvt.s32.f32 %v1221
      %v1478 = vcvt.s32.f32 %v1222
      %v1479 = vcvt.s32.f32 %v1223
      %v1480 = vcvt.s32.f32 %v1224
      %v1481 = vcvt.s32.f32 %v1225
      %v1482 = vcvt.s32.f32 %v1226
      %v1483 = vcvt.s32.f32 %v1227
      %v1484 = vcvt.s32.f32 %v1228
      %v1485 = vcvt.s32.f32 %v1229
      %v1486 = vcvt.s32.f32 %v1230
      %v1487 = vcvt.s32.f32 %v1231
      %v1488 = vcvt.s32.f32 %v1232
      %v1489 = vcvt.s32.f32 %v1233
      %v1490 = vcvt.s32.f32 %v1234
      %v1491 = vcvt.s32.f32 %v1235
      %v1492 = vcvt.s32.f32 %v1236
      %v1493 = vcvt.s32.f32 %v1237
      %v1494 = vcvt.s32.f32 %v1238
      %v1495 = vcvt.s32.f32 %v1239
      %v1496 = vcvt.s32.f32 %v1240
      %v1497 = vcvt.s32.f32 %v1241
      %v1498 = vcvt.s32.f32 %v1242
      %v1499 = vcvt.s32.f32 %v1243
      %v1500 = vcvt.s32.f32 %v1244
      %v1501 = vcvt.s32.f32 %v1245
      %v1502 = vcvt.s32.f32 %v1246
      %v1503 = vcvt.s32.f32 %v1247
      %v1504 = vcvt.s32.f32 %v1248
      %v1505 = vcvt.s32.f32 %v1249
      %v1506 = vcvt.s32.f32 %v1250
      %v1507 = vcvt.s32.f32 %v1251
      %v1508 = vcvt.s32.f32 %v1252
      %v1509 = vcvt.s32.f32 %v1253
      %v1510 = vcvt.s32.f32 %v1254
      %v1511 = vcvt.s32.f32 %v1255
      %v1512 = vcvt.s32.f32 %v1256
      %v1513 = vcvt.s32.f32 %v1257
      %v1514 = vcvt.s32.f32 %v1258
      %v1515 = vcvt.s32.f32 %v1259
      %v1516 = vcvt.s32.f32 %v1260
      %v1517 = vcvt.s32.f32 %v1261
      %v1518 = vcvt.s32.f32 %v1262
      %v1519 = vcvt.s32.f32 %v1263
      %v1520 = vcvt.s32.f32 %v1264
      %v1521 = vcvt.s32.f32 %v1265
      %v1522 = vcvt.s32.f32 %v1266
      %v1523 = vcvt.s32.f32 %v1267
      %v1524 = vcvt.s32.f32 %v1268
      %v1525 = vcvt.s32.f32 %v1269
      %v1526 = vcvt.s32.f32 %v1270
      %v1527 = vcvt.s32.f32 %v1271
      %v1528 = vcvt.s32.f32 %v1272
      %v1529 = vcvt.s32.f32 %v1273
      %v1530 = vcvt.s32.f32 %v1274
      %v1531 = vcvt.s32.f32 %v1275
      %v1532 = vcvt.s32.f32 %v1276
      %v1533 = vcvt.s32.f32 %v1277
      %v1534 = vcvt.s32.f32 %v1278
      %v1535 = vcvt.s32.f32 %v1279
      %v1536 = vcvt.s32.f32 %v1280
      %v1537 = vcvt.s32.f32 %v1281
      %v1538 = vcvt.s32.f32 %v1282
      %v1539 = vcvt.s32.f32 %v1283
      %v1540 = vcvt.s32.f32 %v1284
      %v1541 = vcvt.s32.f32 %v1285
      %v1542 = vcvt.s32.f32 %v1286
      %v1543 = vcvt.s32.f32 %v1287
      %v1544 = vcvt.s32.f32 %v1288
      %v1545 = vcvt.s32.f32 %v1289
      %v1546 = vcvt.s32.f32 %v1290
      %v1547 = vcvt.s32.f32 %v1291
      %v1548 = vcvt.s32.f32 %v1292
      %v1549 = vcvt.s32.f32 %v1293
      %v1550 = vcvt.s32.f32 %v1294
      %v1551 = vcvt.s32.f32 %v1295
      %v1552 = vcvt.s32.f32 %v1296
      %v1553 = vcvt.s32.f32 %v1297
      %v1554 = vcvt.s32.f32 %v1298
      %v1555 = vcvt.s32.f32 %v1299
      %v1556 = vcvt.s32.f32 %v1300
      %v1557 = vcvt.s32.f32 %v1301
      %v1558 = vcvt.s32.f32 %v1302
      %v1559 = vcvt.s32.f32 %v1303
      %v1560 = vcvt.s32.f32 %v1304
      %v1561 = vcvt.s32.f32 %v1305
      %v1562 = vcvt.s32.f32 %v1306
      %v1563 = vcvt.s32.f32 %v1307
      %v1564 = vcvt.s32.f32 %v1308
      %v1565 = vcvt.s32.f32 %v1309
      %v1566 = vcvt.s32.f32 %v1310
      %v1567 = vcvt.s32.f32 %v1311
      %v1568 = vcvt.s32.f32 %v1312
      %v1569 = vcvt.s32.f32 %v1313
      %v1570 = vcvt.s32.f32 %v1314
      %v1571 = vcvt.s32.f32 %v1315
      %v1572 = vcvt.s32.f32 %v1316
      %v1573 = vcvt.s32.f32 %v1317
      %v1574 = vcvt.s32.f32 %v1318
      %v1575 = vcvt.s32.f32 %v1319
      %v1576 = vcvt.s32.f32 %v1320
      %v1577 = vcvt.s32.f32 %v1321
      %v1578 = vcvt.s32.f32 %v1322
      %v1579 = vcvt.s32.f32 %v1323
      %v1580 = vcvt.s32.f32 %v1324
      %v1581 = vcvt.s32.f32 %v1325
      %v1582 = vcvt.s32.f32 %v1326
      %v1583 = vcvt.s32.f32 %v1327
      %v1584 = vcvt.s32.f32 %v1328
      %v1585 = vcvt.s32.f32 %v1329
      %v1586 = vcvt.s32.f32 %v1330
      %v1587 = vcvt.s32.f32 %v1331
      %v1588 = vcvt.s32.f32 %v1332
      %v1589 = vcvt.s32.f32 %v1333
      %v1590 = vcvt.s32.f32 %v1334
      %v1591 = vcvt.s32.f32 %v1335
      %v1592 = vcvt.s32.f32 %v1336
      %v1593 = vcvt.s32.f32 %v1337
      %v1594 = vcvt.s32.f32 %v1338
      %v1595 = vcvt.s32.f32 %v1339
      %v1596 = vcvt.s32.f32 %v1340
      %v1597 = vcvt.s32.f32 %v1341
      %v1598 = vcvt.s32.f32 %v1342
      %v1599 = vcvt.s32.f32 %v1343
      %v1600 = vcvt.s32.f32 %v1344
      %v1601 = vcvt.s32.f32 %v1345
      %v1602 = vcvt.s32.f32 %v1346
      %v1603 = vcvt.s32.f32 %v1347
      %v1604 = vcvt.s32.f32 %v1348
      %v1605 = vcvt.s32.f32 %v1349
      %v1606 = vcvt.s32.f32 %v1350
      %v1607 = vcvt.s32.f32 %v1351
      %v1608 = vcvt.s32.f32 %v1352
      %v1609 = vcvt.s32.f32 %v1353
      %v1610 = vcvt.s32.f32 %v1354
      %v1611 = vcvt.s32.f32 %v1355
      %v1612 = vcvt.s32.f32 %v1356
      %v1613 = vcvt.s32.f32 %v1357
      %v1614 = vcvt.s32.f32 %v1358
      %v1615 = vcvt.s32.f32 %v1359
      %v1616 = vcvt.s32.f32 %v1360
      %v1617 = vcvt.s32.f32 %v1361
      %v1618 = vcvt.s32.f32 %v1362
      %v1619 = vcvt.s32.f32 %v1363
      %v1620 = vcvt.s32.f32 %v1364
      %v1621 = vcvt.s32.f32 %v1365
      %v1622 = vcvt.s32.f32 %v1366
      %v1623 = vcvt.s32.f32 %v1367
      %v1624 = vcvt.s32.f32 %v1368
      %v1625 = vcvt.s32.f32 %v1369
      %v1626 = vcvt.s32.f32 %v1370
      %v1627 = vcvt.s32.f32 %v1371
      %v1628 = vcvt.s32.f32 %v1372
      %v1629 = vcvt.s32.f32 %v1373
      %v1630 = vcvt.s32.f32 %v1374
      %v1631 = vcvt.s32.f32 %v1375
      %v1632 = vcvt.s32.f32 %v1376
      %v1633 = vcvt.s32.f32 %v1377
      %v1634 = vcvt.s32.f32 %v1378
      %v1635 = vcvt.s32.f32 %v1379
      %v1636 = vcvt.s32.f32 %v1380
      %v1637 = vcvt.s32.f32 %v1381
      %v1638 = vcvt.s32.f32 %v1382
      %v1639 = vcvt.s32.f32 %v1383
      %v1640 = vcvt.s32.f32 %v1384
      %v1641 = vcvt.s32.f32 %v1385
      %v1642 = vcvt.s32.f32 %v1386
      %v1643 = vcvt.s32.f32 %v1387
      %v1644 = vcvt.s32.f32 %v1388
      %v1645 = vcvt.s32.f32 %v1389
      %v1646 = vcvt.s32.f32 %v1390
      %v1647 = vcvt.s32.f32 %v1391
      %v1648 = vcvt.s32.f32 %v1392
      %v1649 = vcvt.s32.f32 %v1393
      %v1650 = vcvt.s32.f32 %v1394
      %v1651 = vcvt.s32.f32 %v1395
      %v1652 = vcvt.s32.f32 %v1396
      %v1653 = vcvt.s32.f32 %v1397
      %v1654 = vcvt.s32.f32 %v1398
      %v1655 = vcvt.s32.f32 %v1399
      %v1656 = vcvt.s32.f32 %v1400
      %v1657 = vcvt.s32.f32 %v1401
      %v1658 = vcvt.s32.f32 %v1402
      %v1659 = vcvt.s32.f32 %v1403
      %v1660 = vcvt.s32.f32 %v1404
      %v1661 = vcvt.s32.f32 %v1405
      %v1662 = vcvt.s32.f32 %v1406
      %v1663 = vcvt.s32.f32 %v1407
      %v1664 = vcvt.s32.f32 %v1408
      %v1665 = vcvt.s32.f32 %v1409
      %v1666 = vcvt.s32.f32 %v1410
      %v1667 = vcvt.s32.f32 %v1411
      %v1668 = vcvt.s32.f32 %v1412
      %v1669 = vcvt.s32.f32 %v1413
      %v1670 = vcvt.s32.f32 %v1414
      %v1671 = vcvt.s32.f32 %v1415
      %v1672 = vcvt.s32.f32 %v1416
      %v1673 = vcvt.s32.f32 %v1417
      %v1674 = vcvt.s32.f32 %v1418
      %v1675 = vcvt.s32.f32 %v1419
      %v1676 = vcvt.s32.f32 %v1420
      %v1677 = vcvt.s32.f32 %v1421
      %v1678 = vcvt.s32.f32 %v1422
      %v1679 = vcvt.s32.f32 %v1423
      %v1680 = vcvt.s32.f32 %v1424
      %v1681 = vcvt.s32.f32 %v1425
      %v1682 = vcvt.s32.f32 %v1426
      %v1683 = vcvt.s32.f32 %v1427
      %v1684 = vcvt.s32.f32 %v1428
      %v1685 = vcvt.s32.f32 %v1429
      %v1686 = vcvt.s32.f32 %v1430
      %v1687 = vcvt.s32.f32 %v1431
      %v1688 = vcvt.s32.f32 %v1432
      %v1689 = vcvt.s32.f32 %v1433
      %v1690 = vcvt.s32.f32 %v1434
      %v1691 = vcvt.s32.f32 %v1435
      %v1692 = vcvt.s32.f32 %v1436
      %v1693 = vcvt.s32.f32 %v1437
      %v1694 = vcvt.s32.f32 %v1438
      %v1695 = vcvt.s32.f32 %v1439
      %v1696 = vcvt.s32.f32 %v1440
      %v1697 = vcvt.s32.f32 %v1441
      %v1698 = vcvt.s32.f32 %v1442
      %v1699 = vcvt.s32.f32 %v1443
      %v1700 = vpack.c.bf16 %v1446, %v1444
      %v1701 = vpack.c.bf16 %v1447, %v1445
      %v1702 = vpack.c.bf16 %v1450, %v1448
      %v1703 = vpack.c.bf16 %v1451, %v1449
      %v1704 = vpack.c.bf16 %v1454, %v1452
      %v1705 = vpack.c.bf16 %v1455, %v1453
      %v1706 = vpack.c.bf16 %v1458, %v1456
      %v1707 = vpack.c.bf16 %v1459, %v1457
      %v1708 = vpack.c.bf16 %v1462, %v1460
      %v1709 = vpack.c.bf16 %v1463, %v1461
      %v1710 = vpack.c.bf16 %v1466, %v1464
      %v1711 = vpack.c.bf16 %v1467, %v1465
      %v1712 = vpack.c.bf16 %v1470, %v1468
      %v1713 = vpack.c.bf16 %v1471, %v1469
      %v1714 = vpack.c.bf16 %v1474, %v1472
      %v1715 = vpack.c.bf16 %v1475, %v1473
      %v1716 = vpack.c.bf16 %v1478, %v1476
      %v1717 = vpack.c.bf16 %v1479, %v1477
      %v1718 = vpack.c.bf16 %v1482, %v1480
      %v1719 = vpack.c.bf16 %v1483, %v1481
      %v1720 = vpack.c.bf16 %v1486, %v1484
      %v1721 = vpack.c.bf16 %v1487, %v1485
      %v1722 = vpack.c.bf16 %v1490, %v1488
      %v1723 = vpack.c.bf16 %v1491, %v1489
      %v1724 = vpack.c.bf16 %v1494, %v1492
      %v1725 = vpack.c.bf16 %v1495, %v1493
      %v1726 = vpack.c.bf16 %v1498, %v1496
      %v1727 = vpack.c.bf16 %v1499, %v1497
      %v1728 = vpack.c.bf16 %v1502, %v1500
      %v1729 = vpack.c.bf16 %v1503, %v1501
      %v1730 = vpack.c.bf16 %v1506, %v1504
      %v1731 = vpack.c.bf16 %v1507, %v1505
      %v1732 = vpack.c.bf16 %v1510, %v1508
      %v1733 = vpack.c.bf16 %v1511, %v1509
      %v1734 = vpack.c.bf16 %v1514, %v1512
      %v1735 = vpack.c.bf16 %v1515, %v1513
      %v1736 = vpack.c.bf16 %v1518, %v1516
      %v1737 = vpack.c.bf16 %v1519, %v1517
      %v1738 = vpack.c.bf16 %v1522, %v1520
      %v1739 = vpack.c.bf16 %v1523, %v1521
      %v1740 = vpack.c.bf16 %v1526, %v1524
      %v1741 = vpack.c.bf16 %v1527, %v1525
      %v1742 = vpack.c.bf16 %v1530, %v1528
      %v1743 = vpack.c.bf16 %v1531, %v1529
      %v1744 = vpack.c.bf16 %v1534, %v1532
      %v1745 = vpack.c.bf16 %v1535, %v1533
      %v1746 = vpack.c.bf16 %v1538, %v1536
      %v1747 = vpack.c.bf16 %v1539, %v1537
      %v1748 = vpack.c.bf16 %v1542, %v1540
      %v1749 = vpack.c.bf16 %v1543, %v1541
      %v1750 = vpack.c.bf16 %v1546, %v1544
      %v1751 = vpack.c.bf16 %v1547, %v1545
      %v1752 = vpack.c.bf16 %v1550, %v1548
      %v1753 = vpack.c.bf16 %v1551, %v1549
      %v1754 = vpack.c.bf16 %v1554, %v1552
      %v1755 = vpack.c.bf16 %v1555, %v1553
      %v1756 = vpack.c.bf16 %v1558, %v1556
      %v1757 = vpack.c.bf16 %v1559, %v1557
      %v1758 = vpack.c.bf16 %v1562, %v1560
      %v1759 = vpack.c.bf16 %v1563, %v1561
      %v1760 = vpack.c.bf16 %v1566, %v1564
      %v1761 = vpack.c.bf16 %v1567, %v1565
      %v1762 = vpack.c.bf16 %v1570, %v1568
      %v1763 = vpack.c.bf16 %v1571, %v1569
      %v1764 = vpack.c.bf16 %v1574, %v1572
      %v1765 = vpack.c.bf16 %v1575, %v1573
      %v1766 = vpack.c.bf16 %v1578, %v1576
      %v1767 = vpack.c.bf16 %v1579, %v1577
      %v1768 = vpack.c.bf16 %v1582, %v1580
      %v1769 = vpack.c.bf16 %v1583, %v1581
      %v1770 = vpack.c.bf16 %v1586, %v1584
      %v1771 = vpack.c.bf16 %v1587, %v1585
      %v1772 = vpack.c.bf16 %v1590, %v1588
      %v1773 = vpack.c.bf16 %v1591, %v1589
      %v1774 = vpack.c.bf16 %v1594, %v1592
      %v1775 = vpack.c.bf16 %v1595, %v1593
      %v1776 = vpack.c.bf16 %v1598, %v1596
      %v1777 = vpack.c.bf16 %v1599, %v1597
      %v1778 = vpack.c.bf16 %v1602, %v1600
      %v1779 = vpack.c.bf16 %v1603, %v1601
      %v1780 = vpack.c.bf16 %v1606, %v1604
      %v1781 = vpack.c.bf16 %v1607, %v1605
      %v1782 = vpack.c.bf16 %v1610, %v1608
      %v1783 = vpack.c.bf16 %v1611, %v1609
      %v1784 = vpack.c.bf16 %v1614, %v1612
      %v1785 = vpack.c.bf16 %v1615, %v1613
      %v1786 = vpack.c.bf16 %v1618, %v1616
      %v1787 = vpack.c.bf16 %v1619, %v1617
      %v1788 = vpack.c.bf16 %v1622, %v1620
      %v1789 = vpack.c.bf16 %v1623, %v1621
      %v1790 = vpack.c.bf16 %v1626, %v1624
      %v1791 = vpack.c.bf16 %v1627, %v1625
      %v1792 = vpack.c.bf16 %v1630, %v1628
      %v1793 = vpack.c.bf16 %v1631, %v1629
      %v1794 = vpack.c.bf16 %v1634, %v1632
      %v1795 = vpack.c.bf16 %v1635, %v1633
      %v1796 = vpack.c.bf16 %v1638, %v1636
      %v1797 = vpack.c.bf16 %v1639, %v1637
      %v1798 = vpack.c.bf16 %v1642, %v1640
      %v1799 = vpack.c.bf16 %v1643, %v1641
      %v1800 = vpack.c.bf16 %v1646, %v1644
      %v1801 = vpack.c.bf16 %v1647, %v1645
      %v1802 = vpack.c.bf16 %v1650, %v1648
      %v1803 = vpack.c.bf16 %v1651, %v1649
      %v1804 = vpack.c.bf16 %v1654, %v1652
      %v1805 = vpack.c.bf16 %v1655, %v1653
      %v1806 = vpack.c.bf16 %v1658, %v1656
      %v1807 = vpack.c.bf16 %v1659, %v1657
      %v1808 = vpack.c.bf16 %v1662, %v1660
      %v1809 = vpack.c.bf16 %v1663, %v1661
      %v1810 = vpack.c.bf16 %v1666, %v1664
      %v1811 = vpack.c.bf16 %v1667, %v1665
      %v1812 = vpack.c.bf16 %v1670, %v1668
      %v1813 = vpack.c.bf16 %v1671, %v1669
      %v1814 = vpack.c.bf16 %v1674, %v1672
      %v1815 = vpack.c.bf16 %v1675, %v1673
      %v1816 = vpack.c.bf16 %v1678, %v1676
      %v1817 = vpack.c.bf16 %v1679, %v1677
      %v1818 = vpack.c.bf16 %v1682, %v1680
      %v1819 = vpack.c.bf16 %v1683, %v1681
      %v1820 = vpack.c.bf16 %v1686, %v1684
      %v1821 = vpack.c.bf16 %v1687, %v1685
      %v1822 = vpack.c.bf16 %v1690, %v1688
      %v1823 = vpack.c.bf16 %v1691, %v1689
      %v1824 = vpack.c.bf16 %v1694, %v1692
      %v1825 = vpack.c.bf16 %v1695, %v1693
      %v1826 = vpack.c.bf16 %v1698, %v1696
      %v1827 = vpack.c.bf16 %v1699, %v1697
      %1828 = vmatprep.subr.bf16.mxu0 %v1701
      %1829 = vmatpush1.bf16.msra.mxu0 %v1700
      %1830 = vmatprep.subr.bf16.mxu0 %v1703
      %1831 = vmatpush1.bf16.msra.mxu0 %v1702
      %1832 = vmatprep.subr.bf16.mxu0 %v1705
      %1833 = vmatpush1.bf16.msra.mxu0 %v1704
      %1834 = vmatprep.subr.bf16.mxu0 %v1707
      %1835 = vmatpush1.bf16.msra.mxu0 %v1706
      %1836 = vmatprep.subr.bf16.mxu0 %v1709
      %1837 = vmatpush1.bf16.msra.mxu0 %v1708
      %1838 = vmatprep.subr.bf16.mxu0 %v1711
      %1839 = vmatpush1.bf16.msra.mxu0 %v1710
      %1840 = vmatprep.subr.bf16.mxu0 %v1713
      %1841 = vmatpush1.bf16.msra.mxu0 %v1712
      %1842 = vmatprep.subr.bf16.mxu0 %v1715
      %1843 = vmatpush1.bf16.msra.mxu0 %v1714
      %1844 = vmatprep.subr.bf16.mxu0 %v1717
      %1845 = vmatpush1.bf16.msra.mxu0 %v1716
      %1846 = vmatprep.subr.bf16.mxu0 %v1719
      %1847 = vmatpush1.bf16.msra.mxu0 %v1718
      %1848 = vmatprep.subr.bf16.mxu0 %v1721
      %1849 = vmatpush1.bf16.msra.mxu0 %v1720
      %1850 = vmatprep.subr.bf16.mxu0 %v1723
      %1851 = vmatpush1.bf16.msra.mxu0 %v1722
      %1852 = vmatprep.subr.bf16.mxu0 %v1725
      %1853 = vmatpush1.bf16.msra.mxu0 %v1724
      %1854 = vmatprep.subr.bf16.mxu0 %v1727
      %1855 = vmatpush1.bf16.msra.mxu0 %v1726
      %1856 = vmatprep.subr.bf16.mxu0 %v1729
      %1857 = vmatpush1.bf16.msra.mxu0 %v1728
      %1858 = vmatprep.subr.bf16.mxu0 %v1731
      %1859 = vmatpush1.bf16.msra.mxu0 %v1730
      %1860 = vmatprep.mubr.bf16.mxu0 1065369472
      %1861 = vmatmul.mubr.bf16.gmra.mrb[0].mxu0 1065369472
      %v1862 = vpop.f32.mrb[0].mxu0
      %v1863 = vadd.f32 0.0, %v1862
      %v1864 = vpop.f32.mrb[0].mxu0
      %v1865 = vadd.f32 0.0, %v1864
      %v1866 = vpop.f32.mrb[0].mxu0
      %v1867 = vpop.f32.mrb[0].mxu0
      %1868 = vdwg.mxu0
      %1869 = vmatprep.subr.bf16.mxu0 %v1733
      %1870 = vmatpush1.bf16.msra.mxu0 %v1732
      %1871 = vmatprep.subr.bf16.mxu0 %v1735
      %1872 = vmatpush1.bf16.msra.mxu0 %v1734
      %1873 = vmatprep.subr.bf16.mxu0 %v1737
      %1874 = vmatpush1.bf16.msra.mxu0 %v1736
      %1875 = vmatprep.subr.bf16.mxu0 %v1739
      %1876 = vmatpush1.bf16.msra.mxu0 %v1738
      %1877 = vmatprep.subr.bf16.mxu0 %v1741
      %1878 = vmatpush1.bf16.msra.mxu0 %v1740
      %1879 = vmatprep.subr.bf16.mxu0 %v1743
      %1880 = vmatpush1.bf16.msra.mxu0 %v1742
      %1881 = vmatprep.subr.bf16.mxu0 %v1745
      %1882 = vmatpush1.bf16.msra.mxu0 %v1744
      %1883 = vmatprep.subr.bf16.mxu0 %v1747
      %1884 = vmatpush1.bf16.msra.mxu0 %v1746
      %1885 = vmatprep.subr.bf16.mxu0 %v1749
      %1886 = vmatpush1.bf16.msra.mxu0 %v1748
      %1887 = vmatprep.subr.bf16.mxu0 %v1751
      %1888 = vmatpush1.bf16.msra.mxu0 %v1750
      %1889 = vmatprep.subr.bf16.mxu0 %v1753
      %1890 = vmatpush1.bf16.msra.mxu0 %v1752
      %1891 = vmatprep.subr.bf16.mxu0 %v1755
      %1892 = vmatpush1.bf16.msra.mxu0 %v1754
      %1893 = vmatprep.subr.bf16.mxu0 %v1757
      %1894 = vmatpush1.bf16.msra.mxu0 %v1756
      %1895 = vmatprep.subr.bf16.mxu0 %v1759
      %1896 = vmatpush1.bf16.msra.mxu0 %v1758
      %1897 = vmatprep.subr.bf16.mxu0 %v1761
      %1898 = vmatpush1.bf16.msra.mxu0 %v1760
      %1899 = vmatprep.subr.bf16.mxu0 %v1763
      %1900 = vmatpush1.bf16.msra.mxu0 %v1762
      %1901 = vmatprep.mubr.bf16.mxu0 1065369472
      %1902 = vmatmul.mubr.bf16.gmra.mrb[0].mxu0 1065369472
      %v1903 = vpop.f32.mrb[0].mxu0
      %v1904 = vadd.f32 %v1863, %v1903
      %v1905 = vpop.f32.mrb[0].mxu0
      %v1906 = vadd.f32 %v1865, %v1905
      %v1907 = vpop.f32.mrb[0].mxu0
      %v1908 = vpop.f32.mrb[0].mxu0
      %1909 = vdwg.mxu0
      %1910 = vmatprep.subr.bf16.mxu0 %v1765
      %1911 = vmatpush1.bf16.msra.mxu0 %v1764
      %1912 = vmatprep.subr.bf16.mxu0 %v1767
      %1913 = vmatpush1.bf16.msra.mxu0 %v1766
      %1914 = vmatprep.subr.bf16.mxu0 %v1769
      %1915 = vmatpush1.bf16.msra.mxu0 %v1768
      %1916 = vmatprep.subr.bf16.mxu0 %v1771
      %1917 = vmatpush1.bf16.msra.mxu0 %v1770
      %1918 = vmatprep.subr.bf16.mxu0 %v1773
      %1919 = vmatpush1.bf16.msra.mxu0 %v1772
      %1920 = vmatprep.subr.bf16.mxu0 %v1775
      %1921 = vmatpush1.bf16.msra.mxu0 %v1774
      %1922 = vmatprep.subr.bf16.mxu0 %v1777
      %1923 = vmatpush1.bf16.msra.mxu0 %v1776
      %1924 = vmatprep.subr.bf16.mxu0 %v1779
      %1925 = vmatpush1.bf16.msra.mxu0 %v1778
      %1926 = vmatprep.subr.bf16.mxu0 %v1781
      %1927 = vmatpush1.bf16.msra.mxu0 %v1780
      %1928 = vmatprep.subr.bf16.mxu0 %v1783
      %1929 = vmatpush1.bf16.msra.mxu0 %v1782
      %1930 = vmatprep.subr.bf16.mxu0 %v1785
      %1931 = vmatpush1.bf16.msra.mxu0 %v1784
      %1932 = vmatprep.subr.bf16.mxu0 %v1787
      %1933 = vmatpush1.bf16.msra.mxu0 %v1786
      %1934 = vmatprep.subr.bf16.mxu0 %v1789
      %1935 = vmatpush1.bf16.msra.mxu0 %v1788
      %1936 = vmatprep.subr.bf16.mxu0 %v1791
      %1937 = vmatpush1.bf16.msra.mxu0 %v1790
      %1938 = vmatprep.subr.bf16.mxu0 %v1793
      %1939 = vmatpush1.bf16.msra.mxu0 %v1792
      %1940 = vmatprep.subr.bf16.mxu0 %v1795
      %1941 = vmatpush1.bf16.msra.mxu0 %v1794
      %1942 = vmatprep.mubr.bf16.mxu0 1065369472
      %1943 = vmatmul.mubr.bf16.gmra.mrb[0].mxu0 1065369472
      %v1944 = vpop.f32.mrb[0].mxu0
      %v1945 = vadd.f32 %v1904, %v1944
      %v1946 = vpop.f32.mrb[0].mxu0
      %v1947 = vadd.f32 %v1906, %v1946
      %v1948 = vpop.f32.mrb[0].mxu0
      %v1949 = vpop.f32.mrb[0].mxu0
      %1950 = vdwg.mxu0
      %1951 = vmatprep.subr.bf16.mxu0 %v1797
      %1952 = vmatpush1.bf16.msra.mxu0 %v1796
      %1953 = vmatprep.subr.bf16.mxu0 %v1799
      %1954 = vmatpush1.bf16.msra.mxu0 %v1798
      %1955 = vmatprep.subr.bf16.mxu0 %v1801
      %1956 = vmatpush1.bf16.msra.mxu0 %v1800
      %1957 = vmatprep.subr.bf16.mxu0 %v1803
      %1958 = vmatpush1.bf16.msra.mxu0 %v1802
      %1959 = vmatprep.subr.bf16.mxu0 %v1805
      %1960 = vmatpush1.bf16.msra.mxu0 %v1804
      %1961 = vmatprep.subr.bf16.mxu0 %v1807
      %1962 = vmatpush1.bf16.msra.mxu0 %v1806
      %1963 = vmatprep.subr.bf16.mxu0 %v1809
      %1964 = vmatpush1.bf16.msra.mxu0 %v1808
      %1965 = vmatprep.subr.bf16.mxu0 %v1811
      %1966 = vmatpush1.bf16.msra.mxu0 %v1810
      %1967 = vmatprep.subr.bf16.mxu0 %v1813
      %1968 = vmatpush1.bf16.msra.mxu0 %v1812
      %1969 = vmatprep.subr.bf16.mxu0 %v1815
      %1970 = vmatpush1.bf16.msra.mxu0 %v1814
      %1971 = vmatprep.subr.bf16.mxu0 %v1817
      %1972 = vmatpush1.bf16.msra.mxu0 %v1816
      %1973 = vmatprep.subr.bf16.mxu0 %v1819
      %1974 = vmatpush1.bf16.msra.mxu0 %v1818
      %1975 = vmatprep.subr.bf16.mxu0 %v1821
      %1976 = vmatpush1.bf16.msra.mxu0 %v1820
      %1977 = vmatprep.subr.bf16.mxu0 %v1823
      %1978 = vmatpush1.bf16.msra.mxu0 %v1822
      %1979 = vmatprep.subr.bf16.mxu0 %v1825
      %1980 = vmatpush1.bf16.msra.mxu0 %v1824
      %1981 = vmatprep.subr.bf16.mxu0 %v1827
      %1982 = vmatpush1.bf16.msra.mxu0 %v1826
      %1983 = vmatprep.mubr.bf16.mxu0 1065369472
      %1984 = vmatmul.mubr.bf16.gmra.mrb[0].mxu0 1065369472
      %v1985 = vpop.f32.mrb[0].mxu0
      %v1986 = vadd.f32 %v1945, %v1985
      %v1987 = vpop.f32.mrb[0].mxu0
      %v1988 = vadd.f32 %v1947, %v1987
      %v1989 = vpop.f32.mrb[0].mxu0
      %v1990 = vpop.f32.mrb[0].mxu0
      %1991 = vdwg.mxu0
      %v1994 = vcombine.low %v1986, %v1988
      %v1996 = vunpack.c.l.s4 1966171168
      %v1997 = vunpack.c.0.s8 %v1996
      %v1998 = vlaneseq
      %v1999 = vshrl.u32 %v1998, 7
      %v2000 = vsub.s32 %v1997, %v1999
      %v2001 = vrot.slane %v1994, %v2000
      %v2003 = vunpack.c.l.s4 1966171168
      %v2004 = vunpack.c.0.s8 %v2003
      %v2005 = vlaneseq
      %v2006 = vshrl.u32 %v2005, 7
      %v2007 = vsub.s32 %v2004, %v2006
      %v2008 = vrot.slane %v2001, %v2007
      %v2010 = vadd.f32 %v1187, %v2008
      %v2011 = vlaneseq
      %vm2012 = vcmp.ge.s32.totalorder %v2011, 0
      %vm2013 = vcmp.lt.s32.totalorder %v2011, 256
      %vm2014 = vmand %vm2012, %vm2013
      %2015 = vst.msk [vmem:[#allocation2] sm:$0x3] %vm2014, %v2010
      %v2016 = vcvt.s32.f32 %v413
      %v2017 = vcvt.s32.f32 %v414
      %v2018 = vcvt.s32.f32 %v415
      %v2019 = vcvt.s32.f32 %v416
      %v2020 = vcvt.s32.f32 %v417
      %v2021 = vcvt.s32.f32 %v418
      %v2022 = vcvt.s32.f32 %v419
      %v2023 = vcvt.s32.f32 %v420
      %v2024 = vcvt.s32.f32 %v421
      %v2025 = vcvt.s32.f32 %v422
      %v2026 = vcvt.s32.f32 %v423
      %v2027 = vcvt.s32.f32 %v424
      %v2028 = vcvt.s32.f32 %v425
      %v2029 = vcvt.s32.f32 %v426
      %v2030 = vcvt.s32.f32 %v427
      %v2031 = vcvt.s32.f32 %v428
      %v2032 = vcvt.s32.f32 %v429
      %v2033 = vcvt.s32.f32 %v430
      %v2034 = vcvt.s32.f32 %v431
      %v2035 = vcvt.s32.f32 %v432
      %v2036 = vcvt.s32.f32 %v433
      %v2037 = vcvt.s32.f32 %v434
      %v2038 = vcvt.s32.f32 %v435
      %v2039 = vcvt.s32.f32 %v436
      %v2040 = vcvt.s32.f32 %v437
      %v2041 = vcvt.s32.f32 %v438
      %v2042 = vcvt.s32.f32 %v439
      %v2043 = vcvt.s32.f32 %v440
      %v2044 = vcvt.s32.f32 %v441
      %v2045 = vcvt.s32.f32 %v442
      %v2046 = vcvt.s32.f32 %v443
      %v2047 = vcvt.s32.f32 %v444
      %v2048 = vcvt.s32.f32 %v445
      %v2049 = vcvt.s32.f32 %v446
      %v2050 = vcvt.s32.f32 %v447
      %v2051 = vcvt.s32.f32 %v448
      %v2052 = vcvt.s32.f32 %v449
      %v2053 = vcvt.s32.f32 %v450
      %v2054 = vcvt.s32.f32 %v451
      %v2055 = vcvt.s32.f32 %v452
      %v2056 = vcvt.s32.f32 %v453
      %v2057 = vcvt.s32.f32 %v454
      %v2058 = vcvt.s32.f32 %v455
      %v2059 = vcvt.s32.f32 %v456
      %v2060 = vcvt.s32.f32 %v457
      %v2061 = vcvt.s32.f32 %v458
      %v2062 = vcvt.s32.f32 %v459
      %v2063 = vcvt.s32.f32 %v460
      %v2064 = vcvt.s32.f32 %v461
      %v2065 = vcvt.s32.f32 %v462
      %v2066 = vcvt.s32.f32 %v463
      %v2067 = vcvt.s32.f32 %v464
      %v2068 = vcvt.s32.f32 %v465
      %v2069 = vcvt.s32.f32 %v466
      %v2070 = vcvt.s32.f32 %v467
      %v2071 = vcvt.s32.f32 %v468
      %v2072 = vcvt.s32.f32 %v469
      %v2073 = vcvt.s32.f32 %v470
      %v2074 = vcvt.s32.f32 %v471
      %v2075 = vcvt.s32.f32 %v472
      %v2076 = vcvt.s32.f32 %v473
      %v2077 = vcvt.s32.f32 %v474
      %v2078 = vcvt.s32.f32 %v475
      %v2079 = vcvt.s32.f32 %v476
      %v2080 = vcvt.s32.f32 %v477
      %v2081 = vcvt.s32.f32 %v478
      %v2082 = vcvt.s32.f32 %v479
      %v2083 = vcvt.s32.f32 %v480
      %v2084 = vcvt.s32.f32 %v481
      %v2085 = vcvt.s32.f32 %v482
      %v2086 = vcvt.s32.f32 %v483
      %v2087 = vcvt.s32.f32 %v484
      %v2088 = vcvt.s32.f32 %v485
      %v2089 = vcvt.s32.f32 %v486
      %v2090 = vcvt.s32.f32 %v487
      %v2091 = vcvt.s32.f32 %v488
      %v2092 = vcvt.s32.f32 %v489
      %v2093 = vcvt.s32.f32 %v490
      %v2094 = vcvt.s32.f32 %v491
      %v2095 = vcvt.s32.f32 %v492
      %v2096 = vcvt.s32.f32 %v493
      %v2097 = vcvt.s32.f32 %v494
      %v2098 = vcvt.s32.f32 %v495
      %v2099 = vcvt.s32.f32 %v496
      %v2100 = vcvt.s32.f32 %v497
      %v2101 = vcvt.s32.f32 %v498
      %v2102 = vcvt.s32.f32 %v499
      %v2103 = vcvt.s32.f32 %v500
      %v2104 = vcvt.s32.f32 %v501
      %v2105 = vcvt.s32.f32 %v502
      %v2106 = vcvt.s32.f32 %v503
      %v2107 = vcvt.s32.f32 %v504
      %v2108 = vcvt.s32.f32 %v505
      %v2109 = vcvt.s32.f32 %v506
      %v2110 = vcvt.s32.f32 %v507
      %v2111 = vcvt.s32.f32 %v508
      %v2112 = vcvt.s32.f32 %v509
      %v2113 = vcvt.s32.f32 %v510
      %v2114 = vcvt.s32.f32 %v511
      %v2115 = vcvt.s32.f32 %v512
      %v2116 = vcvt.s32.f32 %v513
      %v2117 = vcvt.s32.f32 %v514
      %v2118 = vcvt.s32.f32 %v515
      %v2119 = vcvt.s32.f32 %v516
      %v2120 = vcvt.s32.f32 %v517
      %v2121 = vcvt.s32.f32 %v518
      %v2122 = vcvt.s32.f32 %v519
      %v2123 = vcvt.s32.f32 %v520
      %v2124 = vcvt.s32.f32 %v521
      %v2125 = vcvt.s32.f32 %v522
      %v2126 = vcvt.s32.f32 %v523
      %v2127 = vcvt.s32.f32 %v524
      %v2128 = vcvt.s32.f32 %v525
      %v2129 = vcvt.s32.f32 %v526
      %v2130 = vcvt.s32.f32 %v527
      %v2131 = vcvt.s32.f32 %v528
      %v2132 = vcvt.s32.f32 %v529
      %v2133 = vcvt.s32.f32 %v530
      %v2134 = vcvt.s32.f32 %v531
      %v2135 = vcvt.s32.f32 %v532
      %v2136 = vcvt.s32.f32 %v533
      %v2137 = vcvt.s32.f32 %v534
      %v2138 = vcvt.s32.f32 %v535
      %v2139 = vcvt.s32.f32 %v536
      %v2140 = vcvt.s32.f32 %v537
      %v2141 = vcvt.s32.f32 %v538
      %v2142 = vcvt.s32.f32 %v539
      %v2143 = vcvt.s32.f32 %v540
      %2145 = vset.pattern.permute.xlu0 0
      %2146 = vperm.xlu0 %2145, %v2016
      %v2147 = vpop.permute.xlu0 %2146
      %2150 = vset.pattern.permute.xlu0 0
      %2151 = vperm.xlu0 %2150, %v2017
      %v2152 = vpop.permute.xlu0 %2151
      %2155 = vset.pattern.permute.xlu0 0
      %2156 = vperm.xlu0 %2155, %v2018
      %v2157 = vpop.permute.xlu0 %2156
      %2160 = vset.pattern.permute.xlu0 0
      %2161 = vperm.xlu0 %2160, %v2019
      %v2162 = vpop.permute.xlu0 %2161
      %2165 = vset.pattern.permute.xlu0 0
      %2166 = vperm.xlu0 %2165, %v2020
      %v2167 = vpop.permute.xlu0 %2166
      %2170 = vset.pattern.permute.xlu0 0
      %2171 = vperm.xlu0 %2170, %v2021
      %v2172 = vpop.permute.xlu0 %2171
      %2175 = vset.pattern.permute.xlu0 0
      %2176 = vperm.xlu0 %2175, %v2022
      %v2177 = vpop.permute.xlu0 %2176
      %2180 = vset.pattern.permute.xlu0 0
      %2181 = vperm.xlu0 %2180, %v2023
      %v2182 = vpop.permute.xlu0 %2181
      %2185 = vset.pattern.permute.xlu0 0
      %2186 = vperm.xlu0 %2185, %v2024
      %v2187 = vpop.permute.xlu0 %2186
      %2190 = vset.pattern.permute.xlu0 0
      %2191 = vperm.xlu0 %2190, %v2025
      %v2192 = vpop.permute.xlu0 %2191
      %2195 = vset.pattern.permute.xlu0 0
      %2196 = vperm.xlu0 %2195, %v2026
      %v2197 = vpop.permute.xlu0 %2196
      %2200 = vset.pattern.permute.xlu0 0
      %2201 = vperm.xlu0 %2200, %v2027
      %v2202 = vpop.permute.xlu0 %2201
      %2205 = vset.pattern.permute.xlu0 0
      %2206 = vperm.xlu0 %2205, %v2028
      %v2207 = vpop.permute.xlu0 %2206
      %2210 = vset.pattern.permute.xlu0 0
      %2211 = vperm.xlu0 %2210, %v2029
      %v2212 = vpop.permute.xlu0 %2211
      %2215 = vset.pattern.permute.xlu0 0
      %2216 = vperm.xlu0 %2215, %v2030
      %v2217 = vpop.permute.xlu0 %2216
      %2220 = vset.pattern.permute.xlu0 0
      %2221 = vperm.xlu0 %2220, %v2031
      %v2222 = vpop.permute.xlu0 %2221
      %2225 = vset.pattern.permute.xlu0 0
      %2226 = vperm.xlu0 %2225, %v2032
      %v2227 = vpop.permute.xlu0 %2226
      %2230 = vset.pattern.permute.xlu0 0
      %2231 = vperm.xlu0 %2230, %v2033
      %v2232 = vpop.permute.xlu0 %2231
      %2235 = vset.pattern.permute.xlu0 0
      %2236 = vperm.xlu0 %2235, %v2034
      %v2237 = vpop.permute.xlu0 %2236
      %2240 = vset.pattern.permute.xlu0 0
      %2241 = vperm.xlu0 %2240, %v2035
      %v2242 = vpop.permute.xlu0 %2241
      %2245 = vset.pattern.permute.xlu0 0
      %2246 = vperm.xlu0 %2245, %v2036
      %v2247 = vpop.permute.xlu0 %2246
      %2250 = vset.pattern.permute.xlu0 0
      %2251 = vperm.xlu0 %2250, %v2037
      %v2252 = vpop.permute.xlu0 %2251
      %2255 = vset.pattern.permute.xlu0 0
      %2256 = vperm.xlu0 %2255, %v2038
      %v2257 = vpop.permute.xlu0 %2256
      %2260 = vset.pattern.permute.xlu0 0
      %2261 = vperm.xlu0 %2260, %v2039
      %v2262 = vpop.permute.xlu0 %2261
      %2265 = vset.pattern.permute.xlu0 0
      %2266 = vperm.xlu0 %2265, %v2040
      %v2267 = vpop.permute.xlu0 %2266
      %2270 = vset.pattern.permute.xlu0 0
      %2271 = vperm.xlu0 %2270, %v2041
      %v2272 = vpop.permute.xlu0 %2271
      %2275 = vset.pattern.permute.xlu0 0
      %2276 = vperm.xlu0 %2275, %v2042
      %v2277 = vpop.permute.xlu0 %2276
      %2280 = vset.pattern.permute.xlu0 0
      %2281 = vperm.xlu0 %2280, %v2043
      %v2282 = vpop.permute.xlu0 %2281
      %2285 = vset.pattern.permute.xlu0 0
      %2286 = vperm.xlu0 %2285, %v2044
      %v2287 = vpop.permute.xlu0 %2286
      %2290 = vset.pattern.permute.xlu0 0
      %2291 = vperm.xlu0 %2290, %v2045
      %v2292 = vpop.permute.xlu0 %2291
      %2295 = vset.pattern.permute.xlu0 0
      %2296 = vperm.xlu0 %2295, %v2046
      %v2297 = vpop.permute.xlu0 %2296
      %2300 = vset.pattern.permute.xlu0 0
      %2301 = vperm.xlu0 %2300, %v2047
      %v2302 = vpop.permute.xlu0 %2301
      %2305 = vset.pattern.permute.xlu0 0
      %2306 = vperm.xlu0 %2305, %v2048
      %v2307 = vpop.permute.xlu0 %2306
      %2310 = vset.pattern.permute.xlu0 0
      %2311 = vperm.xlu0 %2310, %v2049
      %v2312 = vpop.permute.xlu0 %2311
      %2315 = vset.pattern.permute.xlu0 0
      %2316 = vperm.xlu0 %2315, %v2050
      %v2317 = vpop.permute.xlu0 %2316
      %2320 = vset.pattern.permute.xlu0 0
      %2321 = vperm.xlu0 %2320, %v2051
      %v2322 = vpop.permute.xlu0 %2321
      %2325 = vset.pattern.permute.xlu0 0
      %2326 = vperm.xlu0 %2325, %v2052
      %v2327 = vpop.permute.xlu0 %2326
      %2330 = vset.pattern.permute.xlu0 0
      %2331 = vperm.xlu0 %2330, %v2053
      %v2332 = vpop.permute.xlu0 %2331
      %2335 = vset.pattern.permute.xlu0 0
      %2336 = vperm.xlu0 %2335, %v2054
      %v2337 = vpop.permute.xlu0 %2336
      %2340 = vset.pattern.permute.xlu0 0
      %2341 = vperm.xlu0 %2340, %v2055
      %v2342 = vpop.permute.xlu0 %2341
      %2345 = vset.pattern.permute.xlu0 0
      %2346 = vperm.xlu0 %2345, %v2056
      %v2347 = vpop.permute.xlu0 %2346
      %2350 = vset.pattern.permute.xlu0 0
      %2351 = vperm.xlu0 %2350, %v2057
      %v2352 = vpop.permute.xlu0 %2351
      %2355 = vset.pattern.permute.xlu0 0
      %2356 = vperm.xlu0 %2355, %v2058
      %v2357 = vpop.permute.xlu0 %2356
      %2360 = vset.pattern.permute.xlu0 0
      %2361 = vperm.xlu0 %2360, %v2059
      %v2362 = vpop.permute.xlu0 %2361
      %2365 = vset.pattern.permute.xlu0 0
      %2366 = vperm.xlu0 %2365, %v2060
      %v2367 = vpop.permute.xlu0 %2366
      %2370 = vset.pattern.permute.xlu0 0
      %2371 = vperm.xlu0 %2370, %v2061
      %v2372 = vpop.permute.xlu0 %2371
      %2375 = vset.pattern.permute.xlu0 0
      %2376 = vperm.xlu0 %2375, %v2062
      %v2377 = vpop.permute.xlu0 %2376
      %2380 = vset.pattern.permute.xlu0 0
      %2381 = vperm.xlu0 %2380, %v2063
      %v2382 = vpop.permute.xlu0 %2381
      %2385 = vset.pattern.permute.xlu0 0
      %2386 = vperm.xlu0 %2385, %v2064
      %v2387 = vpop.permute.xlu0 %2386
      %2390 = vset.pattern.permute.xlu0 0
      %2391 = vperm.xlu0 %2390, %v2065
      %v2392 = vpop.permute.xlu0 %2391
      %2395 = vset.pattern.permute.xlu0 0
      %2396 = vperm.xlu0 %2395, %v2066
      %v2397 = vpop.permute.xlu0 %2396
      %2400 = vset.pattern.permute.xlu0 0
      %2401 = vperm.xlu0 %2400, %v2067
      %v2402 = vpop.permute.xlu0 %2401
      %2405 = vset.pattern.permute.xlu0 0
      %2406 = vperm.xlu0 %2405, %v2068
      %v2407 = vpop.permute.xlu0 %2406
      %2410 = vset.pattern.permute.xlu0 0
      %2411 = vperm.xlu0 %2410, %v2069
      %v2412 = vpop.permute.xlu0 %2411
      %2415 = vset.pattern.permute.xlu0 0
      %2416 = vperm.xlu0 %2415, %v2070
      %v2417 = vpop.permute.xlu0 %2416
      %2420 = vset.pattern.permute.xlu0 0
      %2421 = vperm.xlu0 %2420, %v2071
      %v2422 = vpop.permute.xlu0 %2421
      %2425 = vset.pattern.permute.xlu0 0
      %2426 = vperm.xlu0 %2425, %v2072
      %v2427 = vpop.permute.xlu0 %2426
      %2430 = vset.pattern.permute.xlu0 0
      %2431 = vperm.xlu0 %2430, %v2073
      %v2432 = vpop.permute.xlu0 %2431
      %2435 = vset.pattern.permute.xlu0 0
      %2436 = vperm.xlu0 %2435, %v2074
      %v2437 = vpop.permute.xlu0 %2436
      %2440 = vset.pattern.permute.xlu0 0
      %2441 = vperm.xlu0 %2440, %v2075
      %v2442 = vpop.permute.xlu0 %2441
      %2445 = vset.pattern.permute.xlu0 0
      %2446 = vperm.xlu0 %2445, %v2076
      %v2447 = vpop.permute.xlu0 %2446
      %2450 = vset.pattern.permute.xlu0 0
      %2451 = vperm.xlu0 %2450, %v2077
      %v2452 = vpop.permute.xlu0 %2451
      %2455 = vset.pattern.permute.xlu0 0
      %2456 = vperm.xlu0 %2455, %v2078
      %v2457 = vpop.permute.xlu0 %2456
      %2460 = vset.pattern.permute.xlu0 0
      %2461 = vperm.xlu0 %2460, %v2079
      %v2462 = vpop.permute.xlu0 %2461
      %2465 = vset.pattern.permute.xlu0 0
      %2466 = vperm.xlu0 %2465, %v2080
      %v2467 = vpop.permute.xlu0 %2466
      %2470 = vset.pattern.permute.xlu0 0
      %2471 = vperm.xlu0 %2470, %v2081
      %v2472 = vpop.permute.xlu0 %2471
      %2475 = vset.pattern.permute.xlu0 0
      %2476 = vperm.xlu0 %2475, %v2082
      %v2477 = vpop.permute.xlu0 %2476
      %2480 = vset.pattern.permute.xlu0 0
      %2481 = vperm.xlu0 %2480, %v2083
      %v2482 = vpop.permute.xlu0 %2481
      %2485 = vset.pattern.permute.xlu0 0
      %2486 = vperm.xlu0 %2485, %v2084
      %v2487 = vpop.permute.xlu0 %2486
      %2490 = vset.pattern.permute.xlu0 0
      %2491 = vperm.xlu0 %2490, %v2085
      %v2492 = vpop.permute.xlu0 %2491
      %2495 = vset.pattern.permute.xlu0 0
      %2496 = vperm.xlu0 %2495, %v2086
      %v2497 = vpop.permute.xlu0 %2496
      %2500 = vset.pattern.permute.xlu0 0
      %2501 = vperm.xlu0 %2500, %v2087
      %v2502 = vpop.permute.xlu0 %2501
      %2505 = vset.pattern.permute.xlu0 0
      %2506 = vperm.xlu0 %2505, %v2088
      %v2507 = vpop.permute.xlu0 %2506
      %2510 = vset.pattern.permute.xlu0 0
      %2511 = vperm.xlu0 %2510, %v2089
      %v2512 = vpop.permute.xlu0 %2511
      %2515 = vset.pattern.permute.xlu0 0
      %2516 = vperm.xlu0 %2515, %v2090
      %v2517 = vpop.permute.xlu0 %2516
      %2520 = vset.pattern.permute.xlu0 0
      %2521 = vperm.xlu0 %2520, %v2091
      %v2522 = vpop.permute.xlu0 %2521
      %2525 = vset.pattern.permute.xlu0 0
      %2526 = vperm.xlu0 %2525, %v2092
      %v2527 = vpop.permute.xlu0 %2526
      %2530 = vset.pattern.permute.xlu0 0
      %2531 = vperm.xlu0 %2530, %v2093
      %v2532 = vpop.permute.xlu0 %2531
      %2535 = vset.pattern.permute.xlu0 0
      %2536 = vperm.xlu0 %2535, %v2094
      %v2537 = vpop.permute.xlu0 %2536
      %2540 = vset.pattern.permute.xlu0 0
      %2541 = vperm.xlu0 %2540, %v2095
      %v2542 = vpop.permute.xlu0 %2541
      %2545 = vset.pattern.permute.xlu0 0
      %2546 = vperm.xlu0 %2545, %v2096
      %v2547 = vpop.permute.xlu0 %2546
      %2550 = vset.pattern.permute.xlu0 0
      %2551 = vperm.xlu0 %2550, %v2097
      %v2552 = vpop.permute.xlu0 %2551
      %2555 = vset.pattern.permute.xlu0 0
      %2556 = vperm.xlu0 %2555, %v2098
      %v2557 = vpop.permute.xlu0 %2556
      %2560 = vset.pattern.permute.xlu0 0
      %2561 = vperm.xlu0 %2560, %v2099
      %v2562 = vpop.permute.xlu0 %2561
      %2565 = vset.pattern.permute.xlu0 0
      %2566 = vperm.xlu0 %2565, %v2100
      %v2567 = vpop.permute.xlu0 %2566
      %2570 = vset.pattern.permute.xlu0 0
      %2571 = vperm.xlu0 %2570, %v2101
      %v2572 = vpop.permute.xlu0 %2571
      %2575 = vset.pattern.permute.xlu0 0
      %2576 = vperm.xlu0 %2575, %v2102
      %v2577 = vpop.permute.xlu0 %2576
      %2580 = vset.pattern.permute.xlu0 0
      %2581 = vperm.xlu0 %2580, %v2103
      %v2582 = vpop.permute.xlu0 %2581
      %2585 = vset.pattern.permute.xlu0 0
      %2586 = vperm.xlu0 %2585, %v2104
      %v2587 = vpop.permute.xlu0 %2586
      %2590 = vset.pattern.permute.xlu0 0
      %2591 = vperm.xlu0 %2590, %v2105
      %v2592 = vpop.permute.xlu0 %2591
      %2595 = vset.pattern.permute.xlu0 0
      %2596 = vperm.xlu0 %2595, %v2106
      %v2597 = vpop.permute.xlu0 %2596
      %2600 = vset.pattern.permute.xlu0 0
      %2601 = vperm.xlu0 %2600, %v2107
      %v2602 = vpop.permute.xlu0 %2601
      %2605 = vset.pattern.permute.xlu0 0
      %2606 = vperm.xlu0 %2605, %v2108
      %v2607 = vpop.permute.xlu0 %2606
      %2610 = vset.pattern.permute.xlu0 0
      %2611 = vperm.xlu0 %2610, %v2109
      %v2612 = vpop.permute.xlu0 %2611
      %2615 = vset.pattern.permute.xlu0 0
      %2616 = vperm.xlu0 %2615, %v2110
      %v2617 = vpop.permute.xlu0 %2616
      %2620 = vset.pattern.permute.xlu0 0
      %2621 = vperm.xlu0 %2620, %v2111
      %v2622 = vpop.permute.xlu0 %2621
      %2625 = vset.pattern.permute.xlu0 0
      %2626 = vperm.xlu0 %2625, %v2112
      %v2627 = vpop.permute.xlu0 %2626
      %2630 = vset.pattern.permute.xlu0 0
      %2631 = vperm.xlu0 %2630, %v2113
      %v2632 = vpop.permute.xlu0 %2631
      %2635 = vset.pattern.permute.xlu0 0
      %2636 = vperm.xlu0 %2635, %v2114
      %v2637 = vpop.permute.xlu0 %2636
      %2640 = vset.pattern.permute.xlu0 0
      %2641 = vperm.xlu0 %2640, %v2115
      %v2642 = vpop.permute.xlu0 %2641
      %2645 = vset.pattern.permute.xlu0 0
      %2646 = vperm.xlu0 %2645, %v2116
      %v2647 = vpop.permute.xlu0 %2646
      %2650 = vset.pattern.permute.xlu0 0
      %2651 = vperm.xlu0 %2650, %v2117
      %v2652 = vpop.permute.xlu0 %2651
      %2655 = vset.pattern.permute.xlu0 0
      %2656 = vperm.xlu0 %2655, %v2118
      %v2657 = vpop.permute.xlu0 %2656
      %2660 = vset.pattern.permute.xlu0 0
      %2661 = vperm.xlu0 %2660, %v2119
      %v2662 = vpop.permute.xlu0 %2661
      %2665 = vset.pattern.permute.xlu0 0
      %2666 = vperm.xlu0 %2665, %v2120
      %v2667 = vpop.permute.xlu0 %2666
      %2670 = vset.pattern.permute.xlu0 0
      %2671 = vperm.xlu0 %2670, %v2121
      %v2672 = vpop.permute.xlu0 %2671
      %2675 = vset.pattern.permute.xlu0 0
      %2676 = vperm.xlu0 %2675, %v2122
      %v2677 = vpop.permute.xlu0 %2676
      %2680 = vset.pattern.permute.xlu0 0
      %2681 = vperm.xlu0 %2680, %v2123
      %v2682 = vpop.permute.xlu0 %2681
      %2685 = vset.pattern.permute.xlu0 0
      %2686 = vperm.xlu0 %2685, %v2124
      %v2687 = vpop.permute.xlu0 %2686
      %2690 = vset.pattern.permute.xlu0 0
      %2691 = vperm.xlu0 %2690, %v2125
      %v2692 = vpop.permute.xlu0 %2691
      %2695 = vset.pattern.permute.xlu0 0
      %2696 = vperm.xlu0 %2695, %v2126
      %v2697 = vpop.permute.xlu0 %2696
      %2700 = vset.pattern.permute.xlu0 0
      %2701 = vperm.xlu0 %2700, %v2127
      %v2702 = vpop.permute.xlu0 %2701
      %2705 = vset.pattern.permute.xlu0 0
      %2706 = vperm.xlu0 %2705, %v2128
      %v2707 = vpop.permute.xlu0 %2706
      %2710 = vset.pattern.permute.xlu0 0
      %2711 = vperm.xlu0 %2710, %v2129
      %v2712 = vpop.permute.xlu0 %2711
      %2715 = vset.pattern.permute.xlu0 0
      %2716 = vperm.xlu0 %2715, %v2130
      %v2717 = vpop.permute.xlu0 %2716
      %2720 = vset.pattern.permute.xlu0 0
      %2721 = vperm.xlu0 %2720, %v2131
      %v2722 = vpop.permute.xlu0 %2721
      %2725 = vset.pattern.permute.xlu0 0
      %2726 = vperm.xlu0 %2725, %v2132
      %v2727 = vpop.permute.xlu0 %2726
      %2730 = vset.pattern.permute.xlu0 0
      %2731 = vperm.xlu0 %2730, %v2133
      %v2732 = vpop.permute.xlu0 %2731
      %2735 = vset.pattern.permute.xlu0 0
      %2736 = vperm.xlu0 %2735, %v2134
      %v2737 = vpop.permute.xlu0 %2736
      %2740 = vset.pattern.permute.xlu0 0
      %2741 = vperm.xlu0 %2740, %v2135
      %v2742 = vpop.permute.xlu0 %2741
      %2745 = vset.pattern.permute.xlu0 0
      %2746 = vperm.xlu0 %2745, %v2136
      %v2747 = vpop.permute.xlu0 %2746
      %2750 = vset.pattern.permute.xlu0 0
      %2751 = vperm.xlu0 %2750, %v2137
      %v2752 = vpop.permute.xlu0 %2751
      %2755 = vset.pattern.permute.xlu0 0
      %2756 = vperm.xlu0 %2755, %v2138
      %v2757 = vpop.permute.xlu0 %2756
      %2760 = vset.pattern.permute.xlu0 0
      %2761 = vperm.xlu0 %2760, %v2139
      %v2762 = vpop.permute.xlu0 %2761
      %2765 = vset.pattern.permute.xlu0 0
      %2766 = vperm.xlu0 %2765, %v2140
      %v2767 = vpop.permute.xlu0 %2766
      %2770 = vset.pattern.permute.xlu0 0
      %2771 = vperm.xlu0 %2770, %v2141
      %v2772 = vpop.permute.xlu0 %2771
      %2775 = vset.pattern.permute.xlu0 0
      %2776 = vperm.xlu0 %2775, %v2142
      %v2777 = vpop.permute.xlu0 %2776
      %2780 = vset.pattern.permute.xlu0 0
      %2781 = vperm.xlu0 %2780, %v2143
      %v2782 = vpop.permute.xlu0 %2781
      %v2784 = vmul.f32 %v1444, %v2147
      %v2785 = vmul.f32 %v1445, %v2147
      %v2786 = vmul.f32 %v1446, %v2152
      %v2787 = vmul.f32 %v1447, %v2152
      %v2788 = vmul.f32 %v1448, %v2157
      %v2789 = vmul.f32 %v1449, %v2157
      %v2790 = vmul.f32 %v1450, %v2162
      %v2791 = vmul.f32 %v1451, %v2162
      %v2792 = vmul.f32 %v1452, %v2167
      %v2793 = vmul.f32 %v1453, %v2167
      %v2794 = vmul.f32 %v1454, %v2172
      %v2795 = vmul.f32 %v1455, %v2172
      %v2796 = vmul.f32 %v1456, %v2177
      %v2797 = vmul.f32 %v1457, %v2177
      %v2798 = vmul.f32 %v1458, %v2182
      %v2799 = vmul.f32 %v1459, %v2182
      %v2800 = vmul.f32 %v1460, %v2187
      %v2801 = vmul.f32 %v1461, %v2187
      %v2802 = vmul.f32 %v1462, %v2192
      %v2803 = vmul.f32 %v1463, %v2192
      %v2804 = vmul.f32 %v1464, %v2197
      %v2805 = vmul.f32 %v1465, %v2197
      %v2806 = vmul.f32 %v1466, %v2202
      %v2807 = vmul.f32 %v1467, %v2202
      %v2808 = vmul.f32 %v1468, %v2207
      %v2809 = vmul.f32 %v1469, %v2207
      %v2810 = vmul.f32 %v1470, %v2212
      %v2811 = vmul.f32 %v1471, %v2212
      %v2812 = vmul.f32 %v1472, %v2217
      %v2813 = vmul.f32 %v1473, %v2217
      %v2814 = vmul.f32 %v1474, %v2222
      %v2815 = vmul.f32 %v1475, %v2222
      %v2816 = vmul.f32 %v1476, %v2227
      %v2817 = vmul.f32 %v1477, %v2227
      %v2818 = vmul.f32 %v1478, %v2232
      %v2819 = vmul.f32 %v1479, %v2232
      %v2820 = vmul.f32 %v1480, %v2237
      %v2821 = vmul.f32 %v1481, %v2237
      %v2822 = vmul.f32 %v1482, %v2242
      %v2823 = vmul.f32 %v1483, %v2242
      %v2824 = vmul.f32 %v1484, %v2247
      %v2825 = vmul.f32 %v1485, %v2247
      %v2826 = vmul.f32 %v1486, %v2252
      %v2827 = vmul.f32 %v1487, %v2252
      %v2828 = vmul.f32 %v1488, %v2257
      %v2829 = vmul.f32 %v1489, %v2257
      %v2830 = vmul.f32 %v1490, %v2262
      %v2831 = vmul.f32 %v1491, %v2262
      %v2832 = vmul.f32 %v1492, %v2267
      %v2833 = vmul.f32 %v1493, %v2267
      %v2834 = vmul.f32 %v1494, %v2272
      %v2835 = vmul.f32 %v1495, %v2272
      %v2836 = vmul.f32 %v1496, %v2277
      %v2837 = vmul.f32 %v1497, %v2277
      %v2838 = vmul.f32 %v1498, %v2282
      %v2839 = vmul.f32 %v1499, %v2282
      %v2840 = vmul.f32 %v1500, %v2287
      %v2841 = vmul.f32 %v1501, %v2287
      %v2842 = vmul.f32 %v1502, %v2292
      %v2843 = vmul.f32 %v1503, %v2292
      %v2844 = vmul.f32 %v1504, %v2297
      %v2845 = vmul.f32 %v1505, %v2297
      %v2846 = vmul.f32 %v1506, %v2302
      %v2847 = vmul.f32 %v1507, %v2302
      %v2848 = vmul.f32 %v1508, %v2307
      %v2849 = vmul.f32 %v1509, %v2307
      %v2850 = vmul.f32 %v1510, %v2312
      %v2851 = vmul.f32 %v1511, %v2312
      %v2852 = vmul.f32 %v1512, %v2317
      %v2853 = vmul.f32 %v1513, %v2317
      %v2854 = vmul.f32 %v1514, %v2322
      %v2855 = vmul.f32 %v1515, %v2322
      %v2856 = vmul.f32 %v1516, %v2327
      %v2857 = vmul.f32 %v1517, %v2327
      %v2858 = vmul.f32 %v1518, %v2332
      %v2859 = vmul.f32 %v1519, %v2332
      %v2860 = vmul.f32 %v1520, %v2337
      %v2861 = vmul.f32 %v1521, %v2337
      %v2862 = vmul.f32 %v1522, %v2342
      %v2863 = vmul.f32 %v1523, %v2342
      %v2864 = vmul.f32 %v1524, %v2347
      %v2865 = vmul.f32 %v1525, %v2347
      %v2866 = vmul.f32 %v1526, %v2352
      %v2867 = vmul.f32 %v1527, %v2352
      %v2868 = vmul.f32 %v1528, %v2357
      %v2869 = vmul.f32 %v1529, %v2357
      %v2870 = vmul.f32 %v1530, %v2362
      %v2871 = vmul.f32 %v1531, %v2362
      %v2872 = vmul.f32 %v1532, %v2367
      %v2873 = vmul.f32 %v1533, %v2367
      %v2874 = vmul.f32 %v1534, %v2372
      %v2875 = vmul.f32 %v1535, %v2372
      %v2876 = vmul.f32 %v1536, %v2377
      %v2877 = vmul.f32 %v1537, %v2377
      %v2878 = vmul.f32 %v1538, %v2382
      %v2879 = vmul.f32 %v1539, %v2382
      %v2880 = vmul.f32 %v1540, %v2387
      %v2881 = vmul.f32 %v1541, %v2387
      %v2882 = vmul.f32 %v1542, %v2392
      %v2883 = vmul.f32 %v1543, %v2392
      %v2884 = vmul.f32 %v1544, %v2397
      %v2885 = vmul.f32 %v1545, %v2397
      %v2886 = vmul.f32 %v1546, %v2402
      %v2887 = vmul.f32 %v1547, %v2402
      %v2888 = vmul.f32 %v1548, %v2407
      %v2889 = vmul.f32 %v1549, %v2407
      %v2890 = vmul.f32 %v1550, %v2412
      %v2891 = vmul.f32 %v1551, %v2412
      %v2892 = vmul.f32 %v1552, %v2417
      %v2893 = vmul.f32 %v1553, %v2417
      %v2894 = vmul.f32 %v1554, %v2422
      %v2895 = vmul.f32 %v1555, %v2422
      %v2896 = vmul.f32 %v1556, %v2427
      %v2897 = vmul.f32 %v1557, %v2427
      %v2898 = vmul.f32 %v1558, %v2432
      %v2899 = vmul.f32 %v1559, %v2432
      %v2900 = vmul.f32 %v1560, %v2437
      %v2901 = vmul.f32 %v1561, %v2437
      %v2902 = vmul.f32 %v1562, %v2442
      %v2903 = vmul.f32 %v1563, %v2442
      %v2904 = vmul.f32 %v1564, %v2447
      %v2905 = vmul.f32 %v1565, %v2447
      %v2906 = vmul.f32 %v1566, %v2452
      %v2907 = vmul.f32 %v1567, %v2452
      %v2908 = vmul.f32 %v1568, %v2457
      %v2909 = vmul.f32 %v1569, %v2457
      %v2910 = vmul.f32 %v1570, %v2462
      %v2911 = vmul.f32 %v1571, %v2462
      %v2912 = vmul.f32 %v1572, %v2467
      %v2913 = vmul.f32 %v1573, %v2467
      %v2914 = vmul.f32 %v1574, %v2472
      %v2915 = vmul.f32 %v1575, %v2472
      %v2916 = vmul.f32 %v1576, %v2477
      %v2917 = vmul.f32 %v1577, %v2477
      %v2918 = vmul.f32 %v1578, %v2482
      %v2919 = vmul.f32 %v1579, %v2482
      %v2920 = vmul.f32 %v1580, %v2487
      %v2921 = vmul.f32 %v1581, %v2487
      %v2922 = vmul.f32 %v1582, %v2492
      %v2923 = vmul.f32 %v1583, %v2492
      %v2924 = vmul.f32 %v1584, %v2497
      %v2925 = vmul.f32 %v1585, %v2497
      %v2926 = vmul.f32 %v1586, %v2502
      %v2927 = vmul.f32 %v1587, %v2502
      %v2928 = vmul.f32 %v1588, %v2507
      %v2929 = vmul.f32 %v1589, %v2507
      %v2930 = vmul.f32 %v1590, %v2512
      %v2931 = vmul.f32 %v1591, %v2512
      %v2932 = vmul.f32 %v1592, %v2517
      %v2933 = vmul.f32 %v1593, %v2517
      %v2934 = vmul.f32 %v1594, %v2522
      %v2935 = vmul.f32 %v1595, %v2522
      %v2936 = vmul.f32 %v1596, %v2527
      %v2937 = vmul.f32 %v1597, %v2527
      %v2938 = vmul.f32 %v1598, %v2532
      %v2939 = vmul.f32 %v1599, %v2532
      %v2940 = vmul.f32 %v1600, %v2537
      %v2941 = vmul.f32 %v1601, %v2537
      %v2942 = vmul.f32 %v1602, %v2542
      %v2943 = vmul.f32 %v1603, %v2542
      %v2944 = vmul.f32 %v1604, %v2547
      %v2945 = vmul.f32 %v1605, %v2547
      %v2946 = vmul.f32 %v1606, %v2552
      %v2947 = vmul.f32 %v1607, %v2552
      %v2948 = vmul.f32 %v1608, %v2557
      %v2949 = vmul.f32 %v1609, %v2557
      %v2950 = vmul.f32 %v1610, %v2562
      %v2951 = vmul.f32 %v1611, %v2562
      %v2952 = vmul.f32 %v1612, %v2567
      %v2953 = vmul.f32 %v1613, %v2567
      %v2954 = vmul.f32 %v1614, %v2572
      %v2955 = vmul.f32 %v1615, %v2572
      %v2956 = vmul.f32 %v1616, %v2577
      %v2957 = vmul.f32 %v1617, %v2577
      %v2958 = vmul.f32 %v1618, %v2582
      %v2959 = vmul.f32 %v1619, %v2582
      %v2960 = vmul.f32 %v1620, %v2587
      %v2961 = vmul.f32 %v1621, %v2587
      %v2962 = vmul.f32 %v1622, %v2592
      %v2963 = vmul.f32 %v1623, %v2592
      %v2964 = vmul.f32 %v1624, %v2597
      %v2965 = vmul.f32 %v1625, %v2597
      %v2966 = vmul.f32 %v1626, %v2602
      %v2967 = vmul.f32 %v1627, %v2602
      %v2968 = vmul.f32 %v1628, %v2607
      %v2969 = vmul.f32 %v1629, %v2607
      %v2970 = vmul.f32 %v1630, %v2612
      %v2971 = vmul.f32 %v1631, %v2612
      %v2972 = vmul.f32 %v1632, %v2617
      %v2973 = vmul.f32 %v1633, %v2617
      %v2974 = vmul.f32 %v1634, %v2622
      %v2975 = vmul.f32 %v1635, %v2622
      %v2976 = vmul.f32 %v1636, %v2627
      %v2977 = vmul.f32 %v1637, %v2627
      %v2978 = vmul.f32 %v1638, %v2632
      %v2979 = vmul.f32 %v1639, %v2632
      %v2980 = vmul.f32 %v1640, %v2637
      %v2981 = vmul.f32 %v1641, %v2637
      %v2982 = vmul.f32 %v1642, %v2642
      %v2983 = vmul.f32 %v1643, %v2642
      %v2984 = vmul.f32 %v1644, %v2647
      %v2985 = vmul.f32 %v1645, %v2647
      %v2986 = vmul.f32 %v1646, %v2652
      %v2987 = vmul.f32 %v1647, %v2652
      %v2988 = vmul.f32 %v1648, %v2657
      %v2989 = vmul.f32 %v1649, %v2657
      %v2990 = vmul.f32 %v1650, %v2662
      %v2991 = vmul.f32 %v1651, %v2662
      %v2992 = vmul.f32 %v1652, %v2667
      %v2993 = vmul.f32 %v1653, %v2667
      %v2994 = vmul.f32 %v1654, %v2672
      %v2995 = vmul.f32 %v1655, %v2672
      %v2996 = vmul.f32 %v1656, %v2677
      %v2997 = vmul.f32 %v1657, %v2677
      %v2998 = vmul.f32 %v1658, %v2682
      %v2999 = vmul.f32 %v1659, %v2682
      %v3000 = vmul.f32 %v1660, %v2687
      %v3001 = vmul.f32 %v1661, %v2687
      %v3002 = vmul.f32 %v1662, %v2692
      %v3003 = vmul.f32 %v1663, %v2692
      %v3004 = vmul.f32 %v1664, %v2697
      %v3005 = vmul.f32 %v1665, %v2697
      %v3006 = vmul.f32 %v1666, %v2702
      %v3007 = vmul.f32 %v1667, %v2702
      %v3008 = vmul.f32 %v1668, %v2707
      %v3009 = vmul.f32 %v1669, %v2707
      %v3010 = vmul.f32 %v1670, %v2712
      %v3011 = vmul.f32 %v1671, %v2712
      %v3012 = vmul.f32 %v1672, %v2717
      %v3013 = vmul.f32 %v1673, %v2717
      %v3014 = vmul.f32 %v1674, %v2722
      %v3015 = vmul.f32 %v1675, %v2722
      %v3016 = vmul.f32 %v1676, %v2727
      %v3017 = vmul.f32 %v1677, %v2727
      %v3018 = vmul.f32 %v1678, %v2732
      %v3019 = vmul.f32 %v1679, %v2732
      %v3020 = vmul.f32 %v1680, %v2737
      %v3021 = vmul.f32 %v1681, %v2737
      %v3022 = vmul.f32 %v1682, %v2742
      %v3023 = vmul.f32 %v1683, %v2742
      %v3024 = vmul.f32 %v1684, %v2747
      %v3025 = vmul.f32 %v1685, %v2747
      %v3026 = vmul.f32 %v1686, %v2752
      %v3027 = vmul.f32 %v1687, %v2752
      %v3028 = vmul.f32 %v1688, %v2757
      %v3029 = vmul.f32 %v1689, %v2757
      %v3030 = vmul.f32 %v1690, %v2762
      %v3031 = vmul.f32 %v1691, %v2762
      %v3032 = vmul.f32 %v1692, %v2767
      %v3033 = vmul.f32 %v1693, %v2767
      %v3034 = vmul.f32 %v1694, %v2772
      %v3035 = vmul.f32 %v1695, %v2772
      %v3036 = vmul.f32 %v1696, %v2777
      %v3037 = vmul.f32 %v1697, %v2777
      %v3038 = vmul.f32 %v1698, %v2782
      %v3039 = vmul.f32 %v1699, %v2782
      %v3040 = vld [vmem:[#allocation3] sm:$0x3]
      %3041 = vmatprep.subr.mxu0 %v2785
      %3042 = vmatpush1.msra.mxu0 %v2784
      %3043 = vmatprep.subr.mxu0 %v2787
      %3044 = vmatpush1.msra.mxu0 %v2786
      %3045 = vmatprep.subr.mxu0 %v2789
      %3046 = vmatpush1.msra.mxu0 %v2788
      %3047 = vmatprep.subr.mxu0 %v2791
      %3048 = vmatpush1.msra.mxu0 %v2790
      %3049 = vmatprep.subr.mxu0 %v2793
      %3050 = vmatpush1.msra.mxu0 %v2792
      %3051 = vmatprep.subr.mxu0 %v2795
      %3052 = vmatpush1.msra.mxu0 %v2794
      %3053 = vmatprep.subr.mxu0 %v2797
      %3054 = vmatpush1.msra.mxu0 %v2796
      %3055 = vmatprep.subr.mxu0 %v2799
      %3056 = vmatpush1.msra.mxu0 %v2798
      %3057 = vmatprep.subr.mxu0 %v2801
      %3058 = vmatpush1.msra.mxu0 %v2800
      %3059 = vmatprep.subr.mxu0 %v2803
      %3060 = vmatpush1.msra.mxu0 %v2802
      %3061 = vmatprep.subr.mxu0 %v2805
      %3062 = vmatpush1.msra.mxu0 %v2804
      %3063 = vmatprep.subr.mxu0 %v2807
      %3064 = vmatpush1.msra.mxu0 %v2806
      %3065 = vmatprep.subr.mxu0 %v2809
      %3066 = vmatpush1.msra.mxu0 %v2808
      %3067 = vmatprep.subr.mxu0 %v2811
      %3068 = vmatpush1.msra.mxu0 %v2810
      %3069 = vmatprep.subr.mxu0 %v2813
      %3070 = vmatpush1.msra.mxu0 %v2812
      %3071 = vmatprep.subr.mxu0 %v2815
      %3072 = vmatpush1.msra.mxu0 %v2814
      %3073 = vmatprep.subr.mxu0 %v2817
      %3074 = vmatpush1.msra.mxu0 %v2816
      %3075 = vmatprep.subr.mxu0 %v2819
      %3076 = vmatpush1.msra.mxu0 %v2818
      %3077 = vmatprep.subr.mxu0 %v2821
      %3078 = vmatpush1.msra.mxu0 %v2820
      %3079 = vmatprep.subr.mxu0 %v2823
      %3080 = vmatpush1.msra.mxu0 %v2822
      %3081 = vmatprep.subr.mxu0 %v2825
      %3082 = vmatpush1.msra.mxu0 %v2824
      %3083 = vmatprep.subr.mxu0 %v2827
      %3084 = vmatpush1.msra.mxu0 %v2826
      %3085 = vmatprep.subr.mxu0 %v2829
      %3086 = vmatpush1.msra.mxu0 %v2828
      %3087 = vmatprep.subr.mxu0 %v2831
      %3088 = vmatpush1.msra.mxu0 %v2830
      %3089 = vmatprep.subr.mxu0 %v2833
      %3090 = vmatpush1.msra.mxu0 %v2832
      %3091 = vmatprep.subr.mxu0 %v2835
      %3092 = vmatpush1.msra.mxu0 %v2834
      %3093 = vmatprep.subr.mxu0 %v2837
      %3094 = vmatpush1.msra.mxu0 %v2836
      %3095 = vmatprep.subr.mxu0 %v2839
      %3096 = vmatpush1.msra.mxu0 %v2838
      %3097 = vmatprep.subr.mxu0 %v2841
      %3098 = vmatpush1.msra.mxu0 %v2840
      %3099 = vmatprep.subr.mxu0 %v2843
      %3100 = vmatpush1.msra.mxu0 %v2842
      %3101 = vmatprep.subr.mxu0 %v2845
      %3102 = vmatpush1.msra.mxu0 %v2844
      %3103 = vmatprep.subr.mxu0 %v2847
      %3104 = vmatpush1.msra.mxu0 %v2846
      %3105 = vmatprep.mubr.f32.mxu0 1.0
      %3106 = vmatmul.mubr.f32.gmra.mrb[0].mxu0 1.0
      %v3107 = vpop.f32.mrb[0].mxu0
      %v3108 = vadd.f32 0.0, %v3107
      %v3109 = vpop.f32.mrb[0].mxu0
      %v3110 = vadd.f32 0.0, %v3109
      %3111 = vdwg.mxu0
      %3112 = vmatprep.subr.mxu0 %v2849
      %3113 = vmatpush1.msra.mxu0 %v2848
      %3114 = vmatprep.subr.mxu0 %v2851
      %3115 = vmatpush1.msra.mxu0 %v2850
      %3116 = vmatprep.subr.mxu0 %v2853
      %3117 = vmatpush1.msra.mxu0 %v2852
      %3118 = vmatprep.subr.mxu0 %v2855
      %3119 = vmatpush1.msra.mxu0 %v2854
      %3120 = vmatprep.subr.mxu0 %v2857
      %3121 = vmatpush1.msra.mxu0 %v2856
      %3122 = vmatprep.subr.mxu0 %v2859
      %3123 = vmatpush1.msra.mxu0 %v2858
      %3124 = vmatprep.subr.mxu0 %v2861
      %3125 = vmatpush1.msra.mxu0 %v2860
      %3126 = vmatprep.subr.mxu0 %v2863
      %3127 = vmatpush1.msra.mxu0 %v2862
      %3128 = vmatprep.subr.mxu0 %v2865
      %3129 = vmatpush1.msra.mxu0 %v2864
      %3130 = vmatprep.subr.mxu0 %v2867
      %3131 = vmatpush1.msra.mxu0 %v2866
      %3132 = vmatprep.subr.mxu0 %v2869
      %3133 = vmatpush1.msra.mxu0 %v2868
      %3134 = vmatprep.subr.mxu0 %v2871
      %3135 = vmatpush1.msra.mxu0 %v2870
      %3136 = vmatprep.subr.mxu0 %v2873
      %3137 = vmatpush1.msra.mxu0 %v2872
      %3138 = vmatprep.subr.mxu0 %v2875
      %3139 = vmatpush1.msra.mxu0 %v2874
      %3140 = vmatprep.subr.mxu0 %v2877
      %3141 = vmatpush1.msra.mxu0 %v2876
      %3142 = vmatprep.subr.mxu0 %v2879
      %3143 = vmatpush1.msra.mxu0 %v2878
      %3144 = vmatprep.subr.mxu0 %v2881
      %3145 = vmatpush1.msra.mxu0 %v2880
      %3146 = vmatprep.subr.mxu0 %v2883
      %3147 = vmatpush1.msra.mxu0 %v2882
      %3148 = vmatprep.subr.mxu0 %v2885
      %3149 = vmatpush1.msra.mxu0 %v2884
      %3150 = vmatprep.subr.mxu0 %v2887
      %3151 = vmatpush1.msra.mxu0 %v2886
      %3152 = vmatprep.subr.mxu0 %v2889
      %3153 = vmatpush1.msra.mxu0 %v2888
      %3154 = vmatprep.subr.mxu0 %v2891
      %3155 = vmatpush1.msra.mxu0 %v2890
      %3156 = vmatprep.subr.mxu0 %v2893
      %3157 = vmatpush1.msra.mxu0 %v2892
      %3158 = vmatprep.subr.mxu0 %v2895
      %3159 = vmatpush1.msra.mxu0 %v2894
      %3160 = vmatprep.subr.mxu0 %v2897
      %3161 = vmatpush1.msra.mxu0 %v2896
      %3162 = vmatprep.subr.mxu0 %v2899
      %3163 = vmatpush1.msra.mxu0 %v2898
      %3164 = vmatprep.subr.mxu0 %v2901
      %3165 = vmatpush1.msra.mxu0 %v2900
      %3166 = vmatprep.subr.mxu0 %v2903
      %3167 = vmatpush1.msra.mxu0 %v2902
      %3168 = vmatprep.subr.mxu0 %v2905
      %3169 = vmatpush1.msra.mxu0 %v2904
      %3170 = vmatprep.subr.mxu0 %v2907
      %3171 = vmatpush1.msra.mxu0 %v2906
      %3172 = vmatprep.subr.mxu0 %v2909
      %3173 = vmatpush1.msra.mxu0 %v2908
      %3174 = vmatprep.subr.mxu0 %v2911
      %3175 = vmatpush1.msra.mxu0 %v2910
      %3176 = vmatprep.mubr.f32.mxu0 1.0
      %3177 = vmatmul.mubr.f32.gmra.mrb[0].mxu0 1.0
      %v3178 = vpop.f32.mrb[0].mxu0
      %v3179 = vadd.f32 %v3108, %v3178
      %v3180 = vpop.f32.mrb[0].mxu0
      %v3181 = vadd.f32 %v3110, %v3180
      %3182 = vdwg.mxu0
      %3183 = vmatprep.subr.mxu0 %v2913
      %3184 = vmatpush1.msra.mxu0 %v2912
      %3185 = vmatprep.subr.mxu0 %v2915
      %3186 = vmatpush1.msra.mxu0 %v2914
      %3187 = vmatprep.subr.mxu0 %v2917
      %3188 = vmatpush1.msra.mxu0 %v2916
      %3189 = vmatprep.subr.mxu0 %v2919
      %3190 = vmatpush1.msra.mxu0 %v2918
      %3191 = vmatprep.subr.mxu0 %v2921
      %3192 = vmatpush1.msra.mxu0 %v2920
      %3193 = vmatprep.subr.mxu0 %v2923
      %3194 = vmatpush1.msra.mxu0 %v2922
      %3195 = vmatprep.subr.mxu0 %v2925
      %3196 = vmatpush1.msra.mxu0 %v2924
      %3197 = vmatprep.subr.mxu0 %v2927
      %3198 = vmatpush1.msra.mxu0 %v2926
      %3199 = vmatprep.subr.mxu0 %v2929
      %3200 = vmatpush1.msra.mxu0 %v2928
      %3201 = vmatprep.subr.mxu0 %v2931
      %3202 = vmatpush1.msra.mxu0 %v2930
      %3203 = vmatprep.subr.mxu0 %v2933
      %3204 = vmatpush1.msra.mxu0 %v2932
      %3205 = vmatprep.subr.mxu0 %v2935
      %3206 = vmatpush1.msra.mxu0 %v2934
      %3207 = vmatprep.subr.mxu0 %v2937
      %3208 = vmatpush1.msra.mxu0 %v2936
      %3209 = vmatprep.subr.mxu0 %v2939
      %3210 = vmatpush1.msra.mxu0 %v2938
      %3211 = vmatprep.subr.mxu0 %v2941
      %3212 = vmatpush1.msra.mxu0 %v2940
      %3213 = vmatprep.subr.mxu0 %v2943
      %3214 = vmatpush1.msra.mxu0 %v2942
      %3215 = vmatprep.subr.mxu0 %v2945
      %3216 = vmatpush1.msra.mxu0 %v2944
      %3217 = vmatprep.subr.mxu0 %v2947
      %3218 = vmatpush1.msra.mxu0 %v2946
      %3219 = vmatprep.subr.mxu0 %v2949
      %3220 = vmatpush1.msra.mxu0 %v2948
      %3221 = vmatprep.subr.mxu0 %v2951
      %3222 = vmatpush1.msra.mxu0 %v2950
      %3223 = vmatprep.subr.mxu0 %v2953
      %3224 = vmatpush1.msra.mxu0 %v2952
      %3225 = vmatprep.subr.mxu0 %v2955
      %3226 = vmatpush1.msra.mxu0 %v2954
      %3227 = vmatprep.subr.mxu0 %v2957
      %3228 = vmatpush1.msra.mxu0 %v2956
      %3229 = vmatprep.subr.mxu0 %v2959
      %3230 = vmatpush1.msra.mxu0 %v2958
      %3231 = vmatprep.subr.mxu0 %v2961
      %3232 = vmatpush1.msra.mxu0 %v2960
      %3233 = vmatprep.subr.mxu0 %v2963
      %3234 = vmatpush1.msra.mxu0 %v2962
      %3235 = vmatprep.subr.mxu0 %v2965
      %3236 = vmatpush1.msra.mxu0 %v2964
      %3237 = vmatprep.subr.mxu0 %v2967
      %3238 = vmatpush1.msra.mxu0 %v2966
      %3239 = vmatprep.subr.mxu0 %v2969
      %3240 = vmatpush1.msra.mxu0 %v2968
      %3241 = vmatprep.subr.mxu0 %v2971
      %3242 = vmatpush1.msra.mxu0 %v2970
      %3243 = vmatprep.subr.mxu0 %v2973
      %3244 = vmatpush1.msra.mxu0 %v2972
      %3245 = vmatprep.subr.mxu0 %v2975
      %3246 = vmatpush1.msra.mxu0 %v2974
      %3247 = vmatprep.mubr.f32.mxu0 1.0
      %3248 = vmatmul.mubr.f32.gmra.mrb[0].mxu0 1.0
      %v3249 = vpop.f32.mrb[0].mxu0
      %v3250 = vadd.f32 %v3179, %v3249
      %v3251 = vpop.f32.mrb[0].mxu0
      %v3252 = vadd.f32 %v3181, %v3251
      %3253 = vdwg.mxu0
      %3254 = vmatprep.subr.mxu0 %v2977
      %3255 = vmatpush1.msra.mxu0 %v2976
      %3256 = vmatprep.subr.mxu0 %v2979
      %3257 = vmatpush1.msra.mxu0 %v2978
      %3258 = vmatprep.subr.mxu0 %v2981
      %3259 = vmatpush1.msra.mxu0 %v2980
      %3260 = vmatprep.subr.mxu0 %v2983
      %3261 = vmatpush1.msra.mxu0 %v2982
      %3262 = vmatprep.subr.mxu0 %v2985
      %3263 = vmatpush1.msra.mxu0 %v2984
      %3264 = vmatprep.subr.mxu0 %v2987
      %3265 = vmatpush1.msra.mxu0 %v2986
      %3266 = vmatprep.subr.mxu0 %v2989
      %3267 = vmatpush1.msra.mxu0 %v2988
      %3268 = vmatprep.subr.mxu0 %v2991
      %3269 = vmatpush1.msra.mxu0 %v2990
      %3270 = vmatprep.subr.mxu0 %v2993
      %3271 = vmatpush1.msra.mxu0 %v2992
      %3272 = vmatprep.subr.mxu0 %v2995
      %3273 = vmatpush1.msra.mxu0 %v2994
      %3274 = vmatprep.subr.mxu0 %v2997
      %3275 = vmatpush1.msra.mxu0 %v2996
      %3276 = vmatprep.subr.mxu0 %v2999
      %3277 = vmatpush1.msra.mxu0 %v2998
      %3278 = vmatprep.subr.mxu0 %v3001
      %3279 = vmatpush1.msra.mxu0 %v3000
      %3280 = vmatprep.subr.mxu0 %v3003
      %3281 = vmatpush1.msra.mxu0 %v3002
      %3282 = vmatprep.subr.mxu0 %v3005
      %3283 = vmatpush1.msra.mxu0 %v3004
      %3284 = vmatprep.subr.mxu0 %v3007
      %3285 = vmatpush1.msra.mxu0 %v3006
      %3286 = vmatprep.subr.mxu0 %v3009
      %3287 = vmatpush1.msra.mxu0 %v3008
      %3288 = vmatprep.subr.mxu0 %v3011
      %3289 = vmatpush1.msra.mxu0 %v3010
      %3290 = vmatprep.subr.mxu0 %v3013
      %3291 = vmatpush1.msra.mxu0 %v3012
      %3292 = vmatprep.subr.mxu0 %v3015
      %3293 = vmatpush1.msra.mxu0 %v3014
      %3294 = vmatprep.subr.mxu0 %v3017
      %3295 = vmatpush1.msra.mxu0 %v3016
      %3296 = vmatprep.subr.mxu0 %v3019
      %3297 = vmatpush1.msra.mxu0 %v3018
      %3298 = vmatprep.subr.mxu0 %v3021
      %3299 = vmatpush1.msra.mxu0 %v3020
      %3300 = vmatprep.subr.mxu0 %v3023
      %3301 = vmatpush1.msra.mxu0 %v3022
      %3302 = vmatprep.subr.mxu0 %v3025
      %3303 = vmatpush1.msra.mxu0 %v3024
      %3304 = vmatprep.subr.mxu0 %v3027
      %3305 = vmatpush1.msra.mxu0 %v3026
      %3306 = vmatprep.subr.mxu0 %v3029
      %3307 = vmatpush1.msra.mxu0 %v3028
      %3308 = vmatprep.subr.mxu0 %v3031
      %3309 = vmatpush1.msra.mxu0 %v3030
      %3310 = vmatprep.subr.mxu0 %v3033
      %3311 = vmatpush1.msra.mxu0 %v3032
      %3312 = vmatprep.subr.mxu0 %v3035
      %3313 = vmatpush1.msra.mxu0 %v3034
      %3314 = vmatprep.subr.mxu0 %v3037
      %3315 = vmatpush1.msra.mxu0 %v3036
      %3316 = vmatprep.subr.mxu0 %v3039
      %3317 = vmatpush1.msra.mxu0 %v3038
      %3318 = vmatprep.mubr.f32.mxu0 1.0
      %3319 = vmatmul.mubr.f32.gmra.mrb[0].mxu0 1.0
      %v3320 = vpop.f32.mrb[0].mxu0
      %v3321 = vadd.f32 %v3250, %v3320
      %v3322 = vpop.f32.mrb[0].mxu0
      %v3323 = vadd.f32 %v3252, %v3322
      %3324 = vdwg.mxu0
      %v3327 = vcombine.low %v3321, %v3323
      %v3329 = vunpack.c.l.s4 1966171168
      %v3330 = vunpack.c.0.s8 %v3329
      %v3331 = vlaneseq
      %v3332 = vshrl.u32 %v3331, 7
      %v3333 = vsub.s32 %v3330, %v3332
      %v3334 = vrot.slane %v3327, %v3333
      %v3336 = vunpack.c.l.s4 1966171168
      %v3337 = vunpack.c.0.s8 %v3336
      %v3338 = vlaneseq
      %v3339 = vshrl.u32 %v3338, 7
      %v3340 = vsub.s32 %v3337, %v3339
      %v3341 = vrot.slane %v3334, %v3340
      %v3343 = vadd.f32 %v3040, %v3341
      %3344 = vst.msk [vmem:[#allocation3] sm:$0x3] %vm2014, %v3343
      // Predicated region
      $region33: #{_rle_device.3} parent=27 // pred_check
        %p3345 = pneg %p274
      $region34: #{_rle_device.3} parent=27 // pred_check_branch
        %3347 = sbr.rel (%p3345) target = $region36
      $region35: #{_rle_device.3} parent=27 // pred_region
        %v3348 = vld [vmem:[#allocation2] sm:$0x3]
        %v3349 = vcvt.f32.s32.to.zero.pseudo %v3348
        %3350 = vst.msk [vmem:[%s262] sm:$0x3] %vm2014, %v3349
        %v3351 = vld [vmem:[#allocation3] sm:$0x3]
        %v3352 = vcvt.f32.s32.to.zero.pseudo %v3351
        %3353 = vst.msk [vmem:[%s271] sm:$0x3] %vm2014, %v3352
      $region36: #{_rle_device.3} parent=27 // pred_fallthru
        _
      %s3354 = smul.u32 2, %s21
      %p3355 = scmp.lt.s32.totalorder %s20, 1
      %s3356 = scalar_select %p3355, %s20, 1
      %p3357 = scmp.lt.s32.totalorder %s3354, 7
      %s3358 = scalar_select %p3357, %s3354, 7
      %s3359 = smul.addr %s3356, 8
      %s3360 = sadd.s32 %s3358, %s3359
      %s3361 = scalar_lea.vmem %s2, %s3360
      %s3362 = smul.u32 2, %s21
      %p3363 = scmp.lt.s32.totalorder %s20, 1
      %s3364 = scalar_select %p3363, %s20, 1
      %p3365 = scmp.lt.s32.totalorder %s3362, 7
      %s3366 = scalar_select %p3365, %s3362, 7
      %s3367 = smul.addr %s3364, 8
      %s3368 = sadd.s32 %s3366, %s3367
      %s3369 = scalar_lea.vmem %s3, %s3368
      // Predicated region
      $region37: #{_rle_device.3} parent=27 // pred_check
        %p3370 = pneg %p110
      $region38: #{_rle_device.3} parent=27 // pred_check_branch
        %3372 = sbr.rel (%p3370) target = $region40
      $region39: #{_rle_device.3} parent=27 // pred_region
        %s3373 = smul.u32 2, %s21
      $region40: #{_rle_device.3} parent=27 // pred_fallthru
        _
      // Predicated region
      $region41: #{_rle_device.3} parent=27 // pred_check
        %p3374 = pneg %p138
      $region42: #{_rle_device.3} parent=27 // pred_check_branch
        %3376 = sbr.rel (%p3374) target = $region44
      $region43: #{_rle_device.3} parent=27 // pred_region
        %s3377 = smul.u32 2, %s21
      $region44: #{_rle_device.3} parent=27 // pred_fallthru
        _
    $region28: #{_rle_device.3} parent=5 // pred_fallthru
      _
    %p3378 = scmp.le.s32.totalorder 2, %s10
    // Predicated region
    $region45: #{_rle_device.3} parent=5 // pred_check
      %p3379 = pneg %p3378
    $region46: #{_rle_device.3} parent=5 // pred_check_branch
      %3381 = sbr.rel (%p3379) target = $region48
    $region47: #{_rle_device.3} parent=5 // pred_region
      %s3382 = ssub.s32 %s10, 2
      // Predicated region
      $region49: #{_rle_device.3} parent=47 // pred_check
        %p3383 = pneg %p116
      $region50: #{_rle_device.3} parent=47 // pred_check_branch
        %3385 = sbr.rel (%p3383) target = $region52
      $region51: #{_rle_device.3} parent=47 // pred_region
        %s3386 = smul.u32 2, %s24
        %p3387 = scmp.lt.s32.totalorder %s23, 1
        %s3388 = scalar_select %p3387, %s23, 1
        %p3389 = scmp.lt.s32.totalorder %s3386, 7
        %s3390 = scalar_select %p3389, %s3386, 7
        %s3391 = smul.addr %s3388, 8
        %s3392 = sadd.s32 %s3390, %s3391
        %s3393 = scalar_lea.vmem %s2, %s3392
      $region52: #{_rle_device.3} parent=47 // pred_fallthru
        _
      // Predicated region
      $region53: #{_rle_device.3} parent=47 // pred_check
        %p3394 = pneg %p144
      $region54: #{_rle_device.3} parent=47 // pred_check_branch
        %3396 = sbr.rel (%p3394) target = $region56
      $region55: #{_rle_device.3} parent=47 // pred_region
        %s3397 = smul.u32 2, %s24
        %p3398 = scmp.lt.s32.totalorder %s23, 1
        %s3399 = scalar_select %p3398, %s23, 1
        %p3400 = scmp.lt.s32.totalorder %s3397, 7
        %s3401 = scalar_select %p3400, %s3397, 7
        %s3402 = smul.addr %s3399, 8
        %s3403 = sadd.s32 %s3401, %s3402
        %s3404 = scalar_lea.vmem %s3, %s3403
      $region56: #{_rle_device.3} parent=47 // pred_fallthru
        _
    $region48: #{_rle_device.3} parent=5 // pred_fallthru
      _
  $region6: #{_rle_device.3} parent=0 // loop_footer
    %s14 = sadd.s32 1, %s10
  $region7: #{_rle_device.3} parent=0 // loop_footer_branch
    %9 = sbr.rel target = $region3
  $region8: #{_rle_device.3} parent=0 // loop_exit
    _

</llo_original>
